<compile_context>
chip_gen: v7x
topology: tpu7x:2x2x1
jax: 0.10.0
libtpu: 0.0.40
codegen_flags: <defaults>
</compile_context>

<pallas_src>
import math
from typing import NamedTuple

import jax
import jax.numpy as jnp
from jax import lax
from jax.experimental import pallas as pl
from jax.experimental.pallas import tpu as pltpu

DTYPE = jnp.float32          # activation / IO dtype
WDTYPE = jnp.bfloat16        # weight-storage / MXU-input dtype (f32 accumulation)

# ----------------------------- model config ---------------------------------
B = 2            # batch
C_IN = 4         # latent channels (SDXL latent space)
H = W = 16       # spatial
C = 32           # block channels (conv channels, padded where needed)
T_DIM = 32       # sinusoidal timestep embedding dim
T_EMB = 64       # time embedding dim
S = 8            # text sequence length
D_CTX = 32       # encoder_hidden_states dim
TEXT_DIM = 32    # pooled text_embeds dim
N_TIME_IDS = 6   # SDXL time_ids
TID_DIM = 8      # per-id sinusoidal dim
GROUPS = 8       # groupnorm groups
HEAD_DIM = 32    # single attention head

HW = H * W
COND_DIM = T_DIM + TEXT_DIM + N_TIME_IDS * TID_DIM    # 112
EPS = 1e-5
ATTN_SCALE = 1.0 / math.sqrt(HEAD_DIM)


class UNet2DConditionOutput(NamedTuple):
    sample: jax.Array


# ----------------------------- fused Pallas kernel ---------------------------

def _fused_unet_kernel(tokens_ref, tproj_ref, kctx_ref, vctx_ref,
                       conv_w_ref, conv_b_ref, mask_ref, gmat_ref,
                       norm_g_ref, norm_b_ref,
                       wq_ref, bq_ref, wo_ref, bo_ref,
                       out_ref, slab_ref):
    """Whole mini-SDXL-UNet forward for one batch element, VMEM-resident.

    All activations are channels-first (C, HW) so the HW=256 axis sits on the
    lanes (lane-dense vregs, lane-dense output store, matmul N=256)."""
    f32 = jnp.float32

    def silu(x):
        return x * jax.nn.sigmoid(x)

    def conv3x3(x, layer):
        # 3x3 same conv as ONE im2col GEMM.  Build a (9*C, HW) bf16 slab with
        # statically-shifted copies of x (pltpu.roll along the lane axis, XLU
        # slot); boundary/column-wrap taps are zeroed by pre-broadcast masks
        # applied while the slab is written.  Center tap (t=4) is always valid.
        for t in range(9):
            if t == 4:
                tap = x
            else:
                d = (t // 3 - 1) * W + (t % 3 - 1)        # flat neighbour offset
                tap = pltpu.roll(x, (-d) % HW, 1) * mask_ref[t]
            slab_ref[t * C:(t + 1) * C, :] = tap.astype(WDTYPE)
        # single (C, 288) @ (288, 256) MXU matmul, f32 accumulation
        y = jnp.dot(conv_w_ref[layer], slab_ref[...], preferred_element_type=f32)
        return y + conv_b_ref[layer]

    def group_norm_silu(x, idx):
        # One pass over x: per-channel sum(x) and sum(x*x) stacked on sublanes,
        # a single block-diagonal gmat matmul gives [group mean; group E[x^2]];
        # var = E[x^2] - mean^2 (f32 sums, breaks the mean->var serial dep).
        s = jnp.concatenate([jnp.sum(x, axis=1, keepdims=True),
                             jnp.sum(x * x, axis=1, keepdims=True)], axis=0)
        g = jnp.dot(gmat_ref[...], s, preferred_element_type=f32)     # (2C, 1)
        mean = g[:C]
        var = g[C:] - mean * mean
        y = (x - mean) * lax.rsqrt(var + EPS)
        return silu(y * norm_g_ref[idx] + norm_b_ref[idx])

    def layer_norm(x, idx):
        m = jnp.mean(x, axis=0, keepdims=True)
        d = x - m
        v = jnp.mean(d * d, axis=0, keepdims=True)
        return d * lax.rsqrt(v + EPS) * norm_g_ref[idx] + norm_b_ref[idx]

    tokens = tokens_ref[0]                  # (C, HW)   channels-first latents
    tproj = tproj_ref[0]                    # (C, 1)    host-computed time proj
    k_ctx = kctx_ref[0].astype(WDTYPE)      # (S, HEAD) host-computed context K
    v_ctx = vctx_ref[0].astype(WDTYPE)      # (HEAD, S) host-computed context V

    # --- conv_in --------------------------------------------------------------
    h = conv3x3(tokens, 0)

    # --- ResNet block with time conditioning ----------------------------------
    r = group_norm_silu(h, 0)
    r = conv3x3(r, 1) + tproj
    r = group_norm_silu(r, 1)
    r = conv3x3(r, 2)
    h = h + r

    # --- cross-attention over encoder_hidden_states ---------------------------
    # S=8: the QK^T / PV matmuls are tiny (M=8 / K=8); accepted consciously,
    # pad S to >=128 when a real SDXL text encoder is plugged in.
    xn = layer_norm(h, 3)
    q = jnp.dot(wq_ref[...], xn.astype(WDTYPE),
                preferred_element_type=f32) + bq_ref[...]             # (HEAD, HW)
    # softmax scale is already folded into wq/bq at init
    scores = jnp.dot(k_ctx, q.astype(WDTYPE),
                     preferred_element_type=f32)                      # (S, HW)
    m = jnp.max(scores, axis=0, keepdims=True)
    p = jnp.exp(scores - m)
    den = jnp.sum(p, axis=0, keepdims=True)
    attn = jnp.dot(v_ctx, p.astype(WDTYPE),
                   preferred_element_type=f32)                        # (HEAD, HW)
    attn = attn * pl.reciprocal(den, approx=True)
    h = h + jnp.dot(wo_ref[...], attn.astype(WDTYPE),
                    preferred_element_type=f32) + bo_ref[...]

    # --- conv_out (lane-dense (C, HW) store; channel slice done in XLA) -------
    out_ref[0] = conv3x3(group_norm_silu(h, 2), 3).astype(out_ref.dtype)


def _fused_unet_call(params, tokens, tproj, kctx, vctx):
    Bn = tokens.shape[0]

    def batch_spec(arr):
        nd = arr.ndim
        return pl.BlockSpec((1,) + tuple(arr.shape[1:]),
                            lambda b, nd=nd: (b,) + (0,) * (nd - 1))

    def const_spec(arr):
        nd = arr.ndim
        return pl.BlockSpec(tuple(arr.shape), lambda b, nd=nd: (0,) * nd)

    weights = (params["conv_w"], params["conv_b"], params["tap_mask"],
               params["gmat"], params["norm_g"], params["norm_b"],
               params["wq"], params["bq"], params["wo"], params["bo"])

    in_specs = ([batch_spec(tokens), batch_spec(tproj),
                 batch_spec(kctx), batch_spec(vctx)]
                + [const_spec(w) for w in weights])

    return pl.pallas_call(
        _fused_unet_kernel,
        out_shape=jax.ShapeDtypeStruct((Bn, C, HW), DTYPE),
        grid=(Bn,),
        in_specs=in_specs,
        out_specs=pl.BlockSpec((1, C, HW), lambda b: (b, 0, 0)),
        scratch_shapes=[pltpu.VMEM((9 * C, HW), WDTYPE)],   # im2col slab (bf16)
        compiler_params=pltpu.CompilerParams(
            dimension_semantics=("parallel",)),
    )(tokens, tproj, kctx, vctx, *weights)


# ----------------------------- host-side glue --------------------------------

def sinusoidal_embedding(t, dim):
    half = dim // 2
    freqs = jnp.exp(-jnp.log(10000.0) * jnp.arange(half, dtype=DTYPE) / half)
    args = t.astype(DTYPE)[:, None] * freqs[None, :]
    return jnp.concatenate([jnp.cos(args), jnp.sin(args)], axis=-1)


def _prepare_inputs(params, sample, timestep, encoder_hidden_states,
                    added_cond_kwargs):
    Bn = sample.shape[0]
    # NeuronUNet.forward: cast the scalar timestep and expand to the batch.
    t = jnp.broadcast_to(jnp.asarray(timestep, DTYPE).reshape(()), (Bn,))
    text_embeds = added_cond_kwargs["text_embeds"].astype(DTYPE)
    time_ids = added_cond_kwargs["time_ids"].astype(DTYPE)

    t_sin = sinusoidal_embedding(t, T_DIM)                                 # (B, 32)
    tid_sin = sinusoidal_embedding(time_ids.reshape(-1), TID_DIM).reshape(Bn, -1)
    cond = jnp.concatenate([t_sin, text_embeds, tid_sin], axis=-1)         # (B, 112)

    # Conditioning MLP hoisted out of the kernel (batched XLA matmuls): removes
    # the M=1 MXU push/drain prologue from the per-core critical path.
    def silu(x):
        return x * jax.nn.sigmoid(x)
    e1 = silu(cond @ params["wc1"] + params["bc1"])
    temb = e1 @ params["wc2"] + params["bc2"]
    tproj = (silu(temb) @ params["wtp"] + params["btp"]).reshape(Bn, C, 1)

    # Context K/V have no spatial dependence -> hoisted too, delivered in the
    # exact layouts the in-kernel matmuls want (K: (S, HEAD), V: (HEAD, S)).
    ehs = encoder_hidden_states.astype(DTYPE)
    k_ctx = ehs @ params["wk"] + params["bk"]                              # (B, S, HEAD)
    v_ctx = jnp.transpose(ehs @ params["wv"] + params["bv"], (0, 2, 1))    # (B, HEAD, S)

    # NCHW latents -> channels-first (C, HW) tokens; channels zero-padded to C.
    x = sample.astype(DTYPE).reshape(Bn, C_IN, HW)
    tokens = jnp.pad(x, ((0, 0), (0, C - C_IN), (0, 0)))                   # (B, C, HW)
    return tokens, tproj, k_ctx, v_ctx


def neuron_unet_forward(params, sample, timestep, encoder_hidden_states,
                        added_cond_kwargs):
    """Mirrors NeuronUNet.forward: timestep cast+expand, then
    UNet(sample, t, encoder_hidden_states, text_embeds, time_ids)[0]."""
    Bn = sample.shape[0]
    tokens, tproj, kctx, vctx = _prepare_inputs(
        params, sample, timestep, encoder_hidden_states, added_cond_kwargs)
    out = _fused_unet_call(params, tokens, tproj, kctx, vctx)             # (B, C, HW)
    # channels-first output slices straight into NCHW (no transpose needed)
    return UNet2DConditionOutput(sample=out[:, :C_IN, :].reshape(Bn, C_IN, H, W))


# ----------------------------- parameters ------------------------------------

def init_params(key):
    """Build raw synthetic weights, then pack them once into kernel-ready,
    channels-first, lane-dense arrays (bf16 MXU weights, f32 biases/norms)."""
    def dense(k, din, dout):
        kw, kb = jax.random.split(k)
        return (jax.random.normal(kw, (din, dout), DTYPE) * 0.05,
                jax.random.normal(kb, (dout,), DTYPE) * 0.01)

    def conv(k, cin, cout):
        kw, kb = jax.random.split(k)
        return (jax.random.normal(kw, (3, 3, cin, cout), DTYPE) * 0.05,
                jax.random.normal(kb, (cout,), DTYPE) * 0.01)

    ks = jax.random.split(key, 16)
    w_t1, b_t1 = dense(ks[0], T_DIM, T_EMB)
    w_t2, b_t2 = dense(ks[1], T_EMB, T_EMB)
    w_a1, b_a1 = dense(ks[2], TEXT_DIM + N_TIME_IDS * TID_DIM, T_EMB)
    w_a2, b_a2 = dense(ks[3], T_EMB, T_EMB)
    w_tp, b_tp = dense(ks[4], T_EMB, C)
    conv_in = conv(ks[5], C_IN, C)
    res_c1 = conv(ks[6], C, C)
    res_c2 = conv(ks[7], C, C)
    wq, bq = dense(ks[8], C, HEAD_DIM)
    wk, bk = dense(ks[9], D_CTX, HEAD_DIM)
    wv, bv = dense(ks[10], D_CTX, HEAD_DIM)
    wo, bo = dense(ks[11], HEAD_DIM, C)
    conv_out = conv(ks[12], C, C_IN)
    kg, kb2 = jax.random.split(ks[13])

    # fused block-diagonal conditioning MLP: [t_sin | text_embeds | tid_sin]
    wc1 = jnp.zeros((COND_DIM, 2 * T_EMB), DTYPE)
    wc1 = wc1.at[:T_DIM, :T_EMB].set(w_t1)
    wc1 = wc1.at[T_DIM:, T_EMB:].set(w_a1)
    bc1 = jnp.concatenate([b_t1, b_a1]).reshape(1, 2 * T_EMB)
    wc2 = jnp.concatenate([w_t2, w_a2], axis=0)                 # (128, 64)
    bc2 = (b_t2 + b_a2).reshape(1, T_EMB)

    # convs packed channels-first: (Cout, 9*Cin) so each conv is one K=288 GEMM
    # (cin/cout zero-padded to C; zero-padded cout keeps out channels >= C_IN
    #  exactly zero, which the wrapper slices away)
    def pack_conv(w, b):
        cin, cout = w.shape[2], w.shape[3]
        wp = jnp.zeros((3, 3, C, C), DTYPE).at[:, :, :cin, :cout].set(w)
        bp = jnp.zeros((C,), DTYPE).at[:cout].set(b)
        return jnp.transpose(wp.reshape(9 * C, C)), bp.reshape(C, 1)

    packed = [pack_conv(*p) for p in (conv_in, res_c1, res_c2, conv_out)]
    conv_w = jnp.stack([p[0] for p in packed], axis=0)          # (4, C, 9C)
    conv_b = jnp.stack([p[1] for p in packed], axis=0)          # (4, C, 1)

    # attention projections, channels-first; softmax scale folded into Wq/bq
    wq_cf = jnp.transpose(wq) * ATTN_SCALE                      # (HEAD, C)
    bq_cf = (bq * ATTN_SCALE).reshape(HEAD_DIM, 1)
    wo_cf = jnp.transpose(wo)                                   # (C, HEAD)
    bo_cf = bo.reshape(C, 1)

    # norm affine params stacked: [gn1, gn2, gn_out, ln], channels-first columns
    norm_g = 1.0 + 0.1 * jax.random.normal(kg, (4, C, 1), DTYPE)
    norm_b = 0.05 * jax.random.normal(kb2, (4, C, 1), DTYPE)

    # block-diagonal group-statistics combiner: [sum_x ; sum_x2] -> [mean ; E[x^2]]
    grp = jnp.arange(C) // (C // GROUPS)
    gsmall = (grp[:, None] == grp[None, :]).astype(DTYPE) / float((C // GROUPS) * HW)
    gmat = jnp.zeros((2 * C, 2 * C), DTYPE)
    gmat = gmat.at[:C, :C].set(gsmall).at[C:, C:].set(gsmall)

    # 3x3 conv tap validity masks, pre-broadcast over channels (no in-kernel
    # broadcast); center tap (index 4) is always valid and never read.
    r = jnp.arange(HW)
    y, xc = r // W, r % W
    masks = []
    for a in range(3):
        for b_ in range(3):
            yy, xx = y + a - 1, xc + b_ - 1
            m = ((yy >= 0) & (yy < H) & (xx >= 0) & (xx < W)).astype(DTYPE)
            masks.append(jnp.broadcast_to(m[None, :], (C, HW)))
    tap_mask = jnp.stack(masks)                                 # (9, C, HW)

    return {
        # kernel weights
        "conv_w": conv_w.astype(WDTYPE), "conv_b": conv_b,
        "tap_mask": tap_mask, "gmat": gmat,
        "norm_g": norm_g, "norm_b": norm_b,
        "wq": wq_cf.astype(WDTYPE), "bq": bq_cf,
        "wo": wo_cf.astype(WDTYPE), "bo": bo_cf,
        # host-side (hoisted) weights
        "wc1": wc1, "bc1": bc1, "wc2": wc2, "bc2": bc2,
        "wtp": w_tp, "btp": b_tp.reshape(1, C),
        "wk": wk, "bk": bk, "wv": wv, "bv": bv,
    }


# ---------------- plain-JAX reference (validation only) ----------------------

def _reference_forward(params, sample, timestep, encoder_hidden_states,
                       added_cond_kwargs):
    """Independent channels-last f32 re-implementation (XLA ops)."""
    f32 = jnp.float32
    Bn = sample.shape[0]

    def silu(x):
        return x * jax.nn.sigmoid(x)

    t = jnp.broadcast_to(jnp.asarray(timestep, f32).reshape(()), (Bn,))
    t_sin = sinusoidal_embedding(t, T_DIM)
    tid_sin = sinusoidal_embedding(
        added_cond_kwargs["time_ids"].astype(f32).reshape(-1), TID_DIM).reshape(Bn, -1)
    cond = jnp.concatenate(
        [t_sin, added_cond_kwargs["text_embeds"].astype(f32), tid_sin], axis=-1)
    e1 = silu(cond @ params["wc1"] + params["bc1"])
    temb = e1 @ params["wc2"] + params["bc2"]
    tproj = silu(temb) @ params["wtp"] + params["btp"]                     # (B, C)

    x = jnp.transpose(sample.astype(f32), (0, 2, 3, 1))
    x = jnp.pad(x, ((0, 0), (0, 0), (0, 0), (0, C - C_IN))).reshape(Bn, HW, C)

    def conv(xf, layer):
        xp = jnp.pad(xf.reshape(Bn, H, W, C), ((0, 0), (1, 1), (1, 1), (0, 0)))
        patches = jnp.concatenate(
            [xp[:, a:a + H, b:b + W, :] for a in range(3) for b in range(3)],
            axis=-1).reshape(Bn, HW, 9 * C)
        w = jnp.transpose(params["conv_w"][layer].astype(f32))             # (9C, C)
        return patches @ w + params["conv_b"][layer][:, 0]

    def gnorm(xf, idx):
        g = xf.reshape(Bn, HW, GROUPS, C // GROUPS)
        mean = jnp.mean(g, axis=(1, 3), keepdims=True)
        var = jnp.mean((g - mean) ** 2, axis=(1, 3), keepdims=True)
        y = ((g - mean) / jnp.sqrt(var + EPS)).reshape(Bn, HW, C)
        return silu(y * params["norm_g"][idx][:, 0] + params["norm_b"][idx][:, 0])

    def lnorm(xf, idx):
        m = jnp.mean(xf, -1, keepdims=True)
        v = jnp.mean((xf - m) ** 2, -1, keepdims=True)
        return ((xf - m) / jnp.sqrt(v + EPS) * params["norm_g"][idx][:, 0]
                + params["norm_b"][idx][:, 0])

    ehs = encoder_hidden_states.astype(f32)
    h = conv(x, 0)
    r = gnorm(h, 0)
    r = conv(r, 1) + tproj[:, None, :]
    r = gnorm(r, 1)
    r = conv(r, 2)
    h = h + r

    xn = lnorm(h, 3)
    # NOTE: the softmax scale is folded into wq / bq at init.
    q = xn @ jnp.transpose(params["wq"].astype(f32)) + params["bq"][:, 0]
    k = ehs @ params["wk"] + params["bk"]
    v = ehs @ params["wv"] + params["bv"]
    sc = jnp.einsum("bqd,bkd->bqk", q, k)
    p = jax.nn.softmax(sc, axis=-1)
    h = h + jnp.einsum("bqk,bkd->bqd", p, v) @ jnp.transpose(
        params["wo"].astype(f32)) + params["bo"][:, 0]

    out = conv(gnorm(h, 2), 3)                                             # (B, HW, C)
    out = out[..., :C_IN].reshape(Bn, H, W, C_IN)
    return jnp.transpose(out, (0, 3, 1, 2))                                # NCHW


if __name__ == "__main__":
    key = jax.random.PRNGKey(0)
    kp, ksamp, kehs, kte, kti = jax.random.split(key, 5)
    params = init_params(kp)

    sample = jax.random.normal(ksamp, (B, C_IN, H, W), DTYPE)              # NCHW
    timestep = jnp.asarray(999.0, DTYPE)
    encoder_hidden_states = jax.random.normal(kehs, (B, S, D_CTX), DTYPE)
    added_cond_kwargs = {
        "text_embeds": jax.random.normal(kte, (B, TEXT_DIM), DTYPE),
        "time_ids": jax.random.uniform(kti, (B, N_TIME_IDS), DTYPE, 0.0, 1024.0),
    }

    fwd = jax.jit(neuron_unet_forward)
    out = fwd(params, sample, timestep, encoder_hidden_states, added_cond_kwargs)
    jax.block_until_ready(out.sample)

    assert out.sample.shape == sample.shape and out.sample.dtype == DTYPE
    assert bool(jnp.all(jnp.isfinite(out.sample)))

    # cross-check the fused Pallas kernel against the independent JAX reference
    ref = _reference_forward(params, sample, timestep, encoder_hidden_states,
                             added_cond_kwargs)
    err = float(jnp.max(jnp.abs(out.sample - ref)))
    assert err < 1e-1, f"kernel/reference mismatch: max abs err {err}"

    print("KERNEL_OK")
</pallas_src>

<mosaic_0001>
module attributes {stable_mosaic.version = 11 : i64} {
  func.func @_fused_unet_kernel(%arg0: i32, %arg1: memref<1x32x256xf32, #tpu.memory_space<vmem>>, %arg2: memref<1x32x1xf32, #tpu.memory_space<vmem>>, %arg3: memref<1x8x32xf32, #tpu.memory_space<vmem>>, %arg4: memref<1x32x8xf32, #tpu.memory_space<vmem>>, %arg5: memref<4x32x288xbf16, #tpu.memory_space<vmem>>, %arg6: memref<4x32x1xf32, #tpu.memory_space<vmem>>, %arg7: memref<9x32x256xf32, #tpu.memory_space<vmem>>, %arg8: memref<64x64xf32, #tpu.memory_space<vmem>>, %arg9: memref<4x32x1xf32, #tpu.memory_space<vmem>>, %arg10: memref<4x32x1xf32, #tpu.memory_space<vmem>>, %arg11: memref<32x32xbf16, #tpu.memory_space<vmem>>, %arg12: memref<32x1xf32, #tpu.memory_space<vmem>>, %arg13: memref<32x32xbf16, #tpu.memory_space<vmem>>, %arg14: memref<32x1xf32, #tpu.memory_space<vmem>>, %arg15: memref<1x32x256xf32, #tpu.memory_space<vmem>>, %arg16: memref<288x256xbf16, #tpu.memory_space<vmem>>) attributes {dimension_semantics = [#tpu.dimension_semantics<parallel>], iteration_bounds = array<i64: 2>, scalar_prefetch = 0 : i64, scratch_operands = 1 : i64, tpu.core_type = #tpu.core_type<tc>, window_params = [{transform_indices = @transform_0, window_bounds = array<i64: 1, 32, 256>}, {transform_indices = @transform_1, window_bounds = array<i64: 1, 32, 1>}, {transform_indices = @transform_2, window_bounds = array<i64: 1, 8, 32>}, {transform_indices = @transform_3, window_bounds = array<i64: 1, 32, 8>}, {pipeline_mode = #tpu.pipeline_mode<synchronous>, transform_indices = @transform_4, window_bounds = array<i64: 4, 32, 288>}, {pipeline_mode = #tpu.pipeline_mode<synchronous>, transform_indices = @transform_5, window_bounds = array<i64: 4, 32, 1>}, {pipeline_mode = #tpu.pipeline_mode<synchronous>, transform_indices = @transform_6, window_bounds = array<i64: 9, 32, 256>}, {pipeline_mode = #tpu.pipeline_mode<synchronous>, transform_indices = @transform_7, window_bounds = array<i64: 64, 64>}, {pipeline_mode = #tpu.pipeline_mode<synchronous>, transform_indices = @transform_8, window_bounds = array<i64: 4, 32, 1>}, {pipeline_mode = #tpu.pipeline_mode<synchronous>, transform_indices = @transform_9, window_bounds = array<i64: 4, 32, 1>}, {pipeline_mode = #tpu.pipeline_mode<synchronous>, transform_indices = @transform_10, window_bounds = array<i64: 32, 32>}, {pipeline_mode = #tpu.pipeline_mode<synchronous>, transform_indices = @transform_11, window_bounds = array<i64: 32, 1>}, {pipeline_mode = #tpu.pipeline_mode<synchronous>, transform_indices = @transform_12, window_bounds = array<i64: 32, 32>}, {pipeline_mode = #tpu.pipeline_mode<synchronous>, transform_indices = @transform_13, window_bounds = array<i64: 32, 1>}, {transform_indices = @transform_14, window_bounds = array<i64: 1, 32, 256>}]} {
    %c0 = arith.constant 0 : index
    %c0_0 = arith.constant 0 : index
    %c0_1 = arith.constant 0 : index
    %0 = vector.load %arg1[%c0, %c0_0, %c0_1] : memref<1x32x256xf32, #tpu.memory_space<vmem>>, vector<1x32x256xf32>
    %1 = vector.shape_cast %0 : vector<1x32x256xf32> to vector<32x256xf32>
    %c0_2 = arith.constant 0 : index
    %c0_3 = arith.constant 0 : index
    %c0_4 = arith.constant 0 : index
    %2 = vector.load %arg2[%c0_2, %c0_3, %c0_4] : memref<1x32x1xf32, #tpu.memory_space<vmem>>, vector<1x32x1xf32>
    %3 = vector.shape_cast %2 : vector<1x32x1xf32> to vector<32x1xf32>
    %c0_5 = arith.constant 0 : index
    %c0_6 = arith.constant 0 : index
    %c0_7 = arith.constant 0 : index
    %4 = vector.load %arg3[%c0_5, %c0_6, %c0_7] : memref<1x8x32xf32, #tpu.memory_space<vmem>>, vector<1x8x32xf32>
    %5 = vector.shape_cast %4 : vector<1x8x32xf32> to vector<8x32xf32>
    %6 = arith.truncf %5 : vector<8x32xf32> to vector<8x32xbf16>
    %c0_8 = arith.constant 0 : index
    %c0_9 = arith.constant 0 : index
    %c0_10 = arith.constant 0 : index
    %7 = vector.load %arg4[%c0_8, %c0_9, %c0_10] : memref<1x32x8xf32, #tpu.memory_space<vmem>>, vector<1x32x8xf32>
    %8 = vector.shape_cast %7 : vector<1x32x8xf32> to vector<32x8xf32>
    %9 = arith.truncf %8 : vector<32x8xf32> to vector<32x8xbf16>
    %c17_i32 = arith.constant 17 : i32
    %10 = tpu.dynamic_rotate %1 by %c17_i32 dim 1 : vector<32x256xf32>, i32 -> vector<32x256xf32>
    %c0_11 = arith.constant 0 : index
    %c0_12 = arith.constant 0 : index
    %c0_13 = arith.constant 0 : index
    %11 = vector.load %arg7[%c0_11, %c0_12, %c0_13] : memref<9x32x256xf32, #tpu.memory_space<vmem>>, vector<1x32x256xf32>
    %12 = vector.shape_cast %11 : vector<1x32x256xf32> to vector<32x256xf32>
    %13 = arith.mulf %10, %12 : vector<32x256xf32>
    %14 = arith.truncf %13 : vector<32x256xf32> to vector<32x256xbf16>
    %c0_14 = arith.constant 0 : index
    %c0_15 = arith.constant 0 : index
    %15 = vector.load %arg16[%c0_14, %c0_15] : memref<288x256xbf16, #tpu.memory_space<vmem>>, vector<32x256xbf16>
    tpu.vector_store %arg16[%c0_14, %c0_15], %14 {strides = array<i32>} : memref<288x256xbf16, #tpu.memory_space<vmem>>, vector<32x256xbf16>,
    %c16_i32 = arith.constant 16 : i32
    %16 = tpu.dynamic_rotate %1 by %c16_i32 dim 1 : vector<32x256xf32>, i32 -> vector<32x256xf32>
    %c1 = arith.constant 1 : index
    %c0_16 = arith.constant 0 : index
    %c0_17 = arith.constant 0 : index
    %17 = vector.load %arg7[%c1, %c0_16, %c0_17] : memref<9x32x256xf32, #tpu.memory_space<vmem>>, vector<1x32x256xf32>
    %18 = vector.shape_cast %17 : vector<1x32x256xf32> to vector<32x256xf32>
    %19 = arith.mulf %16, %18 : vector<32x256xf32>
    %20 = arith.truncf %19 : vector<32x256xf32> to vector<32x256xbf16>
    %c32 = arith.constant 32 : index
    %c0_18 = arith.constant 0 : index
    %21 = vector.load %arg16[%c32, %c0_18] : memref<288x256xbf16, #tpu.memory_space<vmem>>, vector<32x256xbf16>
    tpu.vector_store %arg16[%c32, %c0_18], %20 {strides = array<i32>} : memref<288x256xbf16, #tpu.memory_space<vmem>>, vector<32x256xbf16>,
    %c15_i32 = arith.constant 15 : i32
    %22 = tpu.dynamic_rotate %1 by %c15_i32 dim 1 : vector<32x256xf32>, i32 -> vector<32x256xf32>
    %c2 = arith.constant 2 : index
    %c0_19 = arith.constant 0 : index
    %c0_20 = arith.constant 0 : index
    %23 = vector.load %arg7[%c2, %c0_19, %c0_20] : memref<9x32x256xf32, #tpu.memory_space<vmem>>, vector<1x32x256xf32>
    %24 = vector.shape_cast %23 : vector<1x32x256xf32> to vector<32x256xf32>
    %25 = arith.mulf %22, %24 : vector<32x256xf32>
    %26 = arith.truncf %25 : vector<32x256xf32> to vector<32x256xbf16>
    %c64 = arith.constant 64 : index
    %c0_21 = arith.constant 0 : index
    %27 = vector.load %arg16[%c64, %c0_21] : memref<288x256xbf16, #tpu.memory_space<vmem>>, vector<32x256xbf16>
    tpu.vector_store %arg16[%c64, %c0_21], %26 {strides = array<i32>} : memref<288x256xbf16, #tpu.memory_space<vmem>>, vector<32x256xbf16>,
    %c1_i32 = arith.constant 1 : i32
    %28 = tpu.dynamic_rotate %1 by %c1_i32 dim 1 : vector<32x256xf32>, i32 -> vector<32x256xf32>
    %c3 = arith.constant 3 : index
    %c0_22 = arith.constant 0 : index
    %c0_23 = arith.constant 0 : index
    %29 = vector.load %arg7[%c3, %c0_22, %c0_23] : memref<9x32x256xf32, #tpu.memory_space<vmem>>, vector<1x32x256xf32>
    %30 = vector.shape_cast %29 : vector<1x32x256xf32> to vector<32x256xf32>
    %31 = arith.mulf %28, %30 : vector<32x256xf32>
    %32 = arith.truncf %31 : vector<32x256xf32> to vector<32x256xbf16>
    %c96 = arith.constant 96 : index
    %c0_24 = arith.constant 0 : index
    %33 = vector.load %arg16[%c96, %c0_24] : memref<288x256xbf16, #tpu.memory_space<vmem>>, vector<32x256xbf16>
    tpu.vector_store %arg16[%c96, %c0_24], %32 {strides = array<i32>} : memref<288x256xbf16, #tpu.memory_space<vmem>>, vector<32x256xbf16>,
    %34 = arith.truncf %1 : vector<32x256xf32> to vector<32x256xbf16>
    %c128 = arith.constant 128 : index
    %c0_25 = arith.constant 0 : index
    %35 = vector.load %arg16[%c128, %c0_25] : memref<288x256xbf16, #tpu.memory_space<vmem>>, vector<32x256xbf16>
    tpu.vector_store %arg16[%c128, %c0_25], %34 {strides = array<i32>} : memref<288x256xbf16, #tpu.memory_space<vmem>>, vector<32x256xbf16>,
    %c255_i32 = arith.constant 255 : i32
    %36 = tpu.dynamic_rotate %1 by %c255_i32 dim 1 : vector<32x256xf32>, i32 -> vector<32x256xf32>
    %c5 = arith.constant 5 : index
    %c0_26 = arith.constant 0 : index
    %c0_27 = arith.constant 0 : index
    %37 = vector.load %arg7[%c5, %c0_26, %c0_27] : memref<9x32x256xf32, #tpu.memory_space<vmem>>, vector<1x32x256xf32>
    %38 = vector.shape_cast %37 : vector<1x32x256xf32> to vector<32x256xf32>
    %39 = arith.mulf %36, %38 : vector<32x256xf32>
    %40 = arith.truncf %39 : vector<32x256xf32> to vector<32x256xbf16>
    %c160 = arith.constant 160 : index
    %c0_28 = arith.constant 0 : index
    %41 = vector.load %arg16[%c160, %c0_28] : memref<288x256xbf16, #tpu.memory_space<vmem>>, vector<32x256xbf16>
    tpu.vector_store %arg16[%c160, %c0_28], %40 {strides = array<i32>} : memref<288x256xbf16, #tpu.memory_space<vmem>>, vector<32x256xbf16>,
    %c241_i32 = arith.constant 241 : i32
    %42 = tpu.dynamic_rotate %1 by %c241_i32 dim 1 : vector<32x256xf32>, i32 -> vector<32x256xf32>
    %c6 = arith.constant 6 : index
    %c0_29 = arith.constant 0 : index
    %c0_30 = arith.constant 0 : index
    %43 = vector.load %arg7[%c6, %c0_29, %c0_30] : memref<9x32x256xf32, #tpu.memory_space<vmem>>, vector<1x32x256xf32>
    %44 = vector.shape_cast %43 : vector<1x32x256xf32> to vector<32x256xf32>
    %45 = arith.mulf %42, %44 : vector<32x256xf32>
    %46 = arith.truncf %45 : vector<32x256xf32> to vector<32x256xbf16>
    %c192 = arith.constant 192 : index
    %c0_31 = arith.constant 0 : index
    %47 = vector.load %arg16[%c192, %c0_31] : memref<288x256xbf16, #tpu.memory_space<vmem>>, vector<32x256xbf16>
    tpu.vector_store %arg16[%c192, %c0_31], %46 {strides = array<i32>} : memref<288x256xbf16, #tpu.memory_space<vmem>>, vector<32x256xbf16>,
    %c240_i32 = arith.constant 240 : i32
    %48 = tpu.dynamic_rotate %1 by %c240_i32 dim 1 : vector<32x256xf32>, i32 -> vector<32x256xf32>
    %c7 = arith.constant 7 : index
    %c0_32 = arith.constant 0 : index
    %c0_33 = arith.constant 0 : index
    %49 = vector.load %arg7[%c7, %c0_32, %c0_33] : memref<9x32x256xf32, #tpu.memory_space<vmem>>, vector<1x32x256xf32>
    %50 = vector.shape_cast %49 : vector<1x32x256xf32> to vector<32x256xf32>
    %51 = arith.mulf %48, %50 : vector<32x256xf32>
    %52 = arith.truncf %51 : vector<32x256xf32> to vector<32x256xbf16>
    %c224 = arith.constant 224 : index
    %c0_34 = arith.constant 0 : index
    %53 = vector.load %arg16[%c224, %c0_34] : memref<288x256xbf16, #tpu.memory_space<vmem>>, vector<32x256xbf16>
    tpu.vector_store %arg16[%c224, %c0_34], %52 {strides = array<i32>} : memref<288x256xbf16, #tpu.memory_space<vmem>>, vector<32x256xbf16>,
    %c239_i32 = arith.constant 239 : i32
    %54 = tpu.dynamic_rotate %1 by %c239_i32 dim 1 : vector<32x256xf32>, i32 -> vector<32x256xf32>
    %c8 = arith.constant 8 : index
    %c0_35 = arith.constant 0 : index
    %c0_36 = arith.constant 0 : index
    %55 = vector.load %arg7[%c8, %c0_35, %c0_36] : memref<9x32x256xf32, #tpu.memory_space<vmem>>, vector<1x32x256xf32>
    %56 = vector.shape_cast %55 : vector<1x32x256xf32> to vector<32x256xf32>
    %57 = arith.mulf %54, %56 : vector<32x256xf32>
    %58 = arith.truncf %57 : vector<32x256xf32> to vector<32x256xbf16>
    %c256 = arith.constant 256 : index
    %c0_37 = arith.constant 0 : index
    %59 = vector.load %arg16[%c256, %c0_37] : memref<288x256xbf16, #tpu.memory_space<vmem>>, vector<32x256xbf16>
    tpu.vector_store %arg16[%c256, %c0_37], %58 {strides = array<i32>} : memref<288x256xbf16, #tpu.memory_space<vmem>>, vector<32x256xbf16>,
    %c0_38 = arith.constant 0 : index
    %c0_39 = arith.constant 0 : index
    %c0_40 = arith.constant 0 : index
    %60 = vector.load %arg5[%c0_38, %c0_39, %c0_40] : memref<4x32x288xbf16, #tpu.memory_space<vmem>>, vector<1x32x288xbf16>
    %61 = vector.shape_cast %60 : vector<1x32x288xbf16> to vector<32x288xbf16>
    %c0_41 = arith.constant 0 : index
    %c0_42 = arith.constant 0 : index
    %62 = vector.load %arg16[%c0_41, %c0_42] : memref<288x256xbf16, #tpu.memory_space<vmem>>, vector<288x256xbf16>
    %cst = arith.constant dense<0.000000e+00> : vector<32x256xf32>
    %63 = tpu.matmul %61, %62, %cst {dimension_numbers = #tpu.dot_dimension_numbers<[1], [0], [0], [1], [0, 0, 1, 1], [], []>} : vector<32x288xbf16>, vector<288x256xbf16>, vector<32x256xf32> -> vector<32x256xf32>
    %c0_43 = arith.constant 0 : index
    %c0_44 = arith.constant 0 : index
    %c0_45 = arith.constant 0 : index
    %64 = vector.load %arg6[%c0_43, %c0_44, %c0_45] : memref<4x32x1xf32, #tpu.memory_space<vmem>>, vector<1x32x1xf32>
    %65 = vector.shape_cast %64 : vector<1x32x1xf32> to vector<32x1xf32>
    %66 = vector.broadcast %65 : vector<32x1xf32> to vector<32x256xf32>
    %67 = arith.addf %63, %66 : vector<32x256xf32>
    %cst_46 = arith.constant dense<0.000000e+00> : vector<32xf32>
    %68 = vector.multi_reduction <add>, %67, %cst_46 [1] : vector<32x256xf32> to vector<32xf32>
    %69 = vector.shape_cast %68 : vector<32xf32> to vector<32x1xf32>
    %70 = arith.mulf %67, %67 : vector<32x256xf32>
    %cst_47 = arith.constant dense<0.000000e+00> : vector<32xf32>
    %71 = vector.multi_reduction <add>, %70, %cst_47 [1] : vector<32x256xf32> to vector<32xf32>
    %72 = vector.shape_cast %71 : vector<32xf32> to vector<32x1xf32>
    %73 = tpu.concatenate %69, %72 in 0 : vector<32x1xf32>, vector<32x1xf32> -> vector<64x1xf32>
    %c0_48 = arith.constant 0 : index
    %c0_49 = arith.constant 0 : index
    %74 = vector.load %arg8[%c0_48, %c0_49] : memref<64x64xf32, #tpu.memory_space<vmem>>, vector<64x64xf32>
    %cst_50 = arith.constant dense<0.000000e+00> : vector<64x1xf32>
    %75 = tpu.matmul %74, %73, %cst_50 {dimension_numbers = #tpu.dot_dimension_numbers<[1], [0], [0], [1], [0, 0, 1, 1], [], []>} : vector<64x64xf32>, vector<64x1xf32>, vector<64x1xf32> -> vector<64x1xf32>
    %76 = vector.extract_strided_slice %75 {offsets = [0, 0], sizes = [32, 1], strides = [1, 1]} : vector<64x1xf32> to vector<32x1xf32>
    %77 = vector.extract_strided_slice %75 {offsets = [32, 0], sizes = [32, 1], strides = [1, 1]} : vector<64x1xf32> to vector<32x1xf32>
    %78 = arith.mulf %76, %76 : vector<32x1xf32>
    %79 = arith.subf %77, %78 : vector<32x1xf32>
    %80 = vector.broadcast %76 : vector<32x1xf32> to vector<32x256xf32>
    %81 = arith.subf %67, %80 : vector<32x256xf32>
    %cst_51 = arith.constant 9.99999974E-6 : f32
    %82 = vector.broadcast %cst_51 : f32 to vector<32x1xf32>
    %83 = arith.addf %79, %82 : vector<32x1xf32>
    %84 = math.rsqrt %83 : vector<32x1xf32>
    %85 = vector.broadcast %84 : vector<32x1xf32> to vector<32x256xf32>
    %86 = arith.mulf %81, %85 : vector<32x256xf32>
    %c0_52 = arith.constant 0 : index
    %c0_53 = arith.constant 0 : index
    %c0_54 = arith.constant 0 : index
    %87 = vector.load %arg9[%c0_52, %c0_53, %c0_54] : memref<4x32x1xf32, #tpu.memory_space<vmem>>, vector<1x32x1xf32>
    %88 = vector.shape_cast %87 : vector<1x32x1xf32> to vector<32x1xf32>
    %89 = vector.broadcast %88 : vector<32x1xf32> to vector<32x256xf32>
    %90 = arith.mulf %86, %89 : vector<32x256xf32>
    %c0_55 = arith.constant 0 : index
    %c0_56 = arith.constant 0 : index
    %c0_57 = arith.constant 0 : index
    %91 = vector.load %arg10[%c0_55, %c0_56, %c0_57] : memref<4x32x1xf32, #tpu.memory_space<vmem>>, vector<1x32x1xf32>
    %92 = vector.shape_cast %91 : vector<1x32x1xf32> to vector<32x1xf32>
    %93 = vector.broadcast %92 : vector<32x1xf32> to vector<32x256xf32>
    %94 = arith.addf %90, %93 : vector<32x256xf32>
    %95 = arith.negf %94 : vector<32x256xf32>
    %96 = math.exp %95 : vector<32x256xf32>
    %cst_58 = arith.constant 1.000000e+00 : f32
    %97 = vector.broadcast %cst_58 : f32 to vector<32x256xf32>
    %98 = arith.addf %97, %96 : vector<32x256xf32>
    %99 = arith.divf %97, %98 : vector<32x256xf32>
    %100 = arith.mulf %94, %99 : vector<32x256xf32>
    %c17_i32_59 = arith.constant 17 : i32
    %101 = tpu.dynamic_rotate %100 by %c17_i32_59 dim 1 : vector<32x256xf32>, i32 -> vector<32x256xf32>
    %c0_60 = arith.constant 0 : index
    %c0_61 = arith.constant 0 : index
    %c0_62 = arith.constant 0 : index
    %102 = vector.load %arg7[%c0_60, %c0_61, %c0_62] : memref<9x32x256xf32, #tpu.memory_space<vmem>>, vector<1x32x256xf32>
    %103 = vector.shape_cast %102 : vector<1x32x256xf32> to vector<32x256xf32>
    %104 = arith.mulf %101, %103 : vector<32x256xf32>
    %105 = arith.truncf %104 : vector<32x256xf32> to vector<32x256xbf16>
    %c0_63 = arith.constant 0 : index
    %c0_64 = arith.constant 0 : index
    %106 = vector.load %arg16[%c0_63, %c0_64] : memref<288x256xbf16, #tpu.memory_space<vmem>>, vector<32x256xbf16>
    tpu.vector_store %arg16[%c0_63, %c0_64], %105 {strides = array<i32>} : memref<288x256xbf16, #tpu.memory_space<vmem>>, vector<32x256xbf16>,
    %c16_i32_65 = arith.constant 16 : i32
    %107 = tpu.dynamic_rotate %100 by %c16_i32_65 dim 1 : vector<32x256xf32>, i32 -> vector<32x256xf32>
    %c1_66 = arith.constant 1 : index
    %c0_67 = arith.constant 0 : index
    %c0_68 = arith.constant 0 : index
    %108 = vector.load %arg7[%c1_66, %c0_67, %c0_68] : memref<9x32x256xf32, #tpu.memory_space<vmem>>, vector<1x32x256xf32>
    %109 = vector.shape_cast %108 : vector<1x32x256xf32> to vector<32x256xf32>
    %110 = arith.mulf %107, %109 : vector<32x256xf32>
    %111 = arith.truncf %110 : vector<32x256xf32> to vector<32x256xbf16>
    %c32_69 = arith.constant 32 : index
    %c0_70 = arith.constant 0 : index
    %112 = vector.load %arg16[%c32_69, %c0_70] : memref<288x256xbf16, #tpu.memory_space<vmem>>, vector<32x256xbf16>
    tpu.vector_store %arg16[%c32_69, %c0_70], %111 {strides = array<i32>} : memref<288x256xbf16, #tpu.memory_space<vmem>>, vector<32x256xbf16>,
    %c15_i32_71 = arith.constant 15 : i32
    %113 = tpu.dynamic_rotate %100 by %c15_i32_71 dim 1 : vector<32x256xf32>, i32 -> vector<32x256xf32>
    %c2_72 = arith.constant 2 : index
    %c0_73 = arith.constant 0 : index
    %c0_74 = arith.constant 0 : index
    %114 = vector.load %arg7[%c2_72, %c0_73, %c0_74] : memref<9x32x256xf32, #tpu.memory_space<vmem>>, vector<1x32x256xf32>
    %115 = vector.shape_cast %114 : vector<1x32x256xf32> to vector<32x256xf32>
    %116 = arith.mulf %113, %115 : vector<32x256xf32>
    %117 = arith.truncf %116 : vector<32x256xf32> to vector<32x256xbf16>
    %c64_75 = arith.constant 64 : index
    %c0_76 = arith.constant 0 : index
    %118 = vector.load %arg16[%c64_75, %c0_76] : memref<288x256xbf16, #tpu.memory_space<vmem>>, vector<32x256xbf16>
    tpu.vector_store %arg16[%c64_75, %c0_76], %117 {strides = array<i32>} : memref<288x256xbf16, #tpu.memory_space<vmem>>, vector<32x256xbf16>,
    %c1_i32_77 = arith.constant 1 : i32
    %119 = tpu.dynamic_rotate %100 by %c1_i32_77 dim 1 : vector<32x256xf32>, i32 -> vector<32x256xf32>
    %c3_78 = arith.constant 3 : index
    %c0_79 = arith.constant 0 : index
    %c0_80 = arith.constant 0 : index
    %120 = vector.load %arg7[%c3_78, %c0_79, %c0_80] : memref<9x32x256xf32, #tpu.memory_space<vmem>>, vector<1x32x256xf32>
    %121 = vector.shape_cast %120 : vector<1x32x256xf32> to vector<32x256xf32>
    %122 = arith.mulf %119, %121 : vector<32x256xf32>
    %123 = arith.truncf %122 : vector<32x256xf32> to vector<32x256xbf16>
    %c96_81 = arith.constant 96 : index
    %c0_82 = arith.constant 0 : index
    %124 = vector.load %arg16[%c96_81, %c0_82] : memref<288x256xbf16, #tpu.memory_space<vmem>>, vector<32x256xbf16>
    tpu.vector_store %arg16[%c96_81, %c0_82], %123 {strides = array<i32>} : memref<288x256xbf16, #tpu.memory_space<vmem>>, vector<32x256xbf16>,
    %125 = arith.truncf %100 : vector<32x256xf32> to vector<32x256xbf16>
    %c128_83 = arith.constant 128 : index
    %c0_84 = arith.constant 0 : index
    %126 = vector.load %arg16[%c128_83, %c0_84] : memref<288x256xbf16, #tpu.memory_space<vmem>>, vector<32x256xbf16>
    tpu.vector_store %arg16[%c128_83, %c0_84], %125 {strides = array<i32>} : memref<288x256xbf16, #tpu.memory_space<vmem>>, vector<32x256xbf16>,
    %c255_i32_85 = arith.constant 255 : i32
    %127 = tpu.dynamic_rotate %100 by %c255_i32_85 dim 1 : vector<32x256xf32>, i32 -> vector<32x256xf32>
    %c5_86 = arith.constant 5 : index
    %c0_87 = arith.constant 0 : index
    %c0_88 = arith.constant 0 : index
    %128 = vector.load %arg7[%c5_86, %c0_87, %c0_88] : memref<9x32x256xf32, #tpu.memory_space<vmem>>, vector<1x32x256xf32>
    %129 = vector.shape_cast %128 : vector<1x32x256xf32> to vector<32x256xf32>
    %130 = arith.mulf %127, %129 : vector<32x256xf32>
    %131 = arith.truncf %130 : vector<32x256xf32> to vector<32x256xbf16>
    %c160_89 = arith.constant 160 : index
    %c0_90 = arith.constant 0 : index
    %132 = vector.load %arg16[%c160_89, %c0_90] : memref<288x256xbf16, #tpu.memory_space<vmem>>, vector<32x256xbf16>
    tpu.vector_store %arg16[%c160_89, %c0_90], %131 {strides = array<i32>} : memref<288x256xbf16, #tpu.memory_space<vmem>>, vector<32x256xbf16>,
    %c241_i32_91 = arith.constant 241 : i32
    %133 = tpu.dynamic_rotate %100 by %c241_i32_91 dim 1 : vector<32x256xf32>, i32 -> vector<32x256xf32>
    %c6_92 = arith.constant 6 : index
    %c0_93 = arith.constant 0 : index
    %c0_94 = arith.constant 0 : index
    %134 = vector.load %arg7[%c6_92, %c0_93, %c0_94] : memref<9x32x256xf32, #tpu.memory_space<vmem>>, vector<1x32x256xf32>
    %135 = vector.shape_cast %134 : vector<1x32x256xf32> to vector<32x256xf32>
    %136 = arith.mulf %133, %135 : vector<32x256xf32>
    %137 = arith.truncf %136 : vector<32x256xf32> to vector<32x256xbf16>
    %c192_95 = arith.constant 192 : index
    %c0_96 = arith.constant 0 : index
    %138 = vector.load %arg16[%c192_95, %c0_96] : memref<288x256xbf16, #tpu.memory_space<vmem>>, vector<32x256xbf16>
    tpu.vector_store %arg16[%c192_95, %c0_96], %137 {strides = array<i32>} : memref<288x256xbf16, #tpu.memory_space<vmem>>, vector<32x256xbf16>,
    %c240_i32_97 = arith.constant 240 : i32
    %139 = tpu.dynamic_rotate %100 by %c240_i32_97 dim 1 : vector<32x256xf32>, i32 -> vector<32x256xf32>
    %c7_98 = arith.constant 7 : index
    %c0_99 = arith.constant 0 : index
    %c0_100 = arith.constant 0 : index
    %140 = vector.load %arg7[%c7_98, %c0_99, %c0_100] : memref<9x32x256xf32, #tpu.memory_space<vmem>>, vector<1x32x256xf32>
    %141 = vector.shape_cast %140 : vector<1x32x256xf32> to vector<32x256xf32>
    %142 = arith.mulf %139, %141 : vector<32x256xf32>
    %143 = arith.truncf %142 : vector<32x256xf32> to vector<32x256xbf16>
    %c224_101 = arith.constant 224 : index
    %c0_102 = arith.constant 0 : index
    %144 = vector.load %arg16[%c224_101, %c0_102] : memref<288x256xbf16, #tpu.memory_space<vmem>>, vector<32x256xbf16>
    tpu.vector_store %arg16[%c224_101, %c0_102], %143 {strides = array<i32>} : memref<288x256xbf16, #tpu.memory_space<vmem>>, vector<32x256xbf16>,
    %c239_i32_103 = arith.constant 239 : i32
    %145 = tpu.dynamic_rotate %100 by %c239_i32_103 dim 1 : vector<32x256xf32>, i32 -> vector<32x256xf32>
    %c8_104 = arith.constant 8 : index
    %c0_105 = arith.constant 0 : index
    %c0_106 = arith.constant 0 : index
    %146 = vector.load %arg7[%c8_104, %c0_105, %c0_106] : memref<9x32x256xf32, #tpu.memory_space<vmem>>, vector<1x32x256xf32>
    %147 = vector.shape_cast %146 : vector<1x32x256xf32> to vector<32x256xf32>
    %148 = arith.mulf %145, %147 : vector<32x256xf32>
    %149 = arith.truncf %148 : vector<32x256xf32> to vector<32x256xbf16>
    %c256_107 = arith.constant 256 : index
    %c0_108 = arith.constant 0 : index
    %150 = vector.load %arg16[%c256_107, %c0_108] : memref<288x256xbf16, #tpu.memory_space<vmem>>, vector<32x256xbf16>
    tpu.vector_store %arg16[%c256_107, %c0_108], %149 {strides = array<i32>} : memref<288x256xbf16, #tpu.memory_space<vmem>>, vector<32x256xbf16>,
    %c1_109 = arith.constant 1 : index
    %c0_110 = arith.constant 0 : index
    %c0_111 = arith.constant 0 : index
    %151 = vector.load %arg5[%c1_109, %c0_110, %c0_111] : memref<4x32x288xbf16, #tpu.memory_space<vmem>>, vector<1x32x288xbf16>
    %152 = vector.shape_cast %151 : vector<1x32x288xbf16> to vector<32x288xbf16>
    %c0_112 = arith.constant 0 : index
    %c0_113 = arith.constant 0 : index
    %153 = vector.load %arg16[%c0_112, %c0_113] : memref<288x256xbf16, #tpu.memory_space<vmem>>, vector<288x256xbf16>
    %cst_114 = arith.constant dense<0.000000e+00> : vector<32x256xf32>
    %154 = tpu.matmul %152, %153, %cst_114 {dimension_numbers = #tpu.dot_dimension_numbers<[1], [0], [0], [1], [0, 0, 1, 1], [], []>} : vector<32x288xbf16>, vector<288x256xbf16>, vector<32x256xf32> -> vector<32x256xf32>
    %c1_115 = arith.constant 1 : index
    %c0_116 = arith.constant 0 : index
    %c0_117 = arith.constant 0 : index
    %155 = vector.load %arg6[%c1_115, %c0_116, %c0_117] : memref<4x32x1xf32, #tpu.memory_space<vmem>>, vector<1x32x1xf32>
    %156 = vector.shape_cast %155 : vector<1x32x1xf32> to vector<32x1xf32>
    %157 = vector.broadcast %156 : vector<32x1xf32> to vector<32x256xf32>
    %158 = arith.addf %154, %157 : vector<32x256xf32>
    %159 = vector.broadcast %3 : vector<32x1xf32> to vector<32x256xf32>
    %160 = arith.addf %158, %159 : vector<32x256xf32>
    %cst_118 = arith.constant dense<0.000000e+00> : vector<32xf32>
    %161 = vector.multi_reduction <add>, %160, %cst_118 [1] : vector<32x256xf32> to vector<32xf32>
    %162 = vector.shape_cast %161 : vector<32xf32> to vector<32x1xf32>
    %163 = arith.mulf %160, %160 : vector<32x256xf32>
    %cst_119 = arith.constant dense<0.000000e+00> : vector<32xf32>
    %164 = vector.multi_reduction <add>, %163, %cst_119 [1] : vector<32x256xf32> to vector<32xf32>
    %165 = vector.shape_cast %164 : vector<32xf32> to vector<32x1xf32>
    %166 = tpu.concatenate %162, %165 in 0 : vector<32x1xf32>, vector<32x1xf32> -> vector<64x1xf32>
    %c0_120 = arith.constant 0 : index
    %c0_121 = arith.constant 0 : index
    %167 = vector.load %arg8[%c0_120, %c0_121] : memref<64x64xf32, #tpu.memory_space<vmem>>, vector<64x64xf32>
    %cst_122 = arith.constant dense<0.000000e+00> : vector<64x1xf32>
    %168 = tpu.matmul %167, %166, %cst_122 {dimension_numbers = #tpu.dot_dimension_numbers<[1], [0], [0], [1], [0, 0, 1, 1], [], []>} : vector<64x64xf32>, vector<64x1xf32>, vector<64x1xf32> -> vector<64x1xf32>
    %169 = vector.extract_strided_slice %168 {offsets = [0, 0], sizes = [32, 1], strides = [1, 1]} : vector<64x1xf32> to vector<32x1xf32>
    %170 = vector.extract_strided_slice %168 {offsets = [32, 0], sizes = [32, 1], strides = [1, 1]} : vector<64x1xf32> to vector<32x1xf32>
    %171 = arith.mulf %169, %169 : vector<32x1xf32>
    %172 = arith.subf %170, %171 : vector<32x1xf32>
    %173 = vector.broadcast %169 : vector<32x1xf32> to vector<32x256xf32>
    %174 = arith.subf %160, %173 : vector<32x256xf32>
    %cst_123 = arith.constant 9.99999974E-6 : f32
    %175 = vector.broadcast %cst_123 : f32 to vector<32x1xf32>
    %176 = arith.addf %172, %175 : vector<32x1xf32>
    %177 = math.rsqrt %176 : vector<32x1xf32>
    %178 = vector.broadcast %177 : vector<32x1xf32> to vector<32x256xf32>
    %179 = arith.mulf %174, %178 : vector<32x256xf32>
    %c1_124 = arith.constant 1 : index
    %c0_125 = arith.constant 0 : index
    %c0_126 = arith.constant 0 : index
    %180 = vector.load %arg9[%c1_124, %c0_125, %c0_126] : memref<4x32x1xf32, #tpu.memory_space<vmem>>, vector<1x32x1xf32>
    %181 = vector.shape_cast %180 : vector<1x32x1xf32> to vector<32x1xf32>
    %182 = vector.broadcast %181 : vector<32x1xf32> to vector<32x256xf32>
    %183 = arith.mulf %179, %182 : vector<32x256xf32>
    %c1_127 = arith.constant 1 : index
    %c0_128 = arith.constant 0 : index
    %c0_129 = arith.constant 0 : index
    %184 = vector.load %arg10[%c1_127, %c0_128, %c0_129] : memref<4x32x1xf32, #tpu.memory_space<vmem>>, vector<1x32x1xf32>
    %185 = vector.shape_cast %184 : vector<1x32x1xf32> to vector<32x1xf32>
    %186 = vector.broadcast %185 : vector<32x1xf32> to vector<32x256xf32>
    %187 = arith.addf %183, %186 : vector<32x256xf32>
    %188 = arith.negf %187 : vector<32x256xf32>
    %189 = math.exp %188 : vector<32x256xf32>
    %cst_130 = arith.constant 1.000000e+00 : f32
    %190 = vector.broadcast %cst_130 : f32 to vector<32x256xf32>
    %191 = arith.addf %190, %189 : vector<32x256xf32>
    %192 = arith.divf %190, %191 : vector<32x256xf32>
    %193 = arith.mulf %187, %192 : vector<32x256xf32>
    %c17_i32_131 = arith.constant 17 : i32
    %194 = tpu.dynamic_rotate %193 by %c17_i32_131 dim 1 : vector<32x256xf32>, i32 -> vector<32x256xf32>
    %c0_132 = arith.constant 0 : index
    %c0_133 = arith.constant 0 : index
    %c0_134 = arith.constant 0 : index
    %195 = vector.load %arg7[%c0_132, %c0_133, %c0_134] : memref<9x32x256xf32, #tpu.memory_space<vmem>>, vector<1x32x256xf32>
    %196 = vector.shape_cast %195 : vector<1x32x256xf32> to vector<32x256xf32>
    %197 = arith.mulf %194, %196 : vector<32x256xf32>
    %198 = arith.truncf %197 : vector<32x256xf32> to vector<32x256xbf16>
    %c0_135 = arith.constant 0 : index
    %c0_136 = arith.constant 0 : index
    %199 = vector.load %arg16[%c0_135, %c0_136] : memref<288x256xbf16, #tpu.memory_space<vmem>>, vector<32x256xbf16>
    tpu.vector_store %arg16[%c0_135, %c0_136], %198 {strides = array<i32>} : memref<288x256xbf16, #tpu.memory_space<vmem>>, vector<32x256xbf16>,
    %c16_i32_137 = arith.constant 16 : i32
    %200 = tpu.dynamic_rotate %193 by %c16_i32_137 dim 1 : vector<32x256xf32>, i32 -> vector<32x256xf32>
    %c1_138 = arith.constant 1 : index
    %c0_139 = arith.constant 0 : index
    %c0_140 = arith.constant 0 : index
    %201 = vector.load %arg7[%c1_138, %c0_139, %c0_140] : memref<9x32x256xf32, #tpu.memory_space<vmem>>, vector<1x32x256xf32>
    %202 = vector.shape_cast %201 : vector<1x32x256xf32> to vector<32x256xf32>
    %203 = arith.mulf %200, %202 : vector<32x256xf32>
    %204 = arith.truncf %203 : vector<32x256xf32> to vector<32x256xbf16>
    %c32_141 = arith.constant 32 : index
    %c0_142 = arith.constant 0 : index
    %205 = vector.load %arg16[%c32_141, %c0_142] : memref<288x256xbf16, #tpu.memory_space<vmem>>, vector<32x256xbf16>
    tpu.vector_store %arg16[%c32_141, %c0_142], %204 {strides = array<i32>} : memref<288x256xbf16, #tpu.memory_space<vmem>>, vector<32x256xbf16>,
    %c15_i32_143 = arith.constant 15 : i32
    %206 = tpu.dynamic_rotate %193 by %c15_i32_143 dim 1 : vector<32x256xf32>, i32 -> vector<32x256xf32>
    %c2_144 = arith.constant 2 : index
    %c0_145 = arith.constant 0 : index
    %c0_146 = arith.constant 0 : index
    %207 = vector.load %arg7[%c2_144, %c0_145, %c0_146] : memref<9x32x256xf32, #tpu.memory_space<vmem>>, vector<1x32x256xf32>
    %208 = vector.shape_cast %207 : vector<1x32x256xf32> to vector<32x256xf32>
    %209 = arith.mulf %206, %208 : vector<32x256xf32>
    %210 = arith.truncf %209 : vector<32x256xf32> to vector<32x256xbf16>
    %c64_147 = arith.constant 64 : index
    %c0_148 = arith.constant 0 : index
    %211 = vector.load %arg16[%c64_147, %c0_148] : memref<288x256xbf16, #tpu.memory_space<vmem>>, vector<32x256xbf16>
    tpu.vector_store %arg16[%c64_147, %c0_148], %210 {strides = array<i32>} : memref<288x256xbf16, #tpu.memory_space<vmem>>, vector<32x256xbf16>,
    %c1_i32_149 = arith.constant 1 : i32
    %212 = tpu.dynamic_rotate %193 by %c1_i32_149 dim 1 : vector<32x256xf32>, i32 -> vector<32x256xf32>
    %c3_150 = arith.constant 3 : index
    %c0_151 = arith.constant 0 : index
    %c0_152 = arith.constant 0 : index
    %213 = vector.load %arg7[%c3_150, %c0_151, %c0_152] : memref<9x32x256xf32, #tpu.memory_space<vmem>>, vector<1x32x256xf32>
    %214 = vector.shape_cast %213 : vector<1x32x256xf32> to vector<32x256xf32>
    %215 = arith.mulf %212, %214 : vector<32x256xf32>
    %216 = arith.truncf %215 : vector<32x256xf32> to vector<32x256xbf16>
    %c96_153 = arith.constant 96 : index
    %c0_154 = arith.constant 0 : index
    %217 = vector.load %arg16[%c96_153, %c0_154] : memref<288x256xbf16, #tpu.memory_space<vmem>>, vector<32x256xbf16>
    tpu.vector_store %arg16[%c96_153, %c0_154], %216 {strides = array<i32>} : memref<288x256xbf16, #tpu.memory_space<vmem>>, vector<32x256xbf16>,
    %218 = arith.truncf %193 : vector<32x256xf32> to vector<32x256xbf16>
    %c128_155 = arith.constant 128 : index
    %c0_156 = arith.constant 0 : index
    %219 = vector.load %arg16[%c128_155, %c0_156] : memref<288x256xbf16, #tpu.memory_space<vmem>>, vector<32x256xbf16>
    tpu.vector_store %arg16[%c128_155, %c0_156], %218 {strides = array<i32>} : memref<288x256xbf16, #tpu.memory_space<vmem>>, vector<32x256xbf16>,
    %c255_i32_157 = arith.constant 255 : i32
    %220 = tpu.dynamic_rotate %193 by %c255_i32_157 dim 1 : vector<32x256xf32>, i32 -> vector<32x256xf32>
    %c5_158 = arith.constant 5 : index
    %c0_159 = arith.constant 0 : index
    %c0_160 = arith.constant 0 : index
    %221 = vector.load %arg7[%c5_158, %c0_159, %c0_160] : memref<9x32x256xf32, #tpu.memory_space<vmem>>, vector<1x32x256xf32>
    %222 = vector.shape_cast %221 : vector<1x32x256xf32> to vector<32x256xf32>
    %223 = arith.mulf %220, %222 : vector<32x256xf32>
    %224 = arith.truncf %223 : vector<32x256xf32> to vector<32x256xbf16>
    %c160_161 = arith.constant 160 : index
    %c0_162 = arith.constant 0 : index
    %225 = vector.load %arg16[%c160_161, %c0_162] : memref<288x256xbf16, #tpu.memory_space<vmem>>, vector<32x256xbf16>
    tpu.vector_store %arg16[%c160_161, %c0_162], %224 {strides = array<i32>} : memref<288x256xbf16, #tpu.memory_space<vmem>>, vector<32x256xbf16>,
    %c241_i32_163 = arith.constant 241 : i32
    %226 = tpu.dynamic_rotate %193 by %c241_i32_163 dim 1 : vector<32x256xf32>, i32 -> vector<32x256xf32>
    %c6_164 = arith.constant 6 : index
    %c0_165 = arith.constant 0 : index
    %c0_166 = arith.constant 0 : index
    %227 = vector.load %arg7[%c6_164, %c0_165, %c0_166] : memref<9x32x256xf32, #tpu.memory_space<vmem>>, vector<1x32x256xf32>
    %228 = vector.shape_cast %227 : vector<1x32x256xf32> to vector<32x256xf32>
    %229 = arith.mulf %226, %228 : vector<32x256xf32>
    %230 = arith.truncf %229 : vector<32x256xf32> to vector<32x256xbf16>
    %c192_167 = arith.constant 192 : index
    %c0_168 = arith.constant 0 : index
    %231 = vector.load %arg16[%c192_167, %c0_168] : memref<288x256xbf16, #tpu.memory_space<vmem>>, vector<32x256xbf16>
    tpu.vector_store %arg16[%c192_167, %c0_168], %230 {strides = array<i32>} : memref<288x256xbf16, #tpu.memory_space<vmem>>, vector<32x256xbf16>,
    %c240_i32_169 = arith.constant 240 : i32
    %232 = tpu.dynamic_rotate %193 by %c240_i32_169 dim 1 : vector<32x256xf32>, i32 -> vector<32x256xf32>
    %c7_170 = arith.constant 7 : index
    %c0_171 = arith.constant 0 : index
    %c0_172 = arith.constant 0 : index
    %233 = vector.load %arg7[%c7_170, %c0_171, %c0_172] : memref<9x32x256xf32, #tpu.memory_space<vmem>>, vector<1x32x256xf32>
    %234 = vector.shape_cast %233 : vector<1x32x256xf32> to vector<32x256xf32>
    %235 = arith.mulf %232, %234 : vector<32x256xf32>
    %236 = arith.truncf %235 : vector<32x256xf32> to vector<32x256xbf16>
    %c224_173 = arith.constant 224 : index
    %c0_174 = arith.constant 0 : index
    %237 = vector.load %arg16[%c224_173, %c0_174] : memref<288x256xbf16, #tpu.memory_space<vmem>>, vector<32x256xbf16>
    tpu.vector_store %arg16[%c224_173, %c0_174], %236 {strides = array<i32>} : memref<288x256xbf16, #tpu.memory_space<vmem>>, vector<32x256xbf16>,
    %c239_i32_175 = arith.constant 239 : i32
    %238 = tpu.dynamic_rotate %193 by %c239_i32_175 dim 1 : vector<32x256xf32>, i32 -> vector<32x256xf32>
    %c8_176 = arith.constant 8 : index
    %c0_177 = arith.constant 0 : index
    %c0_178 = arith.constant 0 : index
    %239 = vector.load %arg7[%c8_176, %c0_177, %c0_178] : memref<9x32x256xf32, #tpu.memory_space<vmem>>, vector<1x32x256xf32>
    %240 = vector.shape_cast %239 : vector<1x32x256xf32> to vector<32x256xf32>
    %241 = arith.mulf %238, %240 : vector<32x256xf32>
    %242 = arith.truncf %241 : vector<32x256xf32> to vector<32x256xbf16>
    %c256_179 = arith.constant 256 : index
    %c0_180 = arith.constant 0 : index
    %243 = vector.load %arg16[%c256_179, %c0_180] : memref<288x256xbf16, #tpu.memory_space<vmem>>, vector<32x256xbf16>
    tpu.vector_store %arg16[%c256_179, %c0_180], %242 {strides = array<i32>} : memref<288x256xbf16, #tpu.memory_space<vmem>>, vector<32x256xbf16>,
    %c2_181 = arith.constant 2 : index
    %c0_182 = arith.constant 0 : index
    %c0_183 = arith.constant 0 : index
    %244 = vector.load %arg5[%c2_181, %c0_182, %c0_183] : memref<4x32x288xbf16, #tpu.memory_space<vmem>>, vector<1x32x288xbf16>
    %245 = vector.shape_cast %244 : vector<1x32x288xbf16> to vector<32x288xbf16>
    %c0_184 = arith.constant 0 : index
    %c0_185 = arith.constant 0 : index
    %246 = vector.load %arg16[%c0_184, %c0_185] : memref<288x256xbf16, #tpu.memory_space<vmem>>, vector<288x256xbf16>
    %cst_186 = arith.constant dense<0.000000e+00> : vector<32x256xf32>
    %247 = tpu.matmul %245, %246, %cst_186 {dimension_numbers = #tpu.dot_dimension_numbers<[1], [0], [0], [1], [0, 0, 1, 1], [], []>} : vector<32x288xbf16>, vector<288x256xbf16>, vector<32x256xf32> -> vector<32x256xf32>
    %c2_187 = arith.constant 2 : index
    %c0_188 = arith.constant 0 : index
    %c0_189 = arith.constant 0 : index
    %248 = vector.load %arg6[%c2_187, %c0_188, %c0_189] : memref<4x32x1xf32, #tpu.memory_space<vmem>>, vector<1x32x1xf32>
    %249 = vector.shape_cast %248 : vector<1x32x1xf32> to vector<32x1xf32>
    %250 = vector.broadcast %249 : vector<32x1xf32> to vector<32x256xf32>
    %251 = arith.addf %247, %250 : vector<32x256xf32>
    %252 = arith.addf %67, %251 : vector<32x256xf32>
    %cst_190 = arith.constant dense<0.000000e+00> : vector<256xf32>
    %253 = vector.multi_reduction <add>, %252, %cst_190 [0] : vector<32x256xf32> to vector<256xf32>
    %254 = vector.shape_cast %253 : vector<256xf32> to vector<1x256xf32>
    %cst_191 = arith.constant 3.200000e+01 : f32
    %255 = vector.broadcast %cst_191 : f32 to vector<1x256xf32>
    %256 = arith.divf %254, %255 : vector<1x256xf32>
    %257 = vector.broadcast %256 : vector<1x256xf32> to vector<32x256xf32>
    %258 = arith.subf %252, %257 : vector<32x256xf32>
    %259 = arith.mulf %258, %258 : vector<32x256xf32>
    %cst_192 = arith.constant dense<0.000000e+00> : vector<256xf32>
    %260 = vector.multi_reduction <add>, %259, %cst_192 [0] : vector<32x256xf32> to vector<256xf32>
    %261 = vector.shape_cast %260 : vector<256xf32> to vector<1x256xf32>
    %cst_193 = arith.constant 3.200000e+01 : f32
    %262 = vector.broadcast %cst_193 : f32 to vector<1x256xf32>
    %263 = arith.divf %261, %262 : vector<1x256xf32>
    %cst_194 = arith.constant 9.99999974E-6 : f32
    %264 = vector.broadcast %cst_194 : f32 to vector<1x256xf32>
    %265 = arith.addf %263, %264 : vector<1x256xf32>
    %266 = math.rsqrt %265 : vector<1x256xf32>
    %267 = vector.broadcast %266 : vector<1x256xf32> to vector<32x256xf32>
    %268 = arith.mulf %258, %267 : vector<32x256xf32>
    %c3_195 = arith.constant 3 : index
    %c0_196 = arith.constant 0 : index
    %c0_197 = arith.constant 0 : index
    %269 = vector.load %arg9[%c3_195, %c0_196, %c0_197] : memref<4x32x1xf32, #tpu.memory_space<vmem>>, vector<1x32x1xf32>
    %270 = vector.shape_cast %269 : vector<1x32x1xf32> to vector<32x1xf32>
    %271 = vector.broadcast %270 : vector<32x1xf32> to vector<32x256xf32>
    %272 = arith.mulf %268, %271 : vector<32x256xf32>
    %c3_198 = arith.constant 3 : index
    %c0_199 = arith.constant 0 : index
    %c0_200 = arith.constant 0 : index
    %273 = vector.load %arg10[%c3_198, %c0_199, %c0_200] : memref<4x32x1xf32, #tpu.memory_space<vmem>>, vector<1x32x1xf32>
    %274 = vector.shape_cast %273 : vector<1x32x1xf32> to vector<32x1xf32>
    %275 = vector.broadcast %274 : vector<32x1xf32> to vector<32x256xf32>
    %276 = arith.addf %272, %275 : vector<32x256xf32>
    %c0_201 = arith.constant 0 : index
    %c0_202 = arith.constant 0 : index
    %277 = vector.load %arg11[%c0_201, %c0_202] : memref<32x32xbf16, #tpu.memory_space<vmem>>, vector<32x32xbf16>
    %278 = arith.truncf %276 : vector<32x256xf32> to vector<32x256xbf16>
    %cst_203 = arith.constant dense<0.000000e+00> : vector<32x256xf32>
    %279 = tpu.matmul %277, %278, %cst_203 {dimension_numbers = #tpu.dot_dimension_numbers<[1], [0], [0], [1], [0, 0, 1, 1], [], []>} : vector<32x32xbf16>, vector<32x256xbf16>, vector<32x256xf32> -> vector<32x256xf32>
    %c0_204 = arith.constant 0 : index
    %c0_205 = arith.constant 0 : index
    %280 = vector.load %arg12[%c0_204, %c0_205] : memref<32x1xf32, #tpu.memory_space<vmem>>, vector<32x1xf32>
    %281 = vector.broadcast %280 : vector<32x1xf32> to vector<32x256xf32>
    %282 = arith.addf %279, %281 : vector<32x256xf32>
    %283 = arith.truncf %282 : vector<32x256xf32> to vector<32x256xbf16>
    %cst_206 = arith.constant dense<0.000000e+00> : vector<8x256xf32>
    %284 = tpu.matmul %6, %283, %cst_206 {dimension_numbers = #tpu.dot_dimension_numbers<[1], [0], [0], [1], [0, 0, 1, 1], [], []>} : vector<8x32xbf16>, vector<32x256xbf16>, vector<8x256xf32> -> vector<8x256xf32>
    %cst_207 = arith.constant dense<0xFF800000> : vector<256xf32>
    %285 = vector.multi_reduction <maximumf>, %284, %cst_207 [0] : vector<8x256xf32> to vector<256xf32>
    %286 = vector.shape_cast %285 : vector<256xf32> to vector<1x256xf32>
    %287 = vector.broadcast %286 : vector<1x256xf32> to vector<8x256xf32>
    %288 = arith.subf %284, %287 : vector<8x256xf32>
    %289 = math.exp %288 : vector<8x256xf32>
    %cst_208 = arith.constant dense<0.000000e+00> : vector<256xf32>
    %290 = vector.multi_reduction <add>, %289, %cst_208 [0] : vector<8x256xf32> to vector<256xf32>
    %291 = vector.shape_cast %290 : vector<256xf32> to vector<1x256xf32>
    %292 = arith.truncf %289 : vector<8x256xf32> to vector<8x256xbf16>
    %cst_209 = arith.constant dense<0.000000e+00> : vector<32x256xf32>
    %293 = tpu.matmul %9, %292, %cst_209 {dimension_numbers = #tpu.dot_dimension_numbers<[1], [0], [0], [1], [0, 0, 1, 1], [], []>} : vector<32x8xbf16>, vector<8x256xbf16>, vector<32x256xf32> -> vector<32x256xf32>
    %294 = tpu.reciprocal %291 {approx = true} : vector<1x256xf32> -> vector<1x256xf32>
    %295 = vector.broadcast %294 : vector<1x256xf32> to vector<32x256xf32>
    %296 = arith.mulf %293, %295 : vector<32x256xf32>
    %c0_210 = arith.constant 0 : index
    %c0_211 = arith.constant 0 : index
    %297 = vector.load %arg13[%c0_210, %c0_211] : memref<32x32xbf16, #tpu.memory_space<vmem>>, vector<32x32xbf16>
    %298 = arith.truncf %296 : vector<32x256xf32> to vector<32x256xbf16>
    %cst_212 = arith.constant dense<0.000000e+00> : vector<32x256xf32>
    %299 = tpu.matmul %297, %298, %cst_212 {dimension_numbers = #tpu.dot_dimension_numbers<[1], [0], [0], [1], [0, 0, 1, 1], [], []>} : vector<32x32xbf16>, vector<32x256xbf16>, vector<32x256xf32> -> vector<32x256xf32>
    %300 = arith.addf %252, %299 : vector<32x256xf32>
    %c0_213 = arith.constant 0 : index
    %c0_214 = arith.constant 0 : index
    %301 = vector.load %arg14[%c0_213, %c0_214] : memref<32x1xf32, #tpu.memory_space<vmem>>, vector<32x1xf32>
    %302 = vector.broadcast %301 : vector<32x1xf32> to vector<32x256xf32>
    %303 = arith.addf %300, %302 : vector<32x256xf32>
    %cst_215 = arith.constant dense<0.000000e+00> : vector<32xf32>
    %304 = vector.multi_reduction <add>, %303, %cst_215 [1] : vector<32x256xf32> to vector<32xf32>
    %305 = vector.shape_cast %304 : vector<32xf32> to vector<32x1xf32>
    %306 = arith.mulf %303, %303 : vector<32x256xf32>
    %cst_216 = arith.constant dense<0.000000e+00> : vector<32xf32>
    %307 = vector.multi_reduction <add>, %306, %cst_216 [1] : vector<32x256xf32> to vector<32xf32>
    %308 = vector.shape_cast %307 : vector<32xf32> to vector<32x1xf32>
    %309 = tpu.concatenate %305, %308 in 0 : vector<32x1xf32>, vector<32x1xf32> -> vector<64x1xf32>
    %c0_217 = arith.constant 0 : index
    %c0_218 = arith.constant 0 : index
    %310 = vector.load %arg8[%c0_217, %c0_218] : memref<64x64xf32, #tpu.memory_space<vmem>>, vector<64x64xf32>
    %cst_219 = arith.constant dense<0.000000e+00> : vector<64x1xf32>
    %311 = tpu.matmul %310, %309, %cst_219 {dimension_numbers = #tpu.dot_dimension_numbers<[1], [0], [0], [1], [0, 0, 1, 1], [], []>} : vector<64x64xf32>, vector<64x1xf32>, vector<64x1xf32> -> vector<64x1xf32>
    %312 = vector.extract_strided_slice %311 {offsets = [0, 0], sizes = [32, 1], strides = [1, 1]} : vector<64x1xf32> to vector<32x1xf32>
    %313 = vector.extract_strided_slice %311 {offsets = [32, 0], sizes = [32, 1], strides = [1, 1]} : vector<64x1xf32> to vector<32x1xf32>
    %314 = arith.mulf %312, %312 : vector<32x1xf32>
    %315 = arith.subf %313, %314 : vector<32x1xf32>
    %316 = vector.broadcast %312 : vector<32x1xf32> to vector<32x256xf32>
    %317 = arith.subf %303, %316 : vector<32x256xf32>
    %cst_220 = arith.constant 9.99999974E-6 : f32
    %318 = vector.broadcast %cst_220 : f32 to vector<32x1xf32>
    %319 = arith.addf %315, %318 : vector<32x1xf32>
    %320 = math.rsqrt %319 : vector<32x1xf32>
    %321 = vector.broadcast %320 : vector<32x1xf32> to vector<32x256xf32>
    %322 = arith.mulf %317, %321 : vector<32x256xf32>
    %c2_221 = arith.constant 2 : index
    %c0_222 = arith.constant 0 : index
    %c0_223 = arith.constant 0 : index
    %323 = vector.load %arg9[%c2_221, %c0_222, %c0_223] : memref<4x32x1xf32, #tpu.memory_space<vmem>>, vector<1x32x1xf32>
    %324 = vector.shape_cast %323 : vector<1x32x1xf32> to vector<32x1xf32>
    %325 = vector.broadcast %324 : vector<32x1xf32> to vector<32x256xf32>
    %326 = arith.mulf %322, %325 : vector<32x256xf32>
    %c2_224 = arith.constant 2 : index
    %c0_225 = arith.constant 0 : index
    %c0_226 = arith.constant 0 : index
    %327 = vector.load %arg10[%c2_224, %c0_225, %c0_226] : memref<4x32x1xf32, #tpu.memory_space<vmem>>, vector<1x32x1xf32>
    %328 = vector.shape_cast %327 : vector<1x32x1xf32> to vector<32x1xf32>
    %329 = vector.broadcast %328 : vector<32x1xf32> to vector<32x256xf32>
    %330 = arith.addf %326, %329 : vector<32x256xf32>
    %331 = arith.negf %330 : vector<32x256xf32>
    %332 = math.exp %331 : vector<32x256xf32>
    %cst_227 = arith.constant 1.000000e+00 : f32
    %333 = vector.broadcast %cst_227 : f32 to vector<32x256xf32>
    %334 = arith.addf %333, %332 : vector<32x256xf32>
    %335 = arith.divf %333, %334 : vector<32x256xf32>
    %336 = arith.mulf %330, %335 : vector<32x256xf32>
    %c17_i32_228 = arith.constant 17 : i32
    %337 = tpu.dynamic_rotate %336 by %c17_i32_228 dim 1 : vector<32x256xf32>, i32 -> vector<32x256xf32>
    %c0_229 = arith.constant 0 : index
    %c0_230 = arith.constant 0 : index
    %c0_231 = arith.constant 0 : index
    %338 = vector.load %arg7[%c0_229, %c0_230, %c0_231] : memref<9x32x256xf32, #tpu.memory_space<vmem>>, vector<1x32x256xf32>
    %339 = vector.shape_cast %338 : vector<1x32x256xf32> to vector<32x256xf32>
    %340 = arith.mulf %337, %339 : vector<32x256xf32>
    %341 = arith.truncf %340 : vector<32x256xf32> to vector<32x256xbf16>
    %c0_232 = arith.constant 0 : index
    %c0_233 = arith.constant 0 : index
    %342 = vector.load %arg16[%c0_232, %c0_233] : memref<288x256xbf16, #tpu.memory_space<vmem>>, vector<32x256xbf16>
    tpu.vector_store %arg16[%c0_232, %c0_233], %341 {strides = array<i32>} : memref<288x256xbf16, #tpu.memory_space<vmem>>, vector<32x256xbf16>,
    %c16_i32_234 = arith.constant 16 : i32
    %343 = tpu.dynamic_rotate %336 by %c16_i32_234 dim 1 : vector<32x256xf32>, i32 -> vector<32x256xf32>
    %c1_235 = arith.constant 1 : index
    %c0_236 = arith.constant 0 : index
    %c0_237 = arith.constant 0 : index
    %344 = vector.load %arg7[%c1_235, %c0_236, %c0_237] : memref<9x32x256xf32, #tpu.memory_space<vmem>>, vector<1x32x256xf32>
    %345 = vector.shape_cast %344 : vector<1x32x256xf32> to vector<32x256xf32>
    %346 = arith.mulf %343, %345 : vector<32x256xf32>
    %347 = arith.truncf %346 : vector<32x256xf32> to vector<32x256xbf16>
    %c32_238 = arith.constant 32 : index
    %c0_239 = arith.constant 0 : index
    %348 = vector.load %arg16[%c32_238, %c0_239] : memref<288x256xbf16, #tpu.memory_space<vmem>>, vector<32x256xbf16>
    tpu.vector_store %arg16[%c32_238, %c0_239], %347 {strides = array<i32>} : memref<288x256xbf16, #tpu.memory_space<vmem>>, vector<32x256xbf16>,
    %c15_i32_240 = arith.constant 15 : i32
    %349 = tpu.dynamic_rotate %336 by %c15_i32_240 dim 1 : vector<32x256xf32>, i32 -> vector<32x256xf32>
    %c2_241 = arith.constant 2 : index
    %c0_242 = arith.constant 0 : index
    %c0_243 = arith.constant 0 : index
    %350 = vector.load %arg7[%c2_241, %c0_242, %c0_243] : memref<9x32x256xf32, #tpu.memory_space<vmem>>, vector<1x32x256xf32>
    %351 = vector.shape_cast %350 : vector<1x32x256xf32> to vector<32x256xf32>
    %352 = arith.mulf %349, %351 : vector<32x256xf32>
    %353 = arith.truncf %352 : vector<32x256xf32> to vector<32x256xbf16>
    %c64_244 = arith.constant 64 : index
    %c0_245 = arith.constant 0 : index
    %354 = vector.load %arg16[%c64_244, %c0_245] : memref<288x256xbf16, #tpu.memory_space<vmem>>, vector<32x256xbf16>
    tpu.vector_store %arg16[%c64_244, %c0_245], %353 {strides = array<i32>} : memref<288x256xbf16, #tpu.memory_space<vmem>>, vector<32x256xbf16>,
    %c1_i32_246 = arith.constant 1 : i32
    %355 = tpu.dynamic_rotate %336 by %c1_i32_246 dim 1 : vector<32x256xf32>, i32 -> vector<32x256xf32>
    %c3_247 = arith.constant 3 : index
    %c0_248 = arith.constant 0 : index
    %c0_249 = arith.constant 0 : index
    %356 = vector.load %arg7[%c3_247, %c0_248, %c0_249] : memref<9x32x256xf32, #tpu.memory_space<vmem>>, vector<1x32x256xf32>
    %357 = vector.shape_cast %356 : vector<1x32x256xf32> to vector<32x256xf32>
    %358 = arith.mulf %355, %357 : vector<32x256xf32>
    %359 = arith.truncf %358 : vector<32x256xf32> to vector<32x256xbf16>
    %c96_250 = arith.constant 96 : index
    %c0_251 = arith.constant 0 : index
    %360 = vector.load %arg16[%c96_250, %c0_251] : memref<288x256xbf16, #tpu.memory_space<vmem>>, vector<32x256xbf16>
    tpu.vector_store %arg16[%c96_250, %c0_251], %359 {strides = array<i32>} : memref<288x256xbf16, #tpu.memory_space<vmem>>, vector<32x256xbf16>,
    %361 = arith.truncf %336 : vector<32x256xf32> to vector<32x256xbf16>
    %c128_252 = arith.constant 128 : index
    %c0_253 = arith.constant 0 : index
    %362 = vector.load %arg16[%c128_252, %c0_253] : memref<288x256xbf16, #tpu.memory_space<vmem>>, vector<32x256xbf16>
    tpu.vector_store %arg16[%c128_252, %c0_253], %361 {strides = array<i32>} : memref<288x256xbf16, #tpu.memory_space<vmem>>, vector<32x256xbf16>,
    %c255_i32_254 = arith.constant 255 : i32
    %363 = tpu.dynamic_rotate %336 by %c255_i32_254 dim 1 : vector<32x256xf32>, i32 -> vector<32x256xf32>
    %c5_255 = arith.constant 5 : index
    %c0_256 = arith.constant 0 : index
    %c0_257 = arith.constant 0 : index
    %364 = vector.load %arg7[%c5_255, %c0_256, %c0_257] : memref<9x32x256xf32, #tpu.memory_space<vmem>>, vector<1x32x256xf32>
    %365 = vector.shape_cast %364 : vector<1x32x256xf32> to vector<32x256xf32>
    %366 = arith.mulf %363, %365 : vector<32x256xf32>
    %367 = arith.truncf %366 : vector<32x256xf32> to vector<32x256xbf16>
    %c160_258 = arith.constant 160 : index
    %c0_259 = arith.constant 0 : index
    %368 = vector.load %arg16[%c160_258, %c0_259] : memref<288x256xbf16, #tpu.memory_space<vmem>>, vector<32x256xbf16>
    tpu.vector_store %arg16[%c160_258, %c0_259], %367 {strides = array<i32>} : memref<288x256xbf16, #tpu.memory_space<vmem>>, vector<32x256xbf16>,
    %c241_i32_260 = arith.constant 241 : i32
    %369 = tpu.dynamic_rotate %336 by %c241_i32_260 dim 1 : vector<32x256xf32>, i32 -> vector<32x256xf32>
    %c6_261 = arith.constant 6 : index
    %c0_262 = arith.constant 0 : index
    %c0_263 = arith.constant 0 : index
    %370 = vector.load %arg7[%c6_261, %c0_262, %c0_263] : memref<9x32x256xf32, #tpu.memory_space<vmem>>, vector<1x32x256xf32>
    %371 = vector.shape_cast %370 : vector<1x32x256xf32> to vector<32x256xf32>
    %372 = arith.mulf %369, %371 : vector<32x256xf32>
    %373 = arith.truncf %372 : vector<32x256xf32> to vector<32x256xbf16>
    %c192_264 = arith.constant 192 : index
    %c0_265 = arith.constant 0 : index
    %374 = vector.load %arg16[%c192_264, %c0_265] : memref<288x256xbf16, #tpu.memory_space<vmem>>, vector<32x256xbf16>
    tpu.vector_store %arg16[%c192_264, %c0_265], %373 {strides = array<i32>} : memref<288x256xbf16, #tpu.memory_space<vmem>>, vector<32x256xbf16>,
    %c240_i32_266 = arith.constant 240 : i32
    %375 = tpu.dynamic_rotate %336 by %c240_i32_266 dim 1 : vector<32x256xf32>, i32 -> vector<32x256xf32>
    %c7_267 = arith.constant 7 : index
    %c0_268 = arith.constant 0 : index
    %c0_269 = arith.constant 0 : index
    %376 = vector.load %arg7[%c7_267, %c0_268, %c0_269] : memref<9x32x256xf32, #tpu.memory_space<vmem>>, vector<1x32x256xf32>
    %377 = vector.shape_cast %376 : vector<1x32x256xf32> to vector<32x256xf32>
    %378 = arith.mulf %375, %377 : vector<32x256xf32>
    %379 = arith.truncf %378 : vector<32x256xf32> to vector<32x256xbf16>
    %c224_270 = arith.constant 224 : index
    %c0_271 = arith.constant 0 : index
    %380 = vector.load %arg16[%c224_270, %c0_271] : memref<288x256xbf16, #tpu.memory_space<vmem>>, vector<32x256xbf16>
    tpu.vector_store %arg16[%c224_270, %c0_271], %379 {strides = array<i32>} : memref<288x256xbf16, #tpu.memory_space<vmem>>, vector<32x256xbf16>,
    %c239_i32_272 = arith.constant 239 : i32
    %381 = tpu.dynamic_rotate %336 by %c239_i32_272 dim 1 : vector<32x256xf32>, i32 -> vector<32x256xf32>
    %c8_273 = arith.constant 8 : index
    %c0_274 = arith.constant 0 : index
    %c0_275 = arith.constant 0 : index
    %382 = vector.load %arg7[%c8_273, %c0_274, %c0_275] : memref<9x32x256xf32, #tpu.memory_space<vmem>>, vector<1x32x256xf32>
    %383 = vector.shape_cast %382 : vector<1x32x256xf32> to vector<32x256xf32>
    %384 = arith.mulf %381, %383 : vector<32x256xf32>
    %385 = arith.truncf %384 : vector<32x256xf32> to vector<32x256xbf16>
    %c256_276 = arith.constant 256 : index
    %c0_277 = arith.constant 0 : index
    %386 = vector.load %arg16[%c256_276, %c0_277] : memref<288x256xbf16, #tpu.memory_space<vmem>>, vector<32x256xbf16>
    tpu.vector_store %arg16[%c256_276, %c0_277], %385 {strides = array<i32>} : memref<288x256xbf16, #tpu.memory_space<vmem>>, vector<32x256xbf16>,
    %c3_278 = arith.constant 3 : index
    %c0_279 = arith.constant 0 : index
    %c0_280 = arith.constant 0 : index
    %387 = vector.load %arg5[%c3_278, %c0_279, %c0_280] : memref<4x32x288xbf16, #tpu.memory_space<vmem>>, vector<1x32x288xbf16>
    %388 = vector.shape_cast %387 : vector<1x32x288xbf16> to vector<32x288xbf16>
    %c0_281 = arith.constant 0 : index
    %c0_282 = arith.constant 0 : index
    %389 = vector.load %arg16[%c0_281, %c0_282] : memref<288x256xbf16, #tpu.memory_space<vmem>>, vector<288x256xbf16>
    %cst_283 = arith.constant dense<0.000000e+00> : vector<32x256xf32>
    %390 = tpu.matmul %388, %389, %cst_283 {dimension_numbers = #tpu.dot_dimension_numbers<[1], [0], [0], [1], [0, 0, 1, 1], [], []>} : vector<32x288xbf16>, vector<288x256xbf16>, vector<32x256xf32> -> vector<32x256xf32>
    %c3_284 = arith.constant 3 : index
    %c0_285 = arith.constant 0 : index
    %c0_286 = arith.constant 0 : index
    %391 = vector.load %arg6[%c3_284, %c0_285, %c0_286] : memref<4x32x1xf32, #tpu.memory_space<vmem>>, vector<1x32x1xf32>
    %392 = vector.shape_cast %391 : vector<1x32x1xf32> to vector<32x1xf32>
    %393 = vector.broadcast %392 : vector<32x1xf32> to vector<32x256xf32>
    %394 = arith.addf %390, %393 : vector<32x256xf32>
    %c0_287 = arith.constant 0 : index
    %c0_288 = arith.constant 0 : index
    %c0_289 = arith.constant 0 : index
    %395 = vector.load %arg15[%c0_287, %c0_288, %c0_289] : memref<1x32x256xf32, #tpu.memory_space<vmem>>, vector<1x32x256xf32>
    %396 = vector.shape_cast %395 : vector<1x32x256xf32> to vector<32x256xf32>
    %397 = vector.shape_cast %394 : vector<32x256xf32> to vector<1x32x256xf32>
    tpu.vector_store %arg15[%c0_287, %c0_288, %c0_289], %397 {strides = array<i32>} : memref<1x32x256xf32, #tpu.memory_space<vmem>>, vector<1x32x256xf32>,
    return
  }
  func.func @transform_0(%arg0: i32) -> (i32, i32, i32) {
    %c0_i32 = arith.constant 0 : i32
    %c0_i32_0 = arith.constant 0 : i32
    %c0_i32_1 = arith.constant 0 : i32
    return %arg0, %c0_i32, %c0_i32_0 : i32, i32, i32
  }
  func.func @transform_1(%arg0: i32) -> (i32, i32, i32) {
    %c0_i32 = arith.constant 0 : i32
    %c0_i32_0 = arith.constant 0 : i32
    %c0_i32_1 = arith.constant 0 : i32
    return %arg0, %c0_i32, %c0_i32_0 : i32, i32, i32
  }
  func.func @transform_2(%arg0: i32) -> (i32, i32, i32) {
    %c0_i32 = arith.constant 0 : i32
    %c0_i32_0 = arith.constant 0 : i32
    %c0_i32_1 = arith.constant 0 : i32
    return %arg0, %c0_i32, %c0_i32_0 : i32, i32, i32
  }
  func.func @transform_3(%arg0: i32) -> (i32, i32, i32) {
    %c0_i32 = arith.constant 0 : i32
    %c0_i32_0 = arith.constant 0 : i32
    %c0_i32_1 = arith.constant 0 : i32
    return %arg0, %c0_i32, %c0_i32_0 : i32, i32, i32
  }
  func.func @transform_4(%arg0: i32) -> (i32, i32, i32) {
    %c0_i32 = arith.constant 0 : i32
    %c0_i32_0 = arith.constant 0 : i32
    %c0_i32_1 = arith.constant 0 : i32
    %c0_i32_2 = arith.constant 0 : i32
    return %c0_i32, %c0_i32_0, %c0_i32_1 : i32, i32, i32
  }
  func.func @transform_5(%arg0: i32) -> (i32, i32, i32) {
    %c0_i32 = arith.constant 0 : i32
    %c0_i32_0 = arith.constant 0 : i32
    %c0_i32_1 = arith.constant 0 : i32
    %c0_i32_2 = arith.constant 0 : i32
    return %c0_i32, %c0_i32_0, %c0_i32_1 : i32, i32, i32
  }
  func.func @transform_6(%arg0: i32) -> (i32, i32, i32) {
    %c0_i32 = arith.constant 0 : i32
    %c0_i32_0 = arith.constant 0 : i32
    %c0_i32_1 = arith.constant 0 : i32
    %c0_i32_2 = arith.constant 0 : i32
    return %c0_i32, %c0_i32_0, %c0_i32_1 : i32, i32, i32
  }
  func.func @transform_7(%arg0: i32) -> (i32, i32) {
    %c0_i32 = arith.constant 0 : i32
    %c0_i32_0 = arith.constant 0 : i32
    %c0_i32_1 = arith.constant 0 : i32
    return %c0_i32, %c0_i32_0 : i32, i32
  }
  func.func @transform_8(%arg0: i32) -> (i32, i32, i32) {
    %c0_i32 = arith.constant 0 : i32
    %c0_i32_0 = arith.constant 0 : i32
    %c0_i32_1 = arith.constant 0 : i32
    %c0_i32_2 = arith.constant 0 : i32
    return %c0_i32, %c0_i32_0, %c0_i32_1 : i32, i32, i32
  }
  func.func @transform_9(%arg0: i32) -> (i32, i32, i32) {
    %c0_i32 = arith.constant 0 : i32
    %c0_i32_0 = arith.constant 0 : i32
    %c0_i32_1 = arith.constant 0 : i32
    %c0_i32_2 = arith.constant 0 : i32
    return %c0_i32, %c0_i32_0, %c0_i32_1 : i32, i32, i32
  }
  func.func @transform_10(%arg0: i32) -> (i32, i32) {
    %c0_i32 = arith.constant 0 : i32
    %c0_i32_0 = arith.constant 0 : i32
    %c0_i32_1 = arith.constant 0 : i32
    return %c0_i32, %c0_i32_0 : i32, i32
  }
  func.func @transform_11(%arg0: i32) -> (i32, i32) {
    %c0_i32 = arith.constant 0 : i32
    %c0_i32_0 = arith.constant 0 : i32
    %c0_i32_1 = arith.constant 0 : i32
    return %c0_i32, %c0_i32_0 : i32, i32
  }
  func.func @transform_12(%arg0: i32) -> (i32, i32) {
    %c0_i32 = arith.constant 0 : i32
    %c0_i32_0 = arith.constant 0 : i32
    %c0_i32_1 = arith.constant 0 : i32
    return %c0_i32, %c0_i32_0 : i32, i32
  }
  func.func @transform_13(%arg0: i32) -> (i32, i32) {
    %c0_i32 = arith.constant 0 : i32
    %c0_i32_0 = arith.constant 0 : i32
    %c0_i32_1 = arith.constant 0 : i32
    return %c0_i32, %c0_i32_0 : i32, i32
  }
  func.func @transform_14(%arg0: i32) -> (i32, i32, i32) {
    %c0_i32 = arith.constant 0 : i32
    %c0_i32_0 = arith.constant 0 : i32
    %c0_i32_1 = arith.constant 0 : i32
    return %arg0, %c0_i32, %c0_i32_0 : i32, i32, i32
  }
}

</mosaic_0001>

<llo_original>
// kernel: mul.22
$region0: #{mul.22}
  %s0 = inlined_call_operand.vmem [shape: f32[2,6], index: 0, kind: input, shape index: {}]
  %s1 = inlined_call_operand.vmem [shape: f32[12], index: 1, kind: output, shape index: {}]
  $region1: #{mul.22} parent=0
    #allocation0 [shape = 'u8[4096]{0}', space=vmem, size = 0x1000, scoped, tag = 'scoped mem for output reshape']
    #allocation1 [shape = 'u8[4096]{0}', space=vmem, size = 0x1000, scoped, tag = 'scoped mem for input reshape']
    %s3 = sshllo.u32 0, 2
    %v4 = vld [vmem:[%s0] sm:%s3]
    %5 = vst [vmem:[#allocation1] sm:%s3] %v4
    %v6 = vld [vmem:[#allocation1] sm:$0x1]
    %vm7 = vcmask 48128
    %8 = vst.msk [vmem:[#allocation0] sm:$0x1] %vm7, %v6
    %s9 = scalar_lea.vmem [#allocation1], 1
    %v10 = vld [vmem:[%s9] sm:$0x1]
    %11 = vrot.lane.b32.xlu0 %v10, 6
    %v12 = vpop.permute.xlu0 %11
    %vm13 = vcmask 97328
    %14 = vst.msk [vmem:[#allocation0] sm:$0x1] %vm13, %v12
    %s16 = sshllo.u32 0, 1
    %v18 = vld [vmem:[#allocation0] sm:%s16]
    %s19 = sshllo.u32 0, 1
    %20 = vst [vmem:[%s1] sm:%s19] %v18

// kernel: neuron_unet_forward.1
$region0: #{neuron_unet_forward.1}
  #allocation0 [shape = 'u32[]', space=smem, size = 0x4, offset = 0x4, fixed_abs, tag = 'smem constant byte address 0x4 - core index']
  #allocation1 [shape = 'u32[144,128]{1,0:T(1,128)}', space=vmem, size = 0x12000, scoped, tag = 'internal scratch']
  #allocation2 [shape = 'bf16[288,256]{1,0:T(16,128)(2,1)}', space=vmem, size = 0x24000, scoped, tag = 'scratch operand']
  %s0 = inlined_call_operand.vmem [shape: f32[2,32,256], index: 0, kind: input, shape index: {}]
  %s1 = inlined_call_operand.vmem [shape: f32[2,32,1], index: 1, kind: input, shape index: {}]
  %s2 = inlined_call_operand.vmem [shape: f32[2,8,32], index: 2, kind: input, shape index: {}]
  %s3 = inlined_call_operand.vmem [shape: f32[2,32,8], index: 3, kind: input, shape index: {}]
  %s4 = inlined_call_operand.vmem [shape: bf16[4,32,288], index: 4, kind: input, shape index: {}]
  %s5 = inlined_call_operand.vmem [shape: f32[4,32,1], index: 5, kind: input, shape index: {}]
  %s6 = inlined_call_operand.vmem [shape: f32[9,32,256], index: 6, kind: input, shape index: {}]
  %s7 = inlined_call_operand.vmem [shape: f32[64,64], index: 7, kind: input, shape index: {}]
  %s8 = inlined_call_operand.vmem [shape: f32[4,32,1], index: 8, kind: input, shape index: {}]
  %s9 = inlined_call_operand.vmem [shape: f32[4,32,1], index: 9, kind: input, shape index: {}]
  %s10 = inlined_call_operand.vmem [shape: bf16[32,32], index: 10, kind: input, shape index: {}]
  %s11 = inlined_call_operand.vmem [shape: f32[32,1], index: 11, kind: input, shape index: {}]
  %s12 = inlined_call_operand.vmem [shape: bf16[32,32], index: 12, kind: input, shape index: {}]
  %s13 = inlined_call_operand.vmem [shape: f32[32,1], index: 13, kind: input, shape index: {}]
  %s14 = inlined_call_operand.vmem [shape: f32[2,32,256], index: 14, kind: output, shape index: {}]
  %s15 = sld [smem:[#allocation0]]
  $region89: #{neuron_unet_forward.1} parent=0
    _
  %s17 = ssub.s32 1, %s15
  %s18 = scalar_select 0, %s17, %s15
  loop: start=0, step=1, limit=4
  $region2: #{neuron_unet_forward.1} parent=0 // loop_pre_header
    _
  $region3: #{neuron_unet_forward.1} parent=0 // loop_header
    %s20 = sphi 0, %s24
    %p21 = scmp.ge.s32.totalorder %s20, 4
    %s30 = sphi 0, %s32
    %s33 = sphi 0, %s30
    %s34 = sphi 0, %s33
    %s50 = sphi 0, %s34
    %s56 = sphi 0, %s58
    %s59 = sphi 0, %s56
    %s60 = sphi 0, %s59
    %s76 = sphi 0, %s60
    %s82 = sphi 0, %s84
    %s85 = sphi 0, %s82
    %s86 = sphi 0, %s85
    %s102 = sphi 0, %s86
    %s108 = sphi 0, %s110
    %s111 = sphi 0, %s108
    %s112 = sphi 0, %s111
    %s128 = sphi 0, %s112
    %s132 = sphi 0, %s132
    %s134 = sphi 0, %s132
    %s135 = sphi 0, %s134
    %s149 = sphi 0, %s135
    %s153 = sphi 0, %s153
    %s155 = sphi 0, %s153
    %s156 = sphi 0, %s155
    %s170 = sphi 0, %s156
    %s174 = sphi 0, %s174
    %s176 = sphi 0, %s174
    %s177 = sphi 0, %s176
    %s191 = sphi 0, %s177
    %s195 = sphi 0, %s195
    %s197 = sphi 0, %s195
    %s198 = sphi 0, %s197
    %s212 = sphi 0, %s198
    %s216 = sphi 0, %s216
    %s218 = sphi 0, %s216
    %s219 = sphi 0, %s218
    %s233 = sphi 0, %s219
    %s237 = sphi 0, %s237
    %s239 = sphi 0, %s237
    %s240 = sphi 0, %s239
    %s254 = sphi 0, %s240
    %s258 = sphi 0, %s258
    %s260 = sphi 0, %s258
    %s261 = sphi 0, %s260
    %s275 = sphi 0, %s261
    %s279 = sphi 0, %s279
    %s281 = sphi 0, %s279
    %s282 = sphi 0, %s281
    %s296 = sphi 0, %s282
    %s300 = sphi 0, %s300
    %s302 = sphi 0, %s300
    %s303 = sphi 0, %s302
    %s317 = sphi 0, %s303
    %s321 = sphi 0, %s321
    %s323 = sphi 0, %s321
    %s324 = sphi 0, %s323
    %s338 = sphi 0, %s324
    %s344 = sphi 0, %s346
    %s347 = sphi 0, %s344
    %s348 = sphi 0, %s347
    %s364 = sphi 0, %s348
  $region4: #{neuron_unet_forward.1} parent=0 // loop_header_branch
    %23 = sbr.rel (%p21) target = $region8
  $region5: #{neuron_unet_forward.1} parent=0 // loop_body
    %s25 = ssub.s32 %s20, 1
    %s26 = ssub.s32 %s20, 2
    %s27 = sadd.s32 %s20, 1
    %s28 = ssub.s32 %s20, %s27
    %p29 = scmp.eq.s32.totalorder %s28, 0
    %s31 = sadd.s32 %s30, 1
    %s32 = scalar_select %p29, %s30, %s31
    %p35 = pneg %p29
    %p36 = scmp.eq.s32.totalorder %s20, 1
    %p37 = por %p35, %p36
    %p38 = scmp.ne.s32.totalorder %s30, %s33
    %p39 = scmp.eq.s32.totalorder %s20, 0
    %p40 = por %p38, %p39
    %p41 = scmp.ne.s32.totalorder %s30, %s33
    %p42 = scmp.eq.s32.totalorder %s25, 1
    %p43 = por %p41, %p42
    %p44 = scmp.ne.s32.totalorder %s33, %s34
    %p45 = scmp.eq.s32.totalorder %s25, 0
    %p46 = por %p44, %p45
    %p47 = scmp.ne.s32.totalorder %s33, %s34
    %p48 = scmp.eq.s32.totalorder %s26, 1
    %p49 = por %p47, %p48
    %p51 = scmp.ne.s32.totalorder %s34, %s50
    %p52 = scmp.eq.s32.totalorder %s26, 0
    %p53 = por %p51, %p52
    %s54 = ssub.s32 %s20, %s27
    %p55 = scmp.eq.s32.totalorder %s54, 0
    %s57 = sadd.s32 %s56, 1
    %s58 = scalar_select %p55, %s56, %s57
    %p61 = pneg %p55
    %p62 = scmp.eq.s32.totalorder %s20, 1
    %p63 = por %p61, %p62
    %p64 = scmp.ne.s32.totalorder %s56, %s59
    %p65 = scmp.eq.s32.totalorder %s20, 0
    %p66 = por %p64, %p65
    %p67 = scmp.ne.s32.totalorder %s56, %s59
    %p68 = scmp.eq.s32.totalorder %s25, 1
    %p69 = por %p67, %p68
    %p70 = scmp.ne.s32.totalorder %s59, %s60
    %p71 = scmp.eq.s32.totalorder %s25, 0
    %p72 = por %p70, %p71
    %p73 = scmp.ne.s32.totalorder %s59, %s60
    %p74 = scmp.eq.s32.totalorder %s26, 1
    %p75 = por %p73, %p74
    %p77 = scmp.ne.s32.totalorder %s60, %s76
    %p78 = scmp.eq.s32.totalorder %s26, 0
    %p79 = por %p77, %p78
    %s80 = ssub.s32 %s20, %s27
    %p81 = scmp.eq.s32.totalorder %s80, 0
    %s83 = sadd.s32 %s82, 1
    %s84 = scalar_select %p81, %s82, %s83
    %p87 = pneg %p81
    %p88 = scmp.eq.s32.totalorder %s20, 1
    %p89 = por %p87, %p88
    %p90 = scmp.ne.s32.totalorder %s82, %s85
    %p91 = scmp.eq.s32.totalorder %s20, 0
    %p92 = por %p90, %p91
    %p93 = scmp.ne.s32.totalorder %s82, %s85
    %p94 = scmp.eq.s32.totalorder %s25, 1
    %p95 = por %p93, %p94
    %p96 = scmp.ne.s32.totalorder %s85, %s86
    %p97 = scmp.eq.s32.totalorder %s25, 0
    %p98 = por %p96, %p97
    %p99 = scmp.ne.s32.totalorder %s85, %s86
    %p100 = scmp.eq.s32.totalorder %s26, 1
    %p101 = por %p99, %p100
    %p103 = scmp.ne.s32.totalorder %s86, %s102
    %p104 = scmp.eq.s32.totalorder %s26, 0
    %p105 = por %p103, %p104
    %s106 = ssub.s32 %s20, %s27
    %p107 = scmp.eq.s32.totalorder %s106, 0
    %s109 = sadd.s32 %s108, 1
    %s110 = scalar_select %p107, %s108, %s109
    %p113 = pneg %p107
    %p114 = scmp.eq.s32.totalorder %s20, 1
    %p115 = por %p113, %p114
    %p116 = scmp.ne.s32.totalorder %s108, %s111
    %p117 = scmp.eq.s32.totalorder %s20, 0
    %p118 = por %p116, %p117
    %p119 = scmp.ne.s32.totalorder %s108, %s111
    %p120 = scmp.eq.s32.totalorder %s25, 1
    %p121 = por %p119, %p120
    %p122 = scmp.ne.s32.totalorder %s111, %s112
    %p123 = scmp.eq.s32.totalorder %s25, 0
    %p124 = por %p122, %p123
    %p125 = scmp.ne.s32.totalorder %s111, %s112
    %p126 = scmp.eq.s32.totalorder %s26, 1
    %p127 = por %p125, %p126
    %p129 = scmp.ne.s32.totalorder %s112, %s128
    %p130 = scmp.eq.s32.totalorder %s26, 0
    %p131 = por %p129, %p130
    %s133 = sadd.s32 %s132, 1
    %p136 = scmp.eq.s32.totalorder %s20, 1
    %p137 = scmp.ne.s32.totalorder %s132, %s134
    %p138 = scmp.eq.s32.totalorder %s20, 0
    %p139 = por %p137, %p138
    %p140 = scmp.ne.s32.totalorder %s132, %s134
    %p141 = scmp.eq.s32.totalorder %s25, 1
    %p142 = por %p140, %p141
    %p143 = scmp.ne.s32.totalorder %s134, %s135
    %p144 = scmp.eq.s32.totalorder %s25, 0
    %p145 = por %p143, %p144
    %p146 = scmp.ne.s32.totalorder %s134, %s135
    %p147 = scmp.eq.s32.totalorder %s26, 1
    %p148 = por %p146, %p147
    %p150 = scmp.ne.s32.totalorder %s135, %s149
    %p151 = scmp.eq.s32.totalorder %s26, 0
    %p152 = por %p150, %p151
    %s154 = sadd.s32 %s153, 1
    %p157 = scmp.eq.s32.totalorder %s20, 1
    %p158 = scmp.ne.s32.totalorder %s153, %s155
    %p159 = scmp.eq.s32.totalorder %s20, 0
    %p160 = por %p158, %p159
    %p161 = scmp.ne.s32.totalorder %s153, %s155
    %p162 = scmp.eq.s32.totalorder %s25, 1
    %p163 = por %p161, %p162
    %p164 = scmp.ne.s32.totalorder %s155, %s156
    %p165 = scmp.eq.s32.totalorder %s25, 0
    %p166 = por %p164, %p165
    %p167 = scmp.ne.s32.totalorder %s155, %s156
    %p168 = scmp.eq.s32.totalorder %s26, 1
    %p169 = por %p167, %p168
    %p171 = scmp.ne.s32.totalorder %s156, %s170
    %p172 = scmp.eq.s32.totalorder %s26, 0
    %p173 = por %p171, %p172
    %s175 = sadd.s32 %s174, 1
    %p178 = scmp.eq.s32.totalorder %s20, 1
    %p179 = scmp.ne.s32.totalorder %s174, %s176
    %p180 = scmp.eq.s32.totalorder %s20, 0
    %p181 = por %p179, %p180
    %p182 = scmp.ne.s32.totalorder %s174, %s176
    %p183 = scmp.eq.s32.totalorder %s25, 1
    %p184 = por %p182, %p183
    %p185 = scmp.ne.s32.totalorder %s176, %s177
    %p186 = scmp.eq.s32.totalorder %s25, 0
    %p187 = por %p185, %p186
    %p188 = scmp.ne.s32.totalorder %s176, %s177
    %p189 = scmp.eq.s32.totalorder %s26, 1
    %p190 = por %p188, %p189
    %p192 = scmp.ne.s32.totalorder %s177, %s191
    %p193 = scmp.eq.s32.totalorder %s26, 0
    %p194 = por %p192, %p193
    %s196 = sadd.s32 %s195, 1
    %p199 = scmp.eq.s32.totalorder %s20, 1
    %p200 = scmp.ne.s32.totalorder %s195, %s197
    %p201 = scmp.eq.s32.totalorder %s20, 0
    %p202 = por %p200, %p201
    %p203 = scmp.ne.s32.totalorder %s195, %s197
    %p204 = scmp.eq.s32.totalorder %s25, 1
    %p205 = por %p203, %p204
    %p206 = scmp.ne.s32.totalorder %s197, %s198
    %p207 = scmp.eq.s32.totalorder %s25, 0
    %p208 = por %p206, %p207
    %p209 = scmp.ne.s32.totalorder %s197, %s198
    %p210 = scmp.eq.s32.totalorder %s26, 1
    %p211 = por %p209, %p210
    %p213 = scmp.ne.s32.totalorder %s198, %s212
    %p214 = scmp.eq.s32.totalorder %s26, 0
    %p215 = por %p213, %p214
    %s217 = sadd.s32 %s216, 1
    %p220 = scmp.eq.s32.totalorder %s20, 1
    %p221 = scmp.ne.s32.totalorder %s216, %s218
    %p222 = scmp.eq.s32.totalorder %s20, 0
    %p223 = por %p221, %p222
    %p224 = scmp.ne.s32.totalorder %s216, %s218
    %p225 = scmp.eq.s32.totalorder %s25, 1
    %p226 = por %p224, %p225
    %p227 = scmp.ne.s32.totalorder %s218, %s219
    %p228 = scmp.eq.s32.totalorder %s25, 0
    %p229 = por %p227, %p228
    %p230 = scmp.ne.s32.totalorder %s218, %s219
    %p231 = scmp.eq.s32.totalorder %s26, 1
    %p232 = por %p230, %p231
    %p234 = scmp.ne.s32.totalorder %s219, %s233
    %p235 = scmp.eq.s32.totalorder %s26, 0
    %p236 = por %p234, %p235
    %s238 = sadd.s32 %s237, 1
    %p241 = scmp.eq.s32.totalorder %s20, 1
    %p242 = scmp.ne.s32.totalorder %s237, %s239
    %p243 = scmp.eq.s32.totalorder %s20, 0
    %p244 = por %p242, %p243
    %p245 = scmp.ne.s32.totalorder %s237, %s239
    %p246 = scmp.eq.s32.totalorder %s25, 1
    %p247 = por %p245, %p246
    %p248 = scmp.ne.s32.totalorder %s239, %s240
    %p249 = scmp.eq.s32.totalorder %s25, 0
    %p250 = por %p248, %p249
    %p251 = scmp.ne.s32.totalorder %s239, %s240
    %p252 = scmp.eq.s32.totalorder %s26, 1
    %p253 = por %p251, %p252
    %p255 = scmp.ne.s32.totalorder %s240, %s254
    %p256 = scmp.eq.s32.totalorder %s26, 0
    %p257 = por %p255, %p256
    %s259 = sadd.s32 %s258, 1
    %p262 = scmp.eq.s32.totalorder %s20, 1
    %p263 = scmp.ne.s32.totalorder %s258, %s260
    %p264 = scmp.eq.s32.totalorder %s20, 0
    %p265 = por %p263, %p264
    %p266 = scmp.ne.s32.totalorder %s258, %s260
    %p267 = scmp.eq.s32.totalorder %s25, 1
    %p268 = por %p266, %p267
    %p269 = scmp.ne.s32.totalorder %s260, %s261
    %p270 = scmp.eq.s32.totalorder %s25, 0
    %p271 = por %p269, %p270
    %p272 = scmp.ne.s32.totalorder %s260, %s261
    %p273 = scmp.eq.s32.totalorder %s26, 1
    %p274 = por %p272, %p273
    %p276 = scmp.ne.s32.totalorder %s261, %s275
    %p277 = scmp.eq.s32.totalorder %s26, 0
    %p278 = por %p276, %p277
    %s280 = sadd.s32 %s279, 1
    %p283 = scmp.eq.s32.totalorder %s20, 1
    %p284 = scmp.ne.s32.totalorder %s279, %s281
    %p285 = scmp.eq.s32.totalorder %s20, 0
    %p286 = por %p284, %p285
    %p287 = scmp.ne.s32.totalorder %s279, %s281
    %p288 = scmp.eq.s32.totalorder %s25, 1
    %p289 = por %p287, %p288
    %p290 = scmp.ne.s32.totalorder %s281, %s282
    %p291 = scmp.eq.s32.totalorder %s25, 0
    %p292 = por %p290, %p291
    %p293 = scmp.ne.s32.totalorder %s281, %s282
    %p294 = scmp.eq.s32.totalorder %s26, 1
    %p295 = por %p293, %p294
    %p297 = scmp.ne.s32.totalorder %s282, %s296
    %p298 = scmp.eq.s32.totalorder %s26, 0
    %p299 = por %p297, %p298
    %s301 = sadd.s32 %s300, 1
    %p304 = scmp.eq.s32.totalorder %s20, 1
    %p305 = scmp.ne.s32.totalorder %s300, %s302
    %p306 = scmp.eq.s32.totalorder %s20, 0
    %p307 = por %p305, %p306
    %p308 = scmp.ne.s32.totalorder %s300, %s302
    %p309 = scmp.eq.s32.totalorder %s25, 1
    %p310 = por %p308, %p309
    %p311 = scmp.ne.s32.totalorder %s302, %s303
    %p312 = scmp.eq.s32.totalorder %s25, 0
    %p313 = por %p311, %p312
    %p314 = scmp.ne.s32.totalorder %s302, %s303
    %p315 = scmp.eq.s32.totalorder %s26, 1
    %p316 = por %p314, %p315
    %p318 = scmp.ne.s32.totalorder %s303, %s317
    %p319 = scmp.eq.s32.totalorder %s26, 0
    %p320 = por %p318, %p319
    %s322 = sadd.s32 %s321, 1
    %p325 = scmp.eq.s32.totalorder %s20, 1
    %p326 = scmp.ne.s32.totalorder %s321, %s323
    %p327 = scmp.eq.s32.totalorder %s20, 0
    %p328 = por %p326, %p327
    %p329 = scmp.ne.s32.totalorder %s321, %s323
    %p330 = scmp.eq.s32.totalorder %s25, 1
    %p331 = por %p329, %p330
    %p332 = scmp.ne.s32.totalorder %s323, %s324
    %p333 = scmp.eq.s32.totalorder %s25, 0
    %p334 = por %p332, %p333
    %p335 = scmp.ne.s32.totalorder %s323, %s324
    %p336 = scmp.eq.s32.totalorder %s26, 1
    %p337 = por %p335, %p336
    %p339 = scmp.ne.s32.totalorder %s324, %s338
    %p340 = scmp.eq.s32.totalorder %s26, 0
    %p341 = por %p339, %p340
    %s342 = ssub.s32 %s20, %s27
    %p343 = scmp.eq.s32.totalorder %s342, 0
    %s345 = sadd.s32 %s344, 1
    %s346 = scalar_select %p343, %s344, %s345
    %p349 = pneg %p343
    %p350 = scmp.eq.s32.totalorder %s20, 1
    %p351 = por %p349, %p350
    %p352 = scmp.ne.s32.totalorder %s344, %s347
    %p353 = scmp.eq.s32.totalorder %s20, 0
    %p354 = por %p352, %p353
    %p355 = scmp.ne.s32.totalorder %s344, %s347
    %p356 = scmp.eq.s32.totalorder %s25, 1
    %p357 = por %p355, %p356
    %p358 = scmp.ne.s32.totalorder %s347, %s348
    %p359 = scmp.eq.s32.totalorder %s25, 0
    %p360 = por %p358, %p359
    %p361 = scmp.ne.s32.totalorder %s347, %s348
    %p362 = scmp.eq.s32.totalorder %s26, 1
    %p363 = por %p361, %p362
    %p365 = scmp.ne.s32.totalorder %s348, %s364
    %p366 = scmp.eq.s32.totalorder %s26, 0
    %p367 = por %p365, %p366
    %p368 = scmp.le.s32.totalorder 1, %s20
    %p369 = scmp.lt.s32.totalorder %s20, 3
    %p370 = pnand %p368, %p369
    %p371 = pneg %p370
    // Predicated region
    $region9: #{neuron_unet_forward.1} parent=5 // pred_check
      _
    $region10: #{neuron_unet_forward.1} parent=5 // pred_check_branch
      %373 = sbr.rel (%p370) target = $region12
    $region11: #{neuron_unet_forward.1} parent=5 // pred_region
      %s374 = ssub.s32 %s20, 1
      // Predicated region
      $region13: #{neuron_unet_forward.1} parent=11 // pred_check
        %p375 = pneg %p145
      $region14: #{neuron_unet_forward.1} parent=11 // pred_check_branch
        %377 = sbr.rel (%p375) target = $region16
      $region15: #{neuron_unet_forward.1} parent=11 // pred_region
        _
      $region16: #{neuron_unet_forward.1} parent=11 // pred_fallthru
        _
      // Predicated region
      $region17: #{neuron_unet_forward.1} parent=11 // pred_check
        %p378 = pneg %p166
      $region18: #{neuron_unet_forward.1} parent=11 // pred_check_branch
        %380 = sbr.rel (%p378) target = $region20
      $region19: #{neuron_unet_forward.1} parent=11 // pred_region
        _
      $region20: #{neuron_unet_forward.1} parent=11 // pred_fallthru
        _
      // Predicated region
      $region21: #{neuron_unet_forward.1} parent=11 // pred_check
        %p381 = pneg %p187
      $region22: #{neuron_unet_forward.1} parent=11 // pred_check_branch
        %383 = sbr.rel (%p381) target = $region24
      $region23: #{neuron_unet_forward.1} parent=11 // pred_region
        _
      $region24: #{neuron_unet_forward.1} parent=11 // pred_fallthru
        _
      // Predicated region
      $region25: #{neuron_unet_forward.1} parent=11 // pred_check
        %p384 = pneg %p208
      $region26: #{neuron_unet_forward.1} parent=11 // pred_check_branch
        %386 = sbr.rel (%p384) target = $region28
      $region27: #{neuron_unet_forward.1} parent=11 // pred_region
        _
      $region28: #{neuron_unet_forward.1} parent=11 // pred_fallthru
        _
      // Predicated region
      $region29: #{neuron_unet_forward.1} parent=11 // pred_check
        %p387 = pneg %p229
      $region30: #{neuron_unet_forward.1} parent=11 // pred_check_branch
        %389 = sbr.rel (%p387) target = $region32
      $region31: #{neuron_unet_forward.1} parent=11 // pred_region
        _
      $region32: #{neuron_unet_forward.1} parent=11 // pred_fallthru
        _
      // Predicated region
      $region33: #{neuron_unet_forward.1} parent=11 // pred_check
        %p390 = pneg %p250
      $region34: #{neuron_unet_forward.1} parent=11 // pred_check_branch
        %392 = sbr.rel (%p390) target = $region36
      $region35: #{neuron_unet_forward.1} parent=11 // pred_region
        _
      $region36: #{neuron_unet_forward.1} parent=11 // pred_fallthru
        _
      // Predicated region
      $region37: #{neuron_unet_forward.1} parent=11 // pred_check
        %p393 = pneg %p271
      $region38: #{neuron_unet_forward.1} parent=11 // pred_check_branch
        %395 = sbr.rel (%p393) target = $region40
      $region39: #{neuron_unet_forward.1} parent=11 // pred_region
        _
      $region40: #{neuron_unet_forward.1} parent=11 // pred_fallthru
        _
      // Predicated region
      $region41: #{neuron_unet_forward.1} parent=11 // pred_check
        %p396 = pneg %p292
      $region42: #{neuron_unet_forward.1} parent=11 // pred_check_branch
        %398 = sbr.rel (%p396) target = $region44
      $region43: #{neuron_unet_forward.1} parent=11 // pred_region
        _
      $region44: #{neuron_unet_forward.1} parent=11 // pred_fallthru
        _
      // Predicated region
      $region45: #{neuron_unet_forward.1} parent=11 // pred_check
        %p399 = pneg %p313
      $region46: #{neuron_unet_forward.1} parent=11 // pred_check_branch
        %401 = sbr.rel (%p399) target = $region48
      $region47: #{neuron_unet_forward.1} parent=11 // pred_region
        _
      $region48: #{neuron_unet_forward.1} parent=11 // pred_fallthru
        _
      // Predicated region
      $region49: #{neuron_unet_forward.1} parent=11 // pred_check
        %p402 = pneg %p334
      $region50: #{neuron_unet_forward.1} parent=11 // pred_check_branch
        %404 = sbr.rel (%p402) target = $region52
      $region51: #{neuron_unet_forward.1} parent=11 // pred_region
        _
      $region52: #{neuron_unet_forward.1} parent=11 // pred_fallthru
        _
    $region12: #{neuron_unet_forward.1} parent=5 // pred_fallthru
      _
    %p405 = scmp.lt.s32.totalorder %s20, 2
    // Predicated region
    $region53: #{neuron_unet_forward.1} parent=5 // pred_check
      %p406 = pneg %p405
    $region54: #{neuron_unet_forward.1} parent=5 // pred_check_branch
      %408 = sbr.rel (%p406) target = $region56
    $region55: #{neuron_unet_forward.1} parent=5 // pred_region
      // Predicated region
      $region57: #{neuron_unet_forward.1} parent=55 // pred_check
        %p409 = pneg %p40
      $region58: #{neuron_unet_forward.1} parent=55 // pred_check_branch
        %411 = sbr.rel (%p409) target = $region60
      $region59: #{neuron_unet_forward.1} parent=55 // pred_region
        %p412 = scmp.lt.s32.totalorder %s20, 1
        %s413 = scalar_select %p412, %s20, 1
        %s414 = smul.addr %s413, 8
        %s415 = smul.addr %s414, 8
        %s416 = scalar_lea.vmem %s0, %s415
      $region60: #{neuron_unet_forward.1} parent=55 // pred_fallthru
        _
      // Predicated region
      $region61: #{neuron_unet_forward.1} parent=55 // pred_check
        %p417 = pneg %p66
      $region62: #{neuron_unet_forward.1} parent=55 // pred_check_branch
        %419 = sbr.rel (%p417) target = $region64
      $region63: #{neuron_unet_forward.1} parent=55 // pred_region
        %p420 = scmp.lt.s32.totalorder %s20, 1
        %s421 = scalar_select %p420, %s20, 1
        %s422 = smul.addr %s421, 4
        %s423 = smul.addr %s422, 8
        %s424 = scalar_lea.vmem %s1, %s423
      $region64: #{neuron_unet_forward.1} parent=55 // pred_fallthru
        _
      // Predicated region
      $region65: #{neuron_unet_forward.1} parent=55 // pred_check
        %p425 = pneg %p92
      $region66: #{neuron_unet_forward.1} parent=55 // pred_check_branch
        %427 = sbr.rel (%p425) target = $region68
      $region67: #{neuron_unet_forward.1} parent=55 // pred_region
        %p428 = scmp.lt.s32.totalorder %s20, 1
        %s429 = scalar_select %p428, %s20, 1
        %s430 = smul.addr %s429, 8
        %s431 = scalar_lea.vmem %s2, %s430
      $region68: #{neuron_unet_forward.1} parent=55 // pred_fallthru
        _
      // Predicated region
      $region69: #{neuron_unet_forward.1} parent=55 // pred_check
        %p432 = pneg %p118
      $region70: #{neuron_unet_forward.1} parent=55 // pred_check_branch
        %434 = sbr.rel (%p432) target = $region72
      $region71: #{neuron_unet_forward.1} parent=55 // pred_region
        %p435 = scmp.lt.s32.totalorder %s20, 1
        %s436 = scalar_select %p435, %s20, 1
        %s437 = smul.addr %s436, 4
        %s438 = smul.addr %s437, 8
        %s439 = scalar_lea.vmem %s3, %s438
      $region72: #{neuron_unet_forward.1} parent=55 // pred_fallthru
        _
    $region56: #{neuron_unet_forward.1} parent=5 // pred_fallthru
      _
    %p440 = scmp.le.s32.totalorder 1, %s20
    %p441 = scmp.lt.s32.totalorder %s20, 3
    %p442 = pnand %p440, %p441
    %p443 = pneg %p442
    // Predicated region
    $region73: #{neuron_unet_forward.1} parent=5 // pred_check
      _
    $region74: #{neuron_unet_forward.1} parent=5 // pred_check_branch
      %445 = sbr.rel (%p442) target = $region76
    $region75: #{neuron_unet_forward.1} parent=5 // pred_region
      %s446 = ssub.s32 %s20, 1
      %p447 = scmp.lt.s32.totalorder %s25, 1
      %s448 = scalar_select %p447, %s25, 1
      %s449 = smul.addr %s448, 8
      %s450 = smul.addr %s449, 8
      %s451 = scalar_lea.vmem %s0, %s450
      %p452 = pneg %p46
      %p453 = pneg %p43
      %p454 = scmp.lt.s32.totalorder %s25, 1
      %s455 = scalar_select %p454, %s25, 1
      %s456 = smul.addr %s455, 4
      %s457 = smul.addr %s456, 8
      %s458 = scalar_lea.vmem %s1, %s457
      %p459 = pneg %p72
      %p460 = pneg %p69
      %p461 = scmp.lt.s32.totalorder %s25, 1
      %s462 = scalar_select %p461, %s25, 1
      %s463 = smul.addr %s462, 8
      %s464 = scalar_lea.vmem %s2, %s463
      %p465 = pneg %p98
      %p466 = pneg %p95
      %p467 = scmp.lt.s32.totalorder %s25, 1
      %s468 = scalar_select %p467, %s25, 1
      %s469 = smul.addr %s468, 4
      %s470 = smul.addr %s469, 8
      %s471 = scalar_lea.vmem %s3, %s470
      %p472 = pneg %p124
      %p473 = pneg %p121
      %p474 = pneg %p145
      %p475 = pneg %p142
      %p476 = pneg %p166
      %p477 = pneg %p163
      %p478 = pneg %p187
      %p479 = pneg %p184
      %p480 = pneg %p208
      %p481 = pneg %p205
      %p482 = pneg %p229
      %p483 = pneg %p226
      %p484 = pneg %p250
      %p485 = pneg %p247
      %p486 = pneg %p271
      %p487 = pneg %p268
      %p488 = pneg %p292
      %p489 = pneg %p289
      %p490 = pneg %p313
      %p491 = pneg %p310
      %p492 = pneg %p334
      %p493 = pneg %p331
      %p494 = pneg %p360
      %p495 = pneg %p357
      %p496 = scmp.lt.s32.totalorder %s25, 1
      %s497 = scalar_select %p496, %s25, 1
      %s498 = smul.addr %s497, 8
      %s499 = smul.addr %s498, 8
      %s500 = scalar_lea.vmem %s14, %s499
      %p501 = scmp.lt.s32.totalorder %s25, 1
      %s502 = scalar_select %p501, %s25, 1
      %s503 = smul.addr %s502, 8
      %s504 = smul.addr %s503, 8
      %s505 = scalar_lea.vmem %s0, %s504
      %p506 = scmp.lt.s32.totalorder %s25, 1
      %s507 = scalar_select %p506, %s25, 1
      %s508 = smul.addr %s507, 4
      %s509 = smul.addr %s508, 8
      %s510 = scalar_lea.vmem %s1, %s509
      %p511 = scmp.lt.s32.totalorder %s25, 1
      %s512 = scalar_select %p511, %s25, 1
      %s513 = smul.addr %s512, 8
      %s514 = scalar_lea.vmem %s2, %s513
      %p515 = scmp.lt.s32.totalorder %s25, 1
      %s516 = scalar_select %p515, %s25, 1
      %s517 = smul.addr %s516, 4
      %s518 = smul.addr %s517, 8
      %s519 = scalar_lea.vmem %s3, %s518
      %p520 = scmp.lt.s32.totalorder %s25, 1
      %s521 = scalar_select %p520, %s25, 1
      %s522 = smul.addr %s521, 8
      %s523 = smul.addr %s522, 8
      %s524 = scalar_lea.vmem %s14, %s523
      %v526 = vld [vmem:[%s505] sm:$0xff]
      %v527 = vld [vmem:[%s505 + $0x8] sm:$0xff]
      %v528 = vld [vmem:[%s505 + $0x10] sm:$0xff]
      %v529 = vld [vmem:[%s505 + $0x18] sm:$0xff]
      %v530 = vld [vmem:[%s505 + $0x20] sm:$0xff]
      %v531 = vld [vmem:[%s505 + $0x28] sm:$0xff]
      %v532 = vld [vmem:[%s505 + $0x30] sm:$0xff]
      %v533 = vld [vmem:[%s505 + $0x38] sm:$0xff]
      %v534 = vld [vmem:[%s510] sm:$0xff]
      %v535 = vld [vmem:[%s510 + $0x8] sm:$0xff]
      %v536 = vld [vmem:[%s510 + $0x10] sm:$0xff]
      %v537 = vld [vmem:[%s510 + $0x18] sm:$0xff]
      %v538 = vld [vmem:[%s514] sm:$0xff]
      %v539 = vpack.c.bf16 %v538, %v538
      %v540 = vld [vmem:[%s519] sm:$0xff]
      %v541 = vld [vmem:[%s519 + $0x8] sm:$0xff]
      %v542 = vld [vmem:[%s519 + $0x10] sm:$0xff]
      %v543 = vld [vmem:[%s519 + $0x18] sm:$0xff]
      %v544 = vpack.c.bf16 %v541, %v540
      %v545 = vpack.c.bf16 %v543, %v542
      %546 = vrot.lane.b32.xlu0 %v526, 17
      %v547 = vpop.permute.xlu0 %546
      %548 = vrot.lane.b32.xlu0 %v528, 17
      %v549 = vpop.permute.xlu0 %548
      %550 = vrot.lane.b32.xlu0 %v530, 17
      %v551 = vpop.permute.xlu0 %550
      %552 = vrot.lane.b32.xlu0 %v532, 17
      %v553 = vpop.permute.xlu0 %552
      %554 = vrot.lane.b32.xlu0 %v527, 17
      %v555 = vpop.permute.xlu0 %554
      %556 = vrot.lane.b32.xlu0 %v529, 17
      %v557 = vpop.permute.xlu0 %556
      %558 = vrot.lane.b32.xlu0 %v531, 17
      %v559 = vpop.permute.xlu0 %558
      %560 = vrot.lane.b32.xlu0 %v533, 17
      %v561 = vpop.permute.xlu0 %560
      %v562 = vlaneseq
      %v563 = vand.u32 %v562, 127
      %vm564 = vcmp.lt.s32.totalorder %v563, 17
      %v565 = vsel %vm564, %v547, %v555
      %v566 = vsel %vm564, %v549, %v557
      %v567 = vsel %vm564, %v551, %v559
      %v568 = vsel %vm564, %v553, %v561
      %v569 = vsel %vm564, %v555, %v547
      %v570 = vsel %vm564, %v557, %v549
      %v571 = vsel %vm564, %v559, %v551
      %v572 = vsel %vm564, %v561, %v553
      %v573 = vld [vmem:[%s6] sm:$0xff]
      %v574 = vld [vmem:[%s6 + $0x8] sm:$0xff]
      %v575 = vld [vmem:[%s6 + $0x10] sm:$0xff]
      %v576 = vld [vmem:[%s6 + $0x18] sm:$0xff]
      %v577 = vld [vmem:[%s6 + $0x20] sm:$0xff]
      %v578 = vld [vmem:[%s6 + $0x28] sm:$0xff]
      %v579 = vld [vmem:[%s6 + $0x30] sm:$0xff]
      %v580 = vld [vmem:[%s6 + $0x38] sm:$0xff]
      %v581 = vmul.f32 %v569, %v573
      %v582 = vmul.f32 %v565, %v574
      %v583 = vmul.f32 %v570, %v575
      %v584 = vmul.f32 %v566, %v576
      %v585 = vmul.f32 %v571, %v577
      %v586 = vmul.f32 %v567, %v578
      %v587 = vmul.f32 %v572, %v579
      %v588 = vmul.f32 %v568, %v580
      %v589 = vpack.c.bf16 %v583, %v581
      %v590 = vpack.c.bf16 %v584, %v582
      %v591 = vpack.c.bf16 %v587, %v585
      %v592 = vpack.c.bf16 %v588, %v586
      %593 = vst [vmem:[#allocation2] sm:$0xff] %v589
      %594 = vst [vmem:[#allocation2 + $0x8] sm:$0xff] %v590
      %595 = vst [vmem:[#allocation2 + $0x10] sm:$0xff] %v591
      %596 = vst [vmem:[#allocation2 + $0x18] sm:$0xff] %v592
      %597 = vrot.lane.b32.xlu0 %v526, 16
      %v598 = vpop.permute.xlu0 %597
      %599 = vrot.lane.b32.xlu0 %v528, 16
      %v600 = vpop.permute.xlu0 %599
      %601 = vrot.lane.b32.xlu0 %v530, 16
      %v602 = vpop.permute.xlu0 %601
      %603 = vrot.lane.b32.xlu0 %v532, 16
      %v604 = vpop.permute.xlu0 %603
      %605 = vrot.lane.b32.xlu0 %v527, 16
      %v606 = vpop.permute.xlu0 %605
      %607 = vrot.lane.b32.xlu0 %v529, 16
      %v608 = vpop.permute.xlu0 %607
      %609 = vrot.lane.b32.xlu0 %v531, 16
      %v610 = vpop.permute.xlu0 %609
      %611 = vrot.lane.b32.xlu0 %v533, 16
      %v612 = vpop.permute.xlu0 %611
      %vm613 = vcmp.lt.s32.totalorder %v563, 16
      %v614 = vsel %vm613, %v598, %v606
      %v615 = vsel %vm613, %v600, %v608
      %v616 = vsel %vm613, %v602, %v610
      %v617 = vsel %vm613, %v604, %v612
      %v618 = vsel %vm613, %v606, %v598
      %v619 = vsel %vm613, %v608, %v600
      %v620 = vsel %vm613, %v610, %v602
      %v621 = vsel %vm613, %v612, %v604
      %s622 = scalar_lea.vmem %s6, 64
      %v623 = vld [vmem:[%s622] sm:$0xff]
      %v624 = vld [vmem:[%s622 + $0x8] sm:$0xff]
      %v625 = vld [vmem:[%s622 + $0x10] sm:$0xff]
      %v626 = vld [vmem:[%s622 + $0x18] sm:$0xff]
      %v627 = vld [vmem:[%s622 + $0x20] sm:$0xff]
      %v628 = vld [vmem:[%s622 + $0x28] sm:$0xff]
      %v629 = vld [vmem:[%s622 + $0x30] sm:$0xff]
      %v630 = vld [vmem:[%s622 + $0x38] sm:$0xff]
      %v631 = vmul.f32 %v618, %v623
      %v632 = vmul.f32 %v614, %v624
      %v633 = vmul.f32 %v619, %v625
      %v634 = vmul.f32 %v615, %v626
      %v635 = vmul.f32 %v620, %v627
      %v636 = vmul.f32 %v616, %v628
      %v637 = vmul.f32 %v621, %v629
      %v638 = vmul.f32 %v617, %v630
      %v639 = vpack.c.bf16 %v633, %v631
      %v640 = vpack.c.bf16 %v634, %v632
      %v641 = vpack.c.bf16 %v637, %v635
      %v642 = vpack.c.bf16 %v638, %v636
      %643 = vst [vmem:[#allocation2 + $0x20] sm:$0xff] %v639
      %644 = vst [vmem:[#allocation2 + $0x28] sm:$0xff] %v640
      %645 = vst [vmem:[#allocation2 + $0x30] sm:$0xff] %v641
      %646 = vst [vmem:[#allocation2 + $0x38] sm:$0xff] %v642
      %647 = vrot.lane.b32.xlu0 %v526, 15
      %v648 = vpop.permute.xlu0 %647
      %649 = vrot.lane.b32.xlu0 %v528, 15
      %v650 = vpop.permute.xlu0 %649
      %651 = vrot.lane.b32.xlu0 %v530, 15
      %v652 = vpop.permute.xlu0 %651
      %653 = vrot.lane.b32.xlu0 %v532, 15
      %v654 = vpop.permute.xlu0 %653
      %655 = vrot.lane.b32.xlu0 %v527, 15
      %v656 = vpop.permute.xlu0 %655
      %657 = vrot.lane.b32.xlu0 %v529, 15
      %v658 = vpop.permute.xlu0 %657
      %659 = vrot.lane.b32.xlu0 %v531, 15
      %v660 = vpop.permute.xlu0 %659
      %661 = vrot.lane.b32.xlu0 %v533, 15
      %v662 = vpop.permute.xlu0 %661
      %vm663 = vcmp.lt.s32.totalorder %v563, 15
      %v664 = vsel %vm663, %v648, %v656
      %v665 = vsel %vm663, %v650, %v658
      %v666 = vsel %vm663, %v652, %v660
      %v667 = vsel %vm663, %v654, %v662
      %v668 = vsel %vm663, %v656, %v648
      %v669 = vsel %vm663, %v658, %v650
      %v670 = vsel %vm663, %v660, %v652
      %v671 = vsel %vm663, %v662, %v654
      %s672 = scalar_lea.vmem %s6, 128
      %v673 = vld [vmem:[%s672] sm:$0xff]
      %v674 = vld [vmem:[%s672 + $0x8] sm:$0xff]
      %v675 = vld [vmem:[%s672 + $0x10] sm:$0xff]
      %v676 = vld [vmem:[%s672 + $0x18] sm:$0xff]
      %v677 = vld [vmem:[%s672 + $0x20] sm:$0xff]
      %v678 = vld [vmem:[%s672 + $0x28] sm:$0xff]
      %v679 = vld [vmem:[%s672 + $0x30] sm:$0xff]
      %v680 = vld [vmem:[%s672 + $0x38] sm:$0xff]
      %v681 = vmul.f32 %v668, %v673
      %v682 = vmul.f32 %v664, %v674
      %v683 = vmul.f32 %v669, %v675
      %v684 = vmul.f32 %v665, %v676
      %v685 = vmul.f32 %v670, %v677
      %v686 = vmul.f32 %v666, %v678
      %v687 = vmul.f32 %v671, %v679
      %v688 = vmul.f32 %v667, %v680
      %v689 = vpack.c.bf16 %v683, %v681
      %v690 = vpack.c.bf16 %v684, %v682
      %v691 = vpack.c.bf16 %v687, %v685
      %v692 = vpack.c.bf16 %v688, %v686
      %693 = vst [vmem:[#allocation2 + $0x40] sm:$0xff] %v689
      %694 = vst [vmem:[#allocation2 + $0x48] sm:$0xff] %v690
      %695 = vst [vmem:[#allocation2 + $0x50] sm:$0xff] %v691
      %696 = vst [vmem:[#allocation2 + $0x58] sm:$0xff] %v692
      %697 = vrot.lane.b32.xlu0 %v526, 1
      %v698 = vpop.permute.xlu0 %697
      %699 = vrot.lane.b32.xlu0 %v528, 1
      %v700 = vpop.permute.xlu0 %699
      %701 = vrot.lane.b32.xlu0 %v530, 1
      %v702 = vpop.permute.xlu0 %701
      %703 = vrot.lane.b32.xlu0 %v532, 1
      %v704 = vpop.permute.xlu0 %703
      %705 = vrot.lane.b32.xlu0 %v527, 1
      %v706 = vpop.permute.xlu0 %705
      %707 = vrot.lane.b32.xlu0 %v529, 1
      %v708 = vpop.permute.xlu0 %707
      %709 = vrot.lane.b32.xlu0 %v531, 1
      %v710 = vpop.permute.xlu0 %709
      %711 = vrot.lane.b32.xlu0 %v533, 1
      %v712 = vpop.permute.xlu0 %711
      %vm713 = vcmp.lt.s32.totalorder %v563, 1
      %v714 = vsel %vm713, %v698, %v706
      %v715 = vsel %vm713, %v700, %v708
      %v716 = vsel %vm713, %v702, %v710
      %v717 = vsel %vm713, %v704, %v712
      %v718 = vsel %vm713, %v706, %v698
      %v719 = vsel %vm713, %v708, %v700
      %v720 = vsel %vm713, %v710, %v702
      %v721 = vsel %vm713, %v712, %v704
      %s722 = scalar_lea.vmem %s6, 192
      %v723 = vld [vmem:[%s722] sm:$0xff]
      %v724 = vld [vmem:[%s722 + $0x8] sm:$0xff]
      %v725 = vld [vmem:[%s722 + $0x10] sm:$0xff]
      %v726 = vld [vmem:[%s722 + $0x18] sm:$0xff]
      %v727 = vld [vmem:[%s722 + $0x20] sm:$0xff]
      %v728 = vld [vmem:[%s722 + $0x28] sm:$0xff]
      %v729 = vld [vmem:[%s722 + $0x30] sm:$0xff]
      %v730 = vld [vmem:[%s722 + $0x38] sm:$0xff]
      %v731 = vmul.f32 %v718, %v723
      %v732 = vmul.f32 %v714, %v724
      %v733 = vmul.f32 %v719, %v725
      %v734 = vmul.f32 %v715, %v726
      %v735 = vmul.f32 %v720, %v727
      %v736 = vmul.f32 %v716, %v728
      %v737 = vmul.f32 %v721, %v729
      %v738 = vmul.f32 %v717, %v730
      %v739 = vpack.c.bf16 %v733, %v731
      %v740 = vpack.c.bf16 %v734, %v732
      %v741 = vpack.c.bf16 %v737, %v735
      %v742 = vpack.c.bf16 %v738, %v736
      %743 = vst [vmem:[#allocation2 + $0x60] sm:$0xff] %v739
      %744 = vst [vmem:[#allocation2 + $0x68] sm:$0xff] %v740
      %745 = vst [vmem:[#allocation2 + $0x70] sm:$0xff] %v741
      %746 = vst [vmem:[#allocation2 + $0x78] sm:$0xff] %v742
      %v747 = vpack.c.bf16 %v528, %v526
      %v748 = vpack.c.bf16 %v529, %v527
      %v749 = vpack.c.bf16 %v532, %v530
      %v750 = vpack.c.bf16 %v533, %v531
      %751 = vst [vmem:[#allocation2 + $0x80] sm:$0xff] %v747
      %752 = vst [vmem:[#allocation2 + $0x88] sm:$0xff] %v748
      %753 = vst [vmem:[#allocation2 + $0x90] sm:$0xff] %v749
      %754 = vst [vmem:[#allocation2 + $0x98] sm:$0xff] %v750
      %755 = vrot.lane.b32.xlu0 %v526, 127
      %v756 = vpop.permute.xlu0 %755
      %757 = vrot.lane.b32.xlu0 %v528, 127
      %v758 = vpop.permute.xlu0 %757
      %759 = vrot.lane.b32.xlu0 %v530, 127
      %v760 = vpop.permute.xlu0 %759
      %761 = vrot.lane.b32.xlu0 %v532, 127
      %v762 = vpop.permute.xlu0 %761
      %763 = vrot.lane.b32.xlu0 %v527, 127
      %v764 = vpop.permute.xlu0 %763
      %765 = vrot.lane.b32.xlu0 %v529, 127
      %v766 = vpop.permute.xlu0 %765
      %767 = vrot.lane.b32.xlu0 %v531, 127
      %v768 = vpop.permute.xlu0 %767
      %769 = vrot.lane.b32.xlu0 %v533, 127
      %v770 = vpop.permute.xlu0 %769
      %vm771 = vcmp.lt.s32.totalorder %v563, 127
      %v772 = vsel %vm771, %v756, %v764
      %v773 = vsel %vm771, %v758, %v766
      %v774 = vsel %vm771, %v760, %v768
      %v775 = vsel %vm771, %v762, %v770
      %v776 = vsel %vm771, %v764, %v756
      %v777 = vsel %vm771, %v766, %v758
      %v778 = vsel %vm771, %v768, %v760
      %v779 = vsel %vm771, %v770, %v762
      %s780 = scalar_lea.vmem %s6, 320
      %v781 = vld [vmem:[%s780] sm:$0xff]
      %v782 = vld [vmem:[%s780 + $0x8] sm:$0xff]
      %v783 = vld [vmem:[%s780 + $0x10] sm:$0xff]
      %v784 = vld [vmem:[%s780 + $0x18] sm:$0xff]
      %v785 = vld [vmem:[%s780 + $0x20] sm:$0xff]
      %v786 = vld [vmem:[%s780 + $0x28] sm:$0xff]
      %v787 = vld [vmem:[%s780 + $0x30] sm:$0xff]
      %v788 = vld [vmem:[%s780 + $0x38] sm:$0xff]
      %v789 = vmul.f32 %v772, %v781
      %v790 = vmul.f32 %v776, %v782
      %v791 = vmul.f32 %v773, %v783
      %v792 = vmul.f32 %v777, %v784
      %v793 = vmul.f32 %v774, %v785
      %v794 = vmul.f32 %v778, %v786
      %v795 = vmul.f32 %v775, %v787
      %v796 = vmul.f32 %v779, %v788
      %v797 = vpack.c.bf16 %v791, %v789
      %v798 = vpack.c.bf16 %v792, %v790
      %v799 = vpack.c.bf16 %v795, %v793
      %v800 = vpack.c.bf16 %v796, %v794
      %801 = vst [vmem:[#allocation2 + $0xa0] sm:$0xff] %v797
      %802 = vst [vmem:[#allocation2 + $0xa8] sm:$0xff] %v798
      %803 = vst [vmem:[#allocation2 + $0xb0] sm:$0xff] %v799
      %804 = vst [vmem:[#allocation2 + $0xb8] sm:$0xff] %v800
      %805 = vrot.lane.b32.xlu0 %v526, 113
      %v806 = vpop.permute.xlu0 %805
      %807 = vrot.lane.b32.xlu0 %v528, 113
      %v808 = vpop.permute.xlu0 %807
      %809 = vrot.lane.b32.xlu0 %v530, 113
      %v810 = vpop.permute.xlu0 %809
      %811 = vrot.lane.b32.xlu0 %v532, 113
      %v812 = vpop.permute.xlu0 %811
      %813 = vrot.lane.b32.xlu0 %v527, 113
      %v814 = vpop.permute.xlu0 %813
      %815 = vrot.lane.b32.xlu0 %v529, 113
      %v816 = vpop.permute.xlu0 %815
      %817 = vrot.lane.b32.xlu0 %v531, 113
      %v818 = vpop.permute.xlu0 %817
      %819 = vrot.lane.b32.xlu0 %v533, 113
      %v820 = vpop.permute.xlu0 %819
      %vm821 = vcmp.lt.s32.totalorder %v563, 113
      %v822 = vsel %vm821, %v806, %v814
      %v823 = vsel %vm821, %v808, %v816
      %v824 = vsel %vm821, %v810, %v818
      %v825 = vsel %vm821, %v812, %v820
      %v826 = vsel %vm821, %v814, %v806
      %v827 = vsel %vm821, %v816, %v808
      %v828 = vsel %vm821, %v818, %v810
      %v829 = vsel %vm821, %v820, %v812
      %s830 = scalar_lea.vmem %s6, 384
      %v831 = vld [vmem:[%s830] sm:$0xff]
      %v832 = vld [vmem:[%s830 + $0x8] sm:$0xff]
      %v833 = vld [vmem:[%s830 + $0x10] sm:$0xff]
      %v834 = vld [vmem:[%s830 + $0x18] sm:$0xff]
      %v835 = vld [vmem:[%s830 + $0x20] sm:$0xff]
      %v836 = vld [vmem:[%s830 + $0x28] sm:$0xff]
      %v837 = vld [vmem:[%s830 + $0x30] sm:$0xff]
      %v838 = vld [vmem:[%s830 + $0x38] sm:$0xff]
      %v839 = vmul.f32 %v822, %v831
      %v840 = vmul.f32 %v826, %v832
      %v841 = vmul.f32 %v823, %v833
      %v842 = vmul.f32 %v827, %v834
      %v843 = vmul.f32 %v824, %v835
      %v844 = vmul.f32 %v828, %v836
      %v845 = vmul.f32 %v825, %v837
      %v846 = vmul.f32 %v829, %v838
      %v847 = vpack.c.bf16 %v841, %v839
      %v848 = vpack.c.bf16 %v842, %v840
      %v849 = vpack.c.bf16 %v845, %v843
      %v850 = vpack.c.bf16 %v846, %v844
      %851 = vst [vmem:[#allocation2 + $0xc0] sm:$0xff] %v847
      %852 = vst [vmem:[#allocation2 + $0xc8] sm:$0xff] %v848
      %853 = vst [vmem:[#allocation2 + $0xd0] sm:$0xff] %v849
      %854 = vst [vmem:[#allocation2 + $0xd8] sm:$0xff] %v850
      %855 = vrot.lane.b32.xlu0 %v526, 112
      %v856 = vpop.permute.xlu0 %855
      %857 = vrot.lane.b32.xlu0 %v528, 112
      %v858 = vpop.permute.xlu0 %857
      %859 = vrot.lane.b32.xlu0 %v530, 112
      %v860 = vpop.permute.xlu0 %859
      %861 = vrot.lane.b32.xlu0 %v532, 112
      %v862 = vpop.permute.xlu0 %861
      %863 = vrot.lane.b32.xlu0 %v527, 112
      %v864 = vpop.permute.xlu0 %863
      %865 = vrot.lane.b32.xlu0 %v529, 112
      %v866 = vpop.permute.xlu0 %865
      %867 = vrot.lane.b32.xlu0 %v531, 112
      %v868 = vpop.permute.xlu0 %867
      %869 = vrot.lane.b32.xlu0 %v533, 112
      %v870 = vpop.permute.xlu0 %869
      %vm871 = vcmp.lt.s32.totalorder %v563, 112
      %v872 = vsel %vm871, %v856, %v864
      %v873 = vsel %vm871, %v858, %v866
      %v874 = vsel %vm871, %v860, %v868
      %v875 = vsel %vm871, %v862, %v870
      %v876 = vsel %vm871, %v864, %v856
      %v877 = vsel %vm871, %v866, %v858
      %v878 = vsel %vm871, %v868, %v860
      %v879 = vsel %vm871, %v870, %v862
      %s880 = scalar_lea.vmem %s6, 448
      %v881 = vld [vmem:[%s880] sm:$0xff]
      %v882 = vld [vmem:[%s880 + $0x8] sm:$0xff]
      %v883 = vld [vmem:[%s880 + $0x10] sm:$0xff]
      %v884 = vld [vmem:[%s880 + $0x18] sm:$0xff]
      %v885 = vld [vmem:[%s880 + $0x20] sm:$0xff]
      %v886 = vld [vmem:[%s880 + $0x28] sm:$0xff]
      %v887 = vld [vmem:[%s880 + $0x30] sm:$0xff]
      %v888 = vld [vmem:[%s880 + $0x38] sm:$0xff]
      %v889 = vmul.f32 %v872, %v881
      %v890 = vmul.f32 %v876, %v882
      %v891 = vmul.f32 %v873, %v883
      %v892 = vmul.f32 %v877, %v884
      %v893 = vmul.f32 %v874, %v885
      %v894 = vmul.f32 %v878, %v886
      %v895 = vmul.f32 %v875, %v887
      %v896 = vmul.f32 %v879, %v888
      %v897 = vpack.c.bf16 %v891, %v889
      %v898 = vpack.c.bf16 %v892, %v890
      %v899 = vpack.c.bf16 %v895, %v893
      %v900 = vpack.c.bf16 %v896, %v894
      %901 = vst [vmem:[#allocation2 + $0xe0] sm:$0xff] %v897
      %902 = vst [vmem:[#allocation2 + $0xe8] sm:$0xff] %v898
      %903 = vst [vmem:[#allocation2 + $0xf0] sm:$0xff] %v899
      %904 = vst [vmem:[#allocation2 + $0xf8] sm:$0xff] %v900
      %905 = vrot.lane.b32.xlu0 %v526, 111
      %v906 = vpop.permute.xlu0 %905
      %907 = vrot.lane.b32.xlu0 %v528, 111
      %v908 = vpop.permute.xlu0 %907
      %909 = vrot.lane.b32.xlu0 %v530, 111
      %v910 = vpop.permute.xlu0 %909
      %911 = vrot.lane.b32.xlu0 %v532, 111
      %v912 = vpop.permute.xlu0 %911
      %913 = vrot.lane.b32.xlu0 %v527, 111
      %v914 = vpop.permute.xlu0 %913
      %915 = vrot.lane.b32.xlu0 %v529, 111
      %v916 = vpop.permute.xlu0 %915
      %917 = vrot.lane.b32.xlu0 %v531, 111
      %v918 = vpop.permute.xlu0 %917
      %919 = vrot.lane.b32.xlu0 %v533, 111
      %v920 = vpop.permute.xlu0 %919
      %vm921 = vcmp.lt.s32.totalorder %v563, 111
      %v922 = vsel %vm921, %v906, %v914
      %v923 = vsel %vm921, %v908, %v916
      %v924 = vsel %vm921, %v910, %v918
      %v925 = vsel %vm921, %v912, %v920
      %v926 = vsel %vm921, %v914, %v906
      %v927 = vsel %vm921, %v916, %v908
      %v928 = vsel %vm921, %v918, %v910
      %v929 = vsel %vm921, %v920, %v912
      %s930 = scalar_lea.vmem %s6, 512
      %v931 = vld [vmem:[%s930] sm:$0xff]
      %v932 = vld [vmem:[%s930 + $0x8] sm:$0xff]
      %v933 = vld [vmem:[%s930 + $0x10] sm:$0xff]
      %v934 = vld [vmem:[%s930 + $0x18] sm:$0xff]
      %v935 = vld [vmem:[%s930 + $0x20] sm:$0xff]
      %v936 = vld [vmem:[%s930 + $0x28] sm:$0xff]
      %v937 = vld [vmem:[%s930 + $0x30] sm:$0xff]
      %v938 = vld [vmem:[%s930 + $0x38] sm:$0xff]
      %v939 = vmul.f32 %v922, %v931
      %v940 = vmul.f32 %v926, %v932
      %v941 = vmul.f32 %v923, %v933
      %v942 = vmul.f32 %v927, %v934
      %v943 = vmul.f32 %v924, %v935
      %v944 = vmul.f32 %v928, %v936
      %v945 = vmul.f32 %v925, %v937
      %v946 = vmul.f32 %v929, %v938
      %v947 = vpack.c.bf16 %v941, %v939
      %v948 = vpack.c.bf16 %v942, %v940
      %v949 = vpack.c.bf16 %v945, %v943
      %v950 = vpack.c.bf16 %v946, %v944
      %951 = vst [vmem:[#allocation2 + $0x100] sm:$0xff] %v947
      %952 = vst [vmem:[#allocation2 + $0x108] sm:$0xff] %v948
      %953 = vst [vmem:[#allocation2 + $0x110] sm:$0xff] %v949
      %954 = vst [vmem:[#allocation2 + $0x118] sm:$0xff] %v950
      %v955 = vld [vmem:[%s4] sm:$0xff]
      %v956 = vld [vmem:[%s4 + $0x8] sm:$0xf]
      %v957 = vld [vmem:[%s4 + $0xc] sm:$0xff]
      %v958 = vld [vmem:[%s4 + $0x14] sm:$0xf]
      %v959 = vld [vmem:[%s4 + $0x18] sm:$0xff]
      %v960 = vld [vmem:[%s4 + $0x20] sm:$0xf]
      %v961 = vld [vmem:[%s4 + $0x24] sm:$0xff]
      %v962 = vld [vmem:[%s4 + $0x2c] sm:$0xf]
      %v963 = vld [vmem:[#allocation2] sm:$0xff]
      %v964 = vld [vmem:[#allocation2 + $0x8] sm:$0xff]
      %v965 = vld [vmem:[#allocation2 + $0x10] sm:$0xff]
      %v966 = vld [vmem:[#allocation2 + $0x18] sm:$0xff]
      %v967 = vld [vmem:[#allocation2 + $0x20] sm:$0xff]
      %v968 = vld [vmem:[#allocation2 + $0x28] sm:$0xff]
      %v969 = vld [vmem:[#allocation2 + $0x30] sm:$0xff]
      %v970 = vld [vmem:[#allocation2 + $0x38] sm:$0xff]
      %v971 = vld [vmem:[#allocation2 + $0x40] sm:$0xff]
      %v972 = vld [vmem:[#allocation2 + $0x48] sm:$0xff]
      %v973 = vld [vmem:[#allocation2 + $0x50] sm:$0xff]
      %v974 = vld [vmem:[#allocation2 + $0x58] sm:$0xff]
      %v975 = vld [vmem:[#allocation2 + $0x60] sm:$0xff]
      %v976 = vld [vmem:[#allocation2 + $0x68] sm:$0xff]
      %v977 = vld [vmem:[#allocation2 + $0x70] sm:$0xff]
      %v978 = vld [vmem:[#allocation2 + $0x78] sm:$0xff]
      %v979 = vld [vmem:[#allocation2 + $0x80] sm:$0xff]
      %v980 = vld [vmem:[#allocation2 + $0x88] sm:$0xff]
      %v981 = vld [vmem:[#allocation2 + $0x90] sm:$0xff]
      %v982 = vld [vmem:[#allocation2 + $0x98] sm:$0xff]
      %v983 = vld [vmem:[#allocation2 + $0xa0] sm:$0xff]
      %v984 = vld [vmem:[#allocation2 + $0xa8] sm:$0xff]
      %v985 = vld [vmem:[#allocation2 + $0xb0] sm:$0xff]
      %v986 = vld [vmem:[#allocation2 + $0xb8] sm:$0xff]
      %v987 = vld [vmem:[#allocation2 + $0xc0] sm:$0xff]
      %v988 = vld [vmem:[#allocation2 + $0xc8] sm:$0xff]
      %v989 = vld [vmem:[#allocation2 + $0xd0] sm:$0xff]
      %v990 = vld [vmem:[#allocation2 + $0xd8] sm:$0xff]
      %v991 = vld [vmem:[#allocation2 + $0xe0] sm:$0xff]
      %v992 = vld [vmem:[#allocation2 + $0xe8] sm:$0xff]
      %v993 = vld [vmem:[#allocation2 + $0xf0] sm:$0xff]
      %v994 = vld [vmem:[#allocation2 + $0xf8] sm:$0xff]
      %v995 = vld [vmem:[#allocation2 + $0x100] sm:$0xff]
      %v996 = vld [vmem:[#allocation2 + $0x108] sm:$0xff]
      %v997 = vld [vmem:[#allocation2 + $0x110] sm:$0xff]
      %v998 = vld [vmem:[#allocation2 + $0x118] sm:$0xff]
      %v999 = vld [vmem:[%s5] sm:$0xff]
      %v1000 = vld [vmem:[%s5 + $0x8] sm:$0xff]
      %v1001 = vld [vmem:[%s5 + $0x10] sm:$0xff]
      %v1002 = vld [vmem:[%s5 + $0x18] sm:$0xff]
      %1004 = vset.pattern.permute.xlu0 0
      %1005 = vperm.xlu0 %1004, %v999
      %v1006 = vpop.permute.xlu0 %1005
      %1009 = vset.pattern.permute.xlu0 0
      %1010 = vperm.xlu0 %1009, %v1000
      %v1011 = vpop.permute.xlu0 %1010
      %1014 = vset.pattern.permute.xlu0 0
      %1015 = vperm.xlu0 %1014, %v1001
      %v1016 = vpop.permute.xlu0 %1015
      %1019 = vset.pattern.permute.xlu0 0
      %1020 = vperm.xlu0 %1019, %v1002
      %v1021 = vpop.permute.xlu0 %1020
      %v1031 = vunpack.c.l.b16 %v955
      %v1032 = vunpack.c.h.b16 %v955
      %v1033 = vunpack.c.l.b16 %v956
      %v1034 = vunpack.c.l.b16 %v957
      %v1035 = vunpack.c.h.b16 %v957
      %v1036 = vunpack.c.l.b16 %v958
      %v1037 = vunpack.c.l.b16 %v959
      %v1038 = vunpack.c.h.b16 %v959
      %v1039 = vunpack.c.l.b16 %v960
      %v1040 = vunpack.c.l.b16 %v961
      %v1041 = vunpack.c.h.b16 %v961
      %v1042 = vunpack.c.l.b16 %v962
      %v1043 = vpack.c.b16 %v1034, %v1031
      %v1044 = vpack.c.b16 %v1035, %v1032
      %v1045 = vpack.c.b16 %v1036, %v1033
      %v1046 = vpack.c.b16 %v1040, %v1037
      %v1047 = vpack.c.b16 %v1041, %v1038
      %v1048 = vpack.c.b16 %v1042, %v1039
      %vm1053 = vcmask 261120
      %v1055 = vsel %vm1053, %v1045, 0
      %v1058 = vsel %vm1053, %v1048, 0
      %1060 = vmatprep.subr.bf16.mxu0 %v964
      %1061 = vmatpush1.bf16.msra.mxu0 %v963
      %1062 = vmatprep.subr.bf16.mxu0 %v966
      %1063 = vmatpush1.bf16.msra.mxu0 %v965
      %1064 = vmatprep.subr.bf16.mxu0 %v968
      %1065 = vmatpush1.bf16.msra.mxu0 %v967
      %1066 = vmatprep.subr.bf16.mxu0 %v970
      %1067 = vmatpush1.bf16.msra.mxu0 %v969
      %1068 = vmatprep.subr.bf16.mxu0 %v972
      %1069 = vmatpush1.bf16.msra.mxu0 %v971
      %1070 = vmatprep.subr.bf16.mxu0 %v974
      %1071 = vmatpush1.bf16.msra.mxu0 %v973
      %1072 = vmatprep.subr.bf16.mxu0 %v976
      %1073 = vmatpush1.bf16.msra.mxu0 %v975
      %1074 = vmatprep.subr.bf16.mxu0 %v978
      %1075 = vmatpush1.bf16.msra.mxu0 %v977
      %1076 = vmatprep.subr.bf16.mxu0 %v980
      %1077 = vmatpush1.bf16.msra.mxu0 %v979
      %1078 = vmatprep.subr.bf16.mxu0 %v982
      %1079 = vmatpush1.bf16.msra.mxu0 %v981
      %1080 = vmatprep.subr.bf16.mxu0 %v984
      %1081 = vmatpush1.bf16.msra.mxu0 %v983
      %1082 = vmatprep.subr.bf16.mxu0 %v986
      %1083 = vmatpush1.bf16.msra.mxu0 %v985
      %1084 = vmatprep.subr.bf16.mxu0 %v988
      %1085 = vmatpush1.bf16.msra.mxu0 %v987
      %1086 = vmatprep.subr.bf16.mxu0 %v990
      %1087 = vmatpush1.bf16.msra.mxu0 %v989
      %1088 = vmatprep.subr.bf16.mxu0 %v992
      %1089 = vmatpush1.bf16.msra.mxu0 %v991
      %1090 = vmatprep.subr.bf16.mxu0 %v994
      %1091 = vmatpush1.bf16.msra.mxu0 %v993
      %1092 = vmatprep.mubr.bf16.mxu0 %v1044
      %1093 = vmatmul.mubr.bf16.gmra.mrb[0].mxu0 %v1043
      %v1094 = vpop.f32.mrb[0].mxu0
      %v1095 = vadd.f32 %v1006, %v1094
      %v1096 = vpop.f32.mrb[0].mxu0
      %v1097 = vadd.f32 %v1006, %v1096
      %v1098 = vpop.f32.mrb[0].mxu0
      %v1099 = vadd.f32 %v1011, %v1098
      %v1100 = vpop.f32.mrb[0].mxu0
      %v1101 = vadd.f32 %v1011, %v1100
      %1102 = vmatprep.mubr.bf16.mxu0 %v1047
      %1103 = vmatmul.mubr.bf16.gmra.mrb[0].mxu0 %v1046
      %v1104 = vpop.f32.mrb[0].mxu0
      %v1105 = vadd.f32 %v1016, %v1104
      %v1106 = vpop.f32.mrb[0].mxu0
      %v1107 = vadd.f32 %v1016, %v1106
      %v1108 = vpop.f32.mrb[0].mxu0
      %v1109 = vadd.f32 %v1021, %v1108
      %v1110 = vpop.f32.mrb[0].mxu0
      %v1111 = vadd.f32 %v1021, %v1110
      %1112 = vdwg.mxu0
      %1113 = vmatprep.subr.bf16.mxu0 %v996
      %1114 = vmatpush1.bf16.msra.mxu0 %v995
      %1115 = vmatprep.subr.bf16.mxu0 %v998
      %1116 = vmatpush1.bf16.msra.mxu0 %v997
      %1117 = vmatprep.subr.bf16.mxu0 0
      %1118 = vmatpush1.bf16.msra.mxu0 0
      %1119 = vmatprep.subr.bf16.mxu0 0
      %1120 = vmatpush1.bf16.msra.mxu0 0
      %1121 = vmatprep.subr.bf16.mxu0 0
      %1122 = vmatpush1.bf16.msra.mxu0 0
      %1123 = vmatprep.subr.bf16.mxu0 0
      %1124 = vmatpush1.bf16.msra.mxu0 0
      %1125 = vmatprep.subr.bf16.mxu0 0
      %1126 = vmatpush1.bf16.msra.mxu0 0
      %1127 = vmatprep.subr.bf16.mxu0 0
      %1128 = vmatpush1.bf16.msra.mxu0 0
      %1129 = vmatprep.subr.bf16.mxu0 0
      %1130 = vmatpush1.bf16.msra.mxu0 0
      %1131 = vmatprep.subr.bf16.mxu0 0
      %1132 = vmatpush1.bf16.msra.mxu0 0
      %1133 = vmatprep.subr.bf16.mxu0 0
      %1134 = vmatpush1.bf16.msra.mxu0 0
      %1135 = vmatprep.subr.bf16.mxu0 0
      %1136 = vmatpush1.bf16.msra.mxu0 0
      %1137 = vmatprep.subr.bf16.mxu0 0
      %1138 = vmatpush1.bf16.msra.mxu0 0
      %1139 = vmatprep.subr.bf16.mxu0 0
      %1140 = vmatpush1.bf16.msra.mxu0 0
      %1141 = vmatprep.subr.bf16.mxu0 0
      %1142 = vmatpush1.bf16.msra.mxu0 0
      %1143 = vmatprep.subr.bf16.mxu0 0
      %1144 = vmatpush1.bf16.msra.mxu0 0
      %1145 = vmatprep.mubr.bf16.mxu0 0
      %1146 = vmatmul.mubr.bf16.gmra.mrb[0].mxu0 %v1055
      %v1147 = vpop.f32.mrb[0].mxu0
      %v1148 = vadd.f32 %v1095, %v1147
      %v1149 = vpop.f32.mrb[0].mxu0
      %v1150 = vadd.f32 %v1097, %v1149
      %v1151 = vpop.f32.mrb[0].mxu0
      %v1152 = vadd.f32 %v1099, %v1151
      %v1153 = vpop.f32.mrb[0].mxu0
      %v1154 = vadd.f32 %v1101, %v1153
      %1155 = vmatprep.mubr.bf16.mxu0 0
      %1156 = vmatmul.mubr.bf16.gmra.mrb[0].mxu0 %v1058
      %v1157 = vpop.f32.mrb[0].mxu0
      %v1158 = vadd.f32 %v1105, %v1157
      %v1159 = vpop.f32.mrb[0].mxu0
      %v1160 = vadd.f32 %v1107, %v1159
      %v1161 = vpop.f32.mrb[0].mxu0
      %v1162 = vadd.f32 %v1109, %v1161
      %v1163 = vpop.f32.mrb[0].mxu0
      %v1164 = vadd.f32 %v1111, %v1163
      %1165 = vdwg.mxu0
      %v1166 = vadd.f32 %v1148, %v1150
      %1167 = vadd.xlane.f32.xlu0 %v1166
      %v1168 = vpop.xlane.xlu0 %1167
      %v1169 = vadd.f32 %v1152, %v1154
      %1170 = vadd.xlane.f32.xlu0 %v1169
      %v1171 = vpop.xlane.xlu0 %1170
      %v1172 = vadd.f32 %v1158, %v1160
      %1173 = vadd.xlane.f32.xlu0 %v1172
      %v1174 = vpop.xlane.xlu0 %1173
      %v1175 = vadd.f32 %v1162, %v1164
      %1176 = vadd.xlane.f32.xlu0 %v1175
      %v1177 = vpop.xlane.xlu0 %1176
      %v1178 = vmul.f32 %v1148, %v1148
      %v1179 = vmul.f32 %v1150, %v1150
      %v1180 = vmul.f32 %v1152, %v1152
      %v1181 = vmul.f32 %v1154, %v1154
      %v1182 = vmul.f32 %v1158, %v1158
      %v1183 = vmul.f32 %v1160, %v1160
      %v1184 = vmul.f32 %v1162, %v1162
      %v1185 = vmul.f32 %v1164, %v1164
      %v1186 = vadd.f32 %v1178, %v1179
      %1187 = vadd.xlane.f32.xlu0 %v1186
      %v1188 = vpop.xlane.xlu0 %1187
      %v1189 = vadd.f32 %v1180, %v1181
      %1190 = vadd.xlane.f32.xlu0 %v1189
      %v1191 = vpop.xlane.xlu0 %1190
      %v1192 = vadd.f32 %v1182, %v1183
      %1193 = vadd.xlane.f32.xlu0 %v1192
      %v1194 = vpop.xlane.xlu0 %1193
      %v1195 = vadd.f32 %v1184, %v1185
      %1196 = vadd.xlane.f32.xlu0 %v1195
      %v1197 = vpop.xlane.xlu0 %1196
      %v1198 = vld [vmem:[%s7] sm:$0xff]
      %v1199 = vld [vmem:[%s7 + $0x8] sm:$0xff]
      %v1200 = vld [vmem:[%s7 + $0x10] sm:$0xff]
      %v1201 = vld [vmem:[%s7 + $0x18] sm:$0xff]
      %v1202 = vld [vmem:[%s7 + $0x20] sm:$0xff]
      %v1203 = vld [vmem:[%s7 + $0x28] sm:$0xff]
      %v1204 = vld [vmem:[%s7 + $0x30] sm:$0xff]
      %v1205 = vld [vmem:[%s7 + $0x38] sm:$0xff]
      %vm1206 = vcmask 523264
      %v1208 = vsel %vm1206, %v1198, 0
      %v1211 = vsel %vm1206, %v1199, 0
      %v1214 = vsel %vm1206, %v1200, 0
      %v1217 = vsel %vm1206, %v1201, 0
      %v1220 = vsel %vm1206, %v1202, 0
      %v1223 = vsel %vm1206, %v1203, 0
      %v1226 = vsel %vm1206, %v1204, 0
      %v1229 = vsel %vm1206, %v1205, 0
      %1231 = vmatprep.subr.mxu0 0.0
      %1232 = vmatpush1.msra.mxu0 %v1168
      %1233 = vmatprep.subr.mxu0 0.0
      %1234 = vmatpush1.msra.mxu0 %v1171
      %1235 = vmatprep.subr.mxu0 0.0
      %1236 = vmatpush1.msra.mxu0 %v1174
      %1237 = vmatprep.subr.mxu0 0.0
      %1238 = vmatpush1.msra.mxu0 %v1177
      %1239 = vmatprep.subr.mxu0 0.0
      %1240 = vmatpush1.msra.mxu0 %v1188
      %1241 = vmatprep.subr.mxu0 0.0
      %1242 = vmatpush1.msra.mxu0 %v1191
      %1243 = vmatprep.subr.mxu0 0.0
      %1244 = vmatpush1.msra.mxu0 %v1194
      %1245 = vmatprep.subr.mxu0 0.0
      %1246 = vmatpush1.msra.mxu0 %v1197
      %1247 = vmatprep.subr.mxu0 0.0
      %1248 = vmatpush1.msra.mxu0 0.0
      %1249 = vmatprep.subr.mxu0 0.0
      %1250 = vmatpush1.msra.mxu0 0.0
      %1251 = vmatprep.subr.mxu0 0.0
      %1252 = vmatpush1.msra.mxu0 0.0
      %1253 = vmatprep.subr.mxu0 0.0
      %1254 = vmatpush1.msra.mxu0 0.0
      %1255 = vmatprep.subr.mxu0 0.0
      %1256 = vmatpush1.msra.mxu0 0.0
      %1257 = vmatprep.subr.mxu0 0.0
      %1258 = vmatpush1.msra.mxu0 0.0
      %1259 = vmatprep.subr.mxu0 0.0
      %1260 = vmatpush1.msra.mxu0 0.0
      %1261 = vmatprep.subr.mxu0 0.0
      %1262 = vmatpush1.msra.mxu0 0.0
      %1263 = vmatprep.subr.mxu0 0.0
      %1264 = vmatpush1.msra.mxu0 0.0
      %1265 = vmatprep.subr.mxu0 0.0
      %1266 = vmatpush1.msra.mxu0 0.0
      %1267 = vmatprep.subr.mxu0 0.0
      %1268 = vmatpush1.msra.mxu0 0.0
      %1269 = vmatprep.subr.mxu0 0.0
      %1270 = vmatpush1.msra.mxu0 0.0
      %1271 = vmatprep.subr.mxu0 0.0
      %1272 = vmatpush1.msra.mxu0 0.0
      %1273 = vmatprep.subr.mxu0 0.0
      %1274 = vmatpush1.msra.mxu0 0.0
      %1275 = vmatprep.subr.mxu0 0.0
      %1276 = vmatpush1.msra.mxu0 0.0
      %1277 = vmatprep.subr.mxu0 0.0
      %1278 = vmatpush1.msra.mxu0 0.0
      %1279 = vmatprep.subr.mxu0 0.0
      %1280 = vmatpush1.msra.mxu0 0.0
      %1281 = vmatprep.subr.mxu0 0.0
      %1282 = vmatpush1.msra.mxu0 0.0
      %1283 = vmatprep.subr.mxu0 0.0
      %1284 = vmatpush1.msra.mxu0 0.0
      %1285 = vmatprep.subr.mxu0 0.0
      %1286 = vmatpush1.msra.mxu0 0.0
      %1287 = vmatprep.subr.mxu0 0.0
      %1288 = vmatpush1.msra.mxu0 0.0
      %1289 = vmatprep.subr.mxu0 0.0
      %1290 = vmatpush1.msra.mxu0 0.0
      %1291 = vmatprep.subr.mxu0 0.0
      %1292 = vmatpush1.msra.mxu0 0.0
      %1293 = vmatprep.subr.mxu0 0.0
      %1294 = vmatpush1.msra.mxu0 0.0
      %1295 = vmatprep.mubr.f32.mxu0 0.0
      %1296 = vmatmul.mubr.f32.gmra.mrb[0].mxu0 %v1208
      %v1297 = vpop.f32.mrb[0].mxu0
      %v1298 = vadd.f32 0.0, %v1297
      %v1299 = vpop.f32.mrb[0].mxu0
      %1300 = vmatprep.mubr.f32.mxu0 0.0
      %1301 = vmatmul.mubr.f32.gmra.mrb[0].mxu0 %v1211
      %v1302 = vpop.f32.mrb[0].mxu0
      %v1303 = vadd.f32 0.0, %v1302
      %v1304 = vpop.f32.mrb[0].mxu0
      %1305 = vmatprep.mubr.f32.mxu0 0.0
      %1306 = vmatmul.mubr.f32.gmra.mrb[0].mxu0 %v1214
      %v1307 = vpop.f32.mrb[0].mxu0
      %v1308 = vadd.f32 0.0, %v1307
      %v1309 = vpop.f32.mrb[0].mxu0
      %1310 = vmatprep.mubr.f32.mxu0 0.0
      %1311 = vmatmul.mubr.f32.gmra.mrb[0].mxu0 %v1217
      %v1312 = vpop.f32.mrb[0].mxu0
      %v1313 = vadd.f32 0.0, %v1312
      %v1314 = vpop.f32.mrb[0].mxu0
      %1315 = vmatprep.mubr.f32.mxu0 0.0
      %1316 = vmatmul.mubr.f32.gmra.mrb[0].mxu0 %v1220
      %v1317 = vpop.f32.mrb[0].mxu0
      %v1318 = vadd.f32 0.0, %v1317
      %v1319 = vpop.f32.mrb[0].mxu0
      %1320 = vmatprep.mubr.f32.mxu0 0.0
      %1321 = vmatmul.mubr.f32.gmra.mrb[0].mxu0 %v1223
      %v1322 = vpop.f32.mrb[0].mxu0
      %v1323 = vadd.f32 0.0, %v1322
      %v1324 = vpop.f32.mrb[0].mxu0
      %1325 = vmatprep.mubr.f32.mxu0 0.0
      %1326 = vmatmul.mubr.f32.gmra.mrb[0].mxu0 %v1226
      %v1327 = vpop.f32.mrb[0].mxu0
      %v1328 = vadd.f32 0.0, %v1327
      %v1329 = vpop.f32.mrb[0].mxu0
      %1330 = vmatprep.mubr.f32.mxu0 0.0
      %1331 = vmatmul.mubr.f32.gmra.mrb[0].mxu0 %v1229
      %v1332 = vpop.f32.mrb[0].mxu0
      %v1333 = vadd.f32 0.0, %v1332
      %v1334 = vpop.f32.mrb[0].mxu0
      %1335 = vdwg.mxu0
      %v1336 = vmul.f32 %v1298, %v1298
      %v1337 = vmul.f32 %v1303, %v1303
      %v1338 = vmul.f32 %v1308, %v1308
      %v1339 = vmul.f32 %v1313, %v1313
      %v1340 = vsub.f32 %v1318, %v1336
      %v1341 = vsub.f32 %v1323, %v1337
      %v1342 = vsub.f32 %v1328, %v1338
      %v1343 = vsub.f32 %v1333, %v1339
      %1345 = vset.pattern.permute.xlu0 0
      %1346 = vperm.xlu0 %1345, %v1298
      %v1347 = vpop.permute.xlu0 %1346
      %1350 = vset.pattern.permute.xlu0 0
      %1351 = vperm.xlu0 %1350, %v1303
      %v1352 = vpop.permute.xlu0 %1351
      %1355 = vset.pattern.permute.xlu0 0
      %1356 = vperm.xlu0 %1355, %v1308
      %v1357 = vpop.permute.xlu0 %1356
      %1360 = vset.pattern.permute.xlu0 0
      %1361 = vperm.xlu0 %1360, %v1313
      %v1362 = vpop.permute.xlu0 %1361
      %v1364 = vsub.f32 %v1148, %v1347
      %v1365 = vsub.f32 %v1150, %v1347
      %v1366 = vsub.f32 %v1152, %v1352
      %v1367 = vsub.f32 %v1154, %v1352
      %v1368 = vsub.f32 %v1158, %v1357
      %v1369 = vsub.f32 %v1160, %v1357
      %v1370 = vsub.f32 %v1162, %v1362
      %v1371 = vsub.f32 %v1164, %v1362
      %v1372 = vadd.f32 %v1340, 1e-05
      %v1373 = vadd.f32 %v1341, 1e-05
      %v1374 = vadd.f32 %v1342, 1e-05
      %v1375 = vadd.f32 %v1343, 1e-05
      %v1376 = vrsqrt.pop %v1372
      %v1377 = vrsqrt.pop %v1373
      %v1378 = vrsqrt.pop %v1374
      %v1379 = vrsqrt.pop %v1375
      %1381 = vset.pattern.permute.xlu0 0
      %1382 = vperm.xlu0 %1381, %v1376
      %v1383 = vpop.permute.xlu0 %1382
      %1386 = vset.pattern.permute.xlu0 0
      %1387 = vperm.xlu0 %1386, %v1377
      %v1388 = vpop.permute.xlu0 %1387
      %1391 = vset.pattern.permute.xlu0 0
      %1392 = vperm.xlu0 %1391, %v1378
      %v1393 = vpop.permute.xlu0 %1392
      %1396 = vset.pattern.permute.xlu0 0
      %1397 = vperm.xlu0 %1396, %v1379
      %v1398 = vpop.permute.xlu0 %1397
      %v1400 = vmul.f32 %v1364, %v1383
      %v1401 = vmul.f32 %v1365, %v1383
      %v1402 = vmul.f32 %v1366, %v1388
      %v1403 = vmul.f32 %v1367, %v1388
      %v1404 = vmul.f32 %v1368, %v1393
      %v1405 = vmul.f32 %v1369, %v1393
      %v1406 = vmul.f32 %v1370, %v1398
      %v1407 = vmul.f32 %v1371, %v1398
      %v1408 = vld [vmem:[%s8] sm:$0xff]
      %v1409 = vld [vmem:[%s8 + $0x8] sm:$0xff]
      %v1410 = vld [vmem:[%s8 + $0x10] sm:$0xff]
      %v1411 = vld [vmem:[%s8 + $0x18] sm:$0xff]
      %1413 = vset.pattern.permute.xlu0 0
      %1414 = vperm.xlu0 %1413, %v1408
      %v1415 = vpop.permute.xlu0 %1414
      %1418 = vset.pattern.permute.xlu0 0
      %1419 = vperm.xlu0 %1418, %v1409
      %v1420 = vpop.permute.xlu0 %1419
      %1423 = vset.pattern.permute.xlu0 0
      %1424 = vperm.xlu0 %1423, %v1410
      %v1425 = vpop.permute.xlu0 %1424
      %1428 = vset.pattern.permute.xlu0 0
      %1429 = vperm.xlu0 %1428, %v1411
      %v1430 = vpop.permute.xlu0 %1429
      %v1432 = vmul.f32 %v1400, %v1415
      %v1433 = vmul.f32 %v1401, %v1415
      %v1434 = vmul.f32 %v1402, %v1420
      %v1435 = vmul.f32 %v1403, %v1420
      %v1436 = vmul.f32 %v1404, %v1425
      %v1437 = vmul.f32 %v1405, %v1425
      %v1438 = vmul.f32 %v1406, %v1430
      %v1439 = vmul.f32 %v1407, %v1430
      %v1440 = vld [vmem:[%s9] sm:$0xff]
      %v1441 = vld [vmem:[%s9 + $0x8] sm:$0xff]
      %v1442 = vld [vmem:[%s9 + $0x10] sm:$0xff]
      %v1443 = vld [vmem:[%s9 + $0x18] sm:$0xff]
      %1445 = vset.pattern.permute.xlu0 0
      %1446 = vperm.xlu0 %1445, %v1440
      %v1447 = vpop.permute.xlu0 %1446
      %1450 = vset.pattern.permute.xlu0 0
      %1451 = vperm.xlu0 %1450, %v1441
      %v1452 = vpop.permute.xlu0 %1451
      %1455 = vset.pattern.permute.xlu0 0
      %1456 = vperm.xlu0 %1455, %v1442
      %v1457 = vpop.permute.xlu0 %1456
      %1460 = vset.pattern.permute.xlu0 0
      %1461 = vperm.xlu0 %1460, %v1443
      %v1462 = vpop.permute.xlu0 %1461
      %v1464 = vadd.f32 %v1432, %v1447
      %v1465 = vadd.f32 %v1433, %v1447
      %v1466 = vadd.f32 %v1434, %v1452
      %v1467 = vadd.f32 %v1435, %v1452
      %v1468 = vadd.f32 %v1436, %v1457
      %v1469 = vadd.f32 %v1437, %v1457
      %v1470 = vadd.f32 %v1438, %v1462
      %v1471 = vadd.f32 %v1439, %v1462
      %v1472 = vxor.u32 %v1464, 2147483648
      %v1473 = vxor.u32 %v1465, 2147483648
      %v1474 = vxor.u32 %v1466, 2147483648
      %v1475 = vxor.u32 %v1467, 2147483648
      %v1476 = vxor.u32 %v1468, 2147483648
      %v1477 = vxor.u32 %v1469, 2147483648
      %v1478 = vxor.u32 %v1470, 2147483648
      %v1479 = vxor.u32 %v1471, 2147483648
      %v1480 = vmul.f32 %v1472, 1.442695
      %v1481 = vpow.pop %v1480
      %v1482 = vmul.f32 %v1473, 1.442695
      %v1483 = vpow.pop %v1482
      %v1484 = vmul.f32 %v1474, 1.442695
      %v1485 = vpow.pop %v1484
      %v1486 = vmul.f32 %v1475, 1.442695
      %v1487 = vpow.pop %v1486
      %v1488 = vmul.f32 %v1476, 1.442695
      %v1489 = vpow.pop %v1488
      %v1490 = vmul.f32 %v1477, 1.442695
      %v1491 = vpow.pop %v1490
      %v1492 = vmul.f32 %v1478, 1.442695
      %v1493 = vpow.pop %v1492
      %v1494 = vmul.f32 %v1479, 1.442695
      %v1495 = vpow.pop %v1494
      %v1496 = vadd.f32 %v1481, 1.0
      %v1497 = vadd.f32 %v1483, 1.0
      %v1498 = vadd.f32 %v1485, 1.0
      %v1499 = vadd.f32 %v1487, 1.0
      %v1500 = vadd.f32 %v1489, 1.0
      %v1501 = vadd.f32 %v1491, 1.0
      %v1502 = vadd.f32 %v1493, 1.0
      %v1503 = vadd.f32 %v1495, 1.0
      %v1504 = vrcp.pop %v1496
      %v1505 = vmul.f32 1.0, %v1504
      %v1506 = vrcp.pop %v1497
      %v1507 = vmul.f32 1.0, %v1506
      %v1508 = vrcp.pop %v1498
      %v1509 = vmul.f32 1.0, %v1508
      %v1510 = vrcp.pop %v1499
      %v1511 = vmul.f32 1.0, %v1510
      %v1512 = vrcp.pop %v1500
      %v1513 = vmul.f32 1.0, %v1512
      %v1514 = vrcp.pop %v1501
      %v1515 = vmul.f32 1.0, %v1514
      %v1516 = vrcp.pop %v1502
      %v1517 = vmul.f32 1.0, %v1516
      %v1518 = vrcp.pop %v1503
      %v1519 = vmul.f32 1.0, %v1518
      %v1520 = vmul.f32 %v1464, %v1505
      %v1521 = vmul.f32 %v1465, %v1507
      %v1522 = vmul.f32 %v1466, %v1509
      %v1523 = vmul.f32 %v1467, %v1511
      %v1524 = vmul.f32 %v1468, %v1513
      %v1525 = vmul.f32 %v1469, %v1515
      %v1526 = vmul.f32 %v1470, %v1517
      %v1527 = vmul.f32 %v1471, %v1519
      %1528 = vrot.lane.b32.xlu0 %v1520, 17
      %v1529 = vpop.permute.xlu0 %1528
      %1530 = vrot.lane.b32.xlu0 %v1522, 17
      %v1531 = vpop.permute.xlu0 %1530
      %1532 = vrot.lane.b32.xlu0 %v1524, 17
      %v1533 = vpop.permute.xlu0 %1532
      %1534 = vrot.lane.b32.xlu0 %v1526, 17
      %v1535 = vpop.permute.xlu0 %1534
      %1536 = vrot.lane.b32.xlu0 %v1521, 17
      %v1537 = vpop.permute.xlu0 %1536
      %1538 = vrot.lane.b32.xlu0 %v1523, 17
      %v1539 = vpop.permute.xlu0 %1538
      %1540 = vrot.lane.b32.xlu0 %v1525, 17
      %v1541 = vpop.permute.xlu0 %1540
      %1542 = vrot.lane.b32.xlu0 %v1527, 17
      %v1543 = vpop.permute.xlu0 %1542
      %v1544 = vsel %vm564, %v1529, %v1537
      %v1545 = vsel %vm564, %v1531, %v1539
      %v1546 = vsel %vm564, %v1533, %v1541
      %v1547 = vsel %vm564, %v1535, %v1543
      %v1548 = vsel %vm564, %v1537, %v1529
      %v1549 = vsel %vm564, %v1539, %v1531
      %v1550 = vsel %vm564, %v1541, %v1533
      %v1551 = vsel %vm564, %v1543, %v1535
      %v1552 = vld [vmem:[%s6] sm:$0xff]
      %v1553 = vld [vmem:[%s6 + $0x8] sm:$0xff]
      %v1554 = vld [vmem:[%s6 + $0x10] sm:$0xff]
      %v1555 = vld [vmem:[%s6 + $0x18] sm:$0xff]
      %v1556 = vld [vmem:[%s6 + $0x20] sm:$0xff]
      %v1557 = vld [vmem:[%s6 + $0x28] sm:$0xff]
      %v1558 = vld [vmem:[%s6 + $0x30] sm:$0xff]
      %v1559 = vld [vmem:[%s6 + $0x38] sm:$0xff]
      %v1560 = vmul.f32 %v1548, %v1552
      %v1561 = vmul.f32 %v1544, %v1553
      %v1562 = vmul.f32 %v1549, %v1554
      %v1563 = vmul.f32 %v1545, %v1555
      %v1564 = vmul.f32 %v1550, %v1556
      %v1565 = vmul.f32 %v1546, %v1557
      %v1566 = vmul.f32 %v1551, %v1558
      %v1567 = vmul.f32 %v1547, %v1559
      %v1568 = vpack.c.bf16 %v1562, %v1560
      %v1569 = vpack.c.bf16 %v1563, %v1561
      %v1570 = vpack.c.bf16 %v1566, %v1564
      %v1571 = vpack.c.bf16 %v1567, %v1565
      %1572 = vst [vmem:[#allocation2] sm:$0xff] %v1568
      %1573 = vst [vmem:[#allocation2 + $0x8] sm:$0xff] %v1569
      %1574 = vst [vmem:[#allocation2 + $0x10] sm:$0xff] %v1570
      %1575 = vst [vmem:[#allocation2 + $0x18] sm:$0xff] %v1571
      %1576 = vrot.lane.b32.xlu0 %v1520, 16
      %v1577 = vpop.permute.xlu0 %1576
      %1578 = vrot.lane.b32.xlu0 %v1522, 16
      %v1579 = vpop.permute.xlu0 %1578
      %1580 = vrot.lane.b32.xlu0 %v1524, 16
      %v1581 = vpop.permute.xlu0 %1580
      %1582 = vrot.lane.b32.xlu0 %v1526, 16
      %v1583 = vpop.permute.xlu0 %1582
      %1584 = vrot.lane.b32.xlu0 %v1521, 16
      %v1585 = vpop.permute.xlu0 %1584
      %1586 = vrot.lane.b32.xlu0 %v1523, 16
      %v1587 = vpop.permute.xlu0 %1586
      %1588 = vrot.lane.b32.xlu0 %v1525, 16
      %v1589 = vpop.permute.xlu0 %1588
      %1590 = vrot.lane.b32.xlu0 %v1527, 16
      %v1591 = vpop.permute.xlu0 %1590
      %v1592 = vsel %vm613, %v1577, %v1585
      %v1593 = vsel %vm613, %v1579, %v1587
      %v1594 = vsel %vm613, %v1581, %v1589
      %v1595 = vsel %vm613, %v1583, %v1591
      %v1596 = vsel %vm613, %v1585, %v1577
      %v1597 = vsel %vm613, %v1587, %v1579
      %v1598 = vsel %vm613, %v1589, %v1581
      %v1599 = vsel %vm613, %v1591, %v1583
      %v1600 = vld [vmem:[%s622] sm:$0xff]
      %v1601 = vld [vmem:[%s622 + $0x8] sm:$0xff]
      %v1602 = vld [vmem:[%s622 + $0x10] sm:$0xff]
      %v1603 = vld [vmem:[%s622 + $0x18] sm:$0xff]
      %v1604 = vld [vmem:[%s622 + $0x20] sm:$0xff]
      %v1605 = vld [vmem:[%s622 + $0x28] sm:$0xff]
      %v1606 = vld [vmem:[%s622 + $0x30] sm:$0xff]
      %v1607 = vld [vmem:[%s622 + $0x38] sm:$0xff]
      %v1608 = vmul.f32 %v1596, %v1600
      %v1609 = vmul.f32 %v1592, %v1601
      %v1610 = vmul.f32 %v1597, %v1602
      %v1611 = vmul.f32 %v1593, %v1603
      %v1612 = vmul.f32 %v1598, %v1604
      %v1613 = vmul.f32 %v1594, %v1605
      %v1614 = vmul.f32 %v1599, %v1606
      %v1615 = vmul.f32 %v1595, %v1607
      %v1616 = vpack.c.bf16 %v1610, %v1608
      %v1617 = vpack.c.bf16 %v1611, %v1609
      %v1618 = vpack.c.bf16 %v1614, %v1612
      %v1619 = vpack.c.bf16 %v1615, %v1613
      %1620 = vst [vmem:[#allocation2 + $0x20] sm:$0xff] %v1616
      %1621 = vst [vmem:[#allocation2 + $0x28] sm:$0xff] %v1617
      %1622 = vst [vmem:[#allocation2 + $0x30] sm:$0xff] %v1618
      %1623 = vst [vmem:[#allocation2 + $0x38] sm:$0xff] %v1619
      %1624 = vrot.lane.b32.xlu0 %v1520, 15
      %v1625 = vpop.permute.xlu0 %1624
      %1626 = vrot.lane.b32.xlu0 %v1522, 15
      %v1627 = vpop.permute.xlu0 %1626
      %1628 = vrot.lane.b32.xlu0 %v1524, 15
      %v1629 = vpop.permute.xlu0 %1628
      %1630 = vrot.lane.b32.xlu0 %v1526, 15
      %v1631 = vpop.permute.xlu0 %1630
      %1632 = vrot.lane.b32.xlu0 %v1521, 15
      %v1633 = vpop.permute.xlu0 %1632
      %1634 = vrot.lane.b32.xlu0 %v1523, 15
      %v1635 = vpop.permute.xlu0 %1634
      %1636 = vrot.lane.b32.xlu0 %v1525, 15
      %v1637 = vpop.permute.xlu0 %1636
      %1638 = vrot.lane.b32.xlu0 %v1527, 15
      %v1639 = vpop.permute.xlu0 %1638
      %v1640 = vsel %vm663, %v1625, %v1633
      %v1641 = vsel %vm663, %v1627, %v1635
      %v1642 = vsel %vm663, %v1629, %v1637
      %v1643 = vsel %vm663, %v1631, %v1639
      %v1644 = vsel %vm663, %v1633, %v1625
      %v1645 = vsel %vm663, %v1635, %v1627
      %v1646 = vsel %vm663, %v1637, %v1629
      %v1647 = vsel %vm663, %v1639, %v1631
      %v1648 = vld [vmem:[%s672] sm:$0xff]
      %v1649 = vld [vmem:[%s672 + $0x8] sm:$0xff]
      %v1650 = vld [vmem:[%s672 + $0x10] sm:$0xff]
      %v1651 = vld [vmem:[%s672 + $0x18] sm:$0xff]
      %v1652 = vld [vmem:[%s672 + $0x20] sm:$0xff]
      %v1653 = vld [vmem:[%s672 + $0x28] sm:$0xff]
      %v1654 = vld [vmem:[%s672 + $0x30] sm:$0xff]
      %v1655 = vld [vmem:[%s672 + $0x38] sm:$0xff]
      %v1656 = vmul.f32 %v1644, %v1648
      %v1657 = vmul.f32 %v1640, %v1649
      %v1658 = vmul.f32 %v1645, %v1650
      %v1659 = vmul.f32 %v1641, %v1651
      %v1660 = vmul.f32 %v1646, %v1652
      %v1661 = vmul.f32 %v1642, %v1653
      %v1662 = vmul.f32 %v1647, %v1654
      %v1663 = vmul.f32 %v1643, %v1655
      %v1664 = vpack.c.bf16 %v1658, %v1656
      %v1665 = vpack.c.bf16 %v1659, %v1657
      %v1666 = vpack.c.bf16 %v1662, %v1660
      %v1667 = vpack.c.bf16 %v1663, %v1661
      %1668 = vst [vmem:[#allocation2 + $0x40] sm:$0xff] %v1664
      %1669 = vst [vmem:[#allocation2 + $0x48] sm:$0xff] %v1665
      %1670 = vst [vmem:[#allocation2 + $0x50] sm:$0xff] %v1666
      %1671 = vst [vmem:[#allocation2 + $0x58] sm:$0xff] %v1667
      %1672 = vrot.lane.b32.xlu0 %v1520, 1
      %v1673 = vpop.permute.xlu0 %1672
      %1674 = vrot.lane.b32.xlu0 %v1522, 1
      %v1675 = vpop.permute.xlu0 %1674
      %1676 = vrot.lane.b32.xlu0 %v1524, 1
      %v1677 = vpop.permute.xlu0 %1676
      %1678 = vrot.lane.b32.xlu0 %v1526, 1
      %v1679 = vpop.permute.xlu0 %1678
      %1680 = vrot.lane.b32.xlu0 %v1521, 1
      %v1681 = vpop.permute.xlu0 %1680
      %1682 = vrot.lane.b32.xlu0 %v1523, 1
      %v1683 = vpop.permute.xlu0 %1682
      %1684 = vrot.lane.b32.xlu0 %v1525, 1
      %v1685 = vpop.permute.xlu0 %1684
      %1686 = vrot.lane.b32.xlu0 %v1527, 1
      %v1687 = vpop.permute.xlu0 %1686
      %v1688 = vsel %vm713, %v1673, %v1681
      %v1689 = vsel %vm713, %v1675, %v1683
      %v1690 = vsel %vm713, %v1677, %v1685
      %v1691 = vsel %vm713, %v1679, %v1687
      %v1692 = vsel %vm713, %v1681, %v1673
      %v1693 = vsel %vm713, %v1683, %v1675
      %v1694 = vsel %vm713, %v1685, %v1677
      %v1695 = vsel %vm713, %v1687, %v1679
      %v1696 = vld [vmem:[%s722] sm:$0xff]
      %v1697 = vld [vmem:[%s722 + $0x8] sm:$0xff]
      %v1698 = vld [vmem:[%s722 + $0x10] sm:$0xff]
      %v1699 = vld [vmem:[%s722 + $0x18] sm:$0xff]
      %v1700 = vld [vmem:[%s722 + $0x20] sm:$0xff]
      %v1701 = vld [vmem:[%s722 + $0x28] sm:$0xff]
      %v1702 = vld [vmem:[%s722 + $0x30] sm:$0xff]
      %v1703 = vld [vmem:[%s722 + $0x38] sm:$0xff]
      %v1704 = vmul.f32 %v1692, %v1696
      %v1705 = vmul.f32 %v1688, %v1697
      %v1706 = vmul.f32 %v1693, %v1698
      %v1707 = vmul.f32 %v1689, %v1699
      %v1708 = vmul.f32 %v1694, %v1700
      %v1709 = vmul.f32 %v1690, %v1701
      %v1710 = vmul.f32 %v1695, %v1702
      %v1711 = vmul.f32 %v1691, %v1703
      %v1712 = vpack.c.bf16 %v1706, %v1704
      %v1713 = vpack.c.bf16 %v1707, %v1705
      %v1714 = vpack.c.bf16 %v1710, %v1708
      %v1715 = vpack.c.bf16 %v1711, %v1709
      %1716 = vst [vmem:[#allocation2 + $0x60] sm:$0xff] %v1712
      %1717 = vst [vmem:[#allocation2 + $0x68] sm:$0xff] %v1713
      %1718 = vst [vmem:[#allocation2 + $0x70] sm:$0xff] %v1714
      %1719 = vst [vmem:[#allocation2 + $0x78] sm:$0xff] %v1715
      %v1720 = vpack.c.bf16 %v1522, %v1520
      %v1721 = vpack.c.bf16 %v1523, %v1521
      %v1722 = vpack.c.bf16 %v1526, %v1524
      %v1723 = vpack.c.bf16 %v1527, %v1525
      %1724 = vst [vmem:[#allocation2 + $0x80] sm:$0xff] %v1720
      %1725 = vst [vmem:[#allocation2 + $0x88] sm:$0xff] %v1721
      %1726 = vst [vmem:[#allocation2 + $0x90] sm:$0xff] %v1722
      %1727 = vst [vmem:[#allocation2 + $0x98] sm:$0xff] %v1723
      %1728 = vrot.lane.b32.xlu0 %v1520, 127
      %v1729 = vpop.permute.xlu0 %1728
      %1730 = vrot.lane.b32.xlu0 %v1522, 127
      %v1731 = vpop.permute.xlu0 %1730
      %1732 = vrot.lane.b32.xlu0 %v1524, 127
      %v1733 = vpop.permute.xlu0 %1732
      %1734 = vrot.lane.b32.xlu0 %v1526, 127
      %v1735 = vpop.permute.xlu0 %1734
      %1736 = vrot.lane.b32.xlu0 %v1521, 127
      %v1737 = vpop.permute.xlu0 %1736
      %1738 = vrot.lane.b32.xlu0 %v1523, 127
      %v1739 = vpop.permute.xlu0 %1738
      %1740 = vrot.lane.b32.xlu0 %v1525, 127
      %v1741 = vpop.permute.xlu0 %1740
      %1742 = vrot.lane.b32.xlu0 %v1527, 127
      %v1743 = vpop.permute.xlu0 %1742
      %v1744 = vsel %vm771, %v1729, %v1737
      %v1745 = vsel %vm771, %v1731, %v1739
      %v1746 = vsel %vm771, %v1733, %v1741
      %v1747 = vsel %vm771, %v1735, %v1743
      %v1748 = vsel %vm771, %v1737, %v1729
      %v1749 = vsel %vm771, %v1739, %v1731
      %v1750 = vsel %vm771, %v1741, %v1733
      %v1751 = vsel %vm771, %v1743, %v1735
      %v1752 = vld [vmem:[%s780] sm:$0xff]
      %v1753 = vld [vmem:[%s780 + $0x8] sm:$0xff]
      %v1754 = vld [vmem:[%s780 + $0x10] sm:$0xff]
      %v1755 = vld [vmem:[%s780 + $0x18] sm:$0xff]
      %v1756 = vld [vmem:[%s780 + $0x20] sm:$0xff]
      %v1757 = vld [vmem:[%s780 + $0x28] sm:$0xff]
      %v1758 = vld [vmem:[%s780 + $0x30] sm:$0xff]
      %v1759 = vld [vmem:[%s780 + $0x38] sm:$0xff]
      %v1760 = vmul.f32 %v1744, %v1752
      %v1761 = vmul.f32 %v1748, %v1753
      %v1762 = vmul.f32 %v1745, %v1754
      %v1763 = vmul.f32 %v1749, %v1755
      %v1764 = vmul.f32 %v1746, %v1756
      %v1765 = vmul.f32 %v1750, %v1757
      %v1766 = vmul.f32 %v1747, %v1758
      %v1767 = vmul.f32 %v1751, %v1759
      %v1768 = vpack.c.bf16 %v1762, %v1760
      %v1769 = vpack.c.bf16 %v1763, %v1761
      %v1770 = vpack.c.bf16 %v1766, %v1764
      %v1771 = vpack.c.bf16 %v1767, %v1765
      %1772 = vst [vmem:[#allocation2 + $0xa0] sm:$0xff] %v1768
      %1773 = vst [vmem:[#allocation2 + $0xa8] sm:$0xff] %v1769
      %1774 = vst [vmem:[#allocation2 + $0xb0] sm:$0xff] %v1770
      %1775 = vst [vmem:[#allocation2 + $0xb8] sm:$0xff] %v1771
      %1776 = vrot.lane.b32.xlu0 %v1520, 113
      %v1777 = vpop.permute.xlu0 %1776
      %1778 = vrot.lane.b32.xlu0 %v1522, 113
      %v1779 = vpop.permute.xlu0 %1778
      %1780 = vrot.lane.b32.xlu0 %v1524, 113
      %v1781 = vpop.permute.xlu0 %1780
      %1782 = vrot.lane.b32.xlu0 %v1526, 113
      %v1783 = vpop.permute.xlu0 %1782
      %1784 = vrot.lane.b32.xlu0 %v1521, 113
      %v1785 = vpop.permute.xlu0 %1784
      %1786 = vrot.lane.b32.xlu0 %v1523, 113
      %v1787 = vpop.permute.xlu0 %1786
      %1788 = vrot.lane.b32.xlu0 %v1525, 113
      %v1789 = vpop.permute.xlu0 %1788
      %1790 = vrot.lane.b32.xlu0 %v1527, 113
      %v1791 = vpop.permute.xlu0 %1790
      %v1792 = vsel %vm821, %v1777, %v1785
      %v1793 = vsel %vm821, %v1779, %v1787
      %v1794 = vsel %vm821, %v1781, %v1789
      %v1795 = vsel %vm821, %v1783, %v1791
      %v1796 = vsel %vm821, %v1785, %v1777
      %v1797 = vsel %vm821, %v1787, %v1779
      %v1798 = vsel %vm821, %v1789, %v1781
      %v1799 = vsel %vm821, %v1791, %v1783
      %v1800 = vld [vmem:[%s830] sm:$0xff]
      %v1801 = vld [vmem:[%s830 + $0x8] sm:$0xff]
      %v1802 = vld [vmem:[%s830 + $0x10] sm:$0xff]
      %v1803 = vld [vmem:[%s830 + $0x18] sm:$0xff]
      %v1804 = vld [vmem:[%s830 + $0x20] sm:$0xff]
      %v1805 = vld [vmem:[%s830 + $0x28] sm:$0xff]
      %v1806 = vld [vmem:[%s830 + $0x30] sm:$0xff]
      %v1807 = vld [vmem:[%s830 + $0x38] sm:$0xff]
      %v1808 = vmul.f32 %v1792, %v1800
      %v1809 = vmul.f32 %v1796, %v1801
      %v1810 = vmul.f32 %v1793, %v1802
      %v1811 = vmul.f32 %v1797, %v1803
      %v1812 = vmul.f32 %v1794, %v1804
      %v1813 = vmul.f32 %v1798, %v1805
      %v1814 = vmul.f32 %v1795, %v1806
      %v1815 = vmul.f32 %v1799, %v1807
      %v1816 = vpack.c.bf16 %v1810, %v1808
      %v1817 = vpack.c.bf16 %v1811, %v1809
      %v1818 = vpack.c.bf16 %v1814, %v1812
      %v1819 = vpack.c.bf16 %v1815, %v1813
      %1820 = vst [vmem:[#allocation2 + $0xc0] sm:$0xff] %v1816
      %1821 = vst [vmem:[#allocation2 + $0xc8] sm:$0xff] %v1817
      %1822 = vst [vmem:[#allocation2 + $0xd0] sm:$0xff] %v1818
      %1823 = vst [vmem:[#allocation2 + $0xd8] sm:$0xff] %v1819
      %1824 = vrot.lane.b32.xlu0 %v1520, 112
      %v1825 = vpop.permute.xlu0 %1824
      %1826 = vrot.lane.b32.xlu0 %v1522, 112
      %v1827 = vpop.permute.xlu0 %1826
      %1828 = vrot.lane.b32.xlu0 %v1524, 112
      %v1829 = vpop.permute.xlu0 %1828
      %1830 = vrot.lane.b32.xlu0 %v1526, 112
      %v1831 = vpop.permute.xlu0 %1830
      %1832 = vrot.lane.b32.xlu0 %v1521, 112
      %v1833 = vpop.permute.xlu0 %1832
      %1834 = vrot.lane.b32.xlu0 %v1523, 112
      %v1835 = vpop.permute.xlu0 %1834
      %1836 = vrot.lane.b32.xlu0 %v1525, 112
      %v1837 = vpop.permute.xlu0 %1836
      %1838 = vrot.lane.b32.xlu0 %v1527, 112
      %v1839 = vpop.permute.xlu0 %1838
      %v1840 = vsel %vm871, %v1825, %v1833
      %v1841 = vsel %vm871, %v1827, %v1835
      %v1842 = vsel %vm871, %v1829, %v1837
      %v1843 = vsel %vm871, %v1831, %v1839
      %v1844 = vsel %vm871, %v1833, %v1825
      %v1845 = vsel %vm871, %v1835, %v1827
      %v1846 = vsel %vm871, %v1837, %v1829
      %v1847 = vsel %vm871, %v1839, %v1831
      %v1848 = vld [vmem:[%s880] sm:$0xff]
      %v1849 = vld [vmem:[%s880 + $0x8] sm:$0xff]
      %v1850 = vld [vmem:[%s880 + $0x10] sm:$0xff]
      %v1851 = vld [vmem:[%s880 + $0x18] sm:$0xff]
      %v1852 = vld [vmem:[%s880 + $0x20] sm:$0xff]
      %v1853 = vld [vmem:[%s880 + $0x28] sm:$0xff]
      %v1854 = vld [vmem:[%s880 + $0x30] sm:$0xff]
      %v1855 = vld [vmem:[%s880 + $0x38] sm:$0xff]
      %v1856 = vmul.f32 %v1840, %v1848
      %v1857 = vmul.f32 %v1844, %v1849
      %v1858 = vmul.f32 %v1841, %v1850
      %v1859 = vmul.f32 %v1845, %v1851
      %v1860 = vmul.f32 %v1842, %v1852
      %v1861 = vmul.f32 %v1846, %v1853
      %v1862 = vmul.f32 %v1843, %v1854
      %v1863 = vmul.f32 %v1847, %v1855
      %v1864 = vpack.c.bf16 %v1858, %v1856
      %v1865 = vpack.c.bf16 %v1859, %v1857
      %v1866 = vpack.c.bf16 %v1862, %v1860
      %v1867 = vpack.c.bf16 %v1863, %v1861
      %1868 = vst [vmem:[#allocation2 + $0xe0] sm:$0xff] %v1864
      %1869 = vst [vmem:[#allocation2 + $0xe8] sm:$0xff] %v1865
      %1870 = vst [vmem:[#allocation2 + $0xf0] sm:$0xff] %v1866
      %1871 = vst [vmem:[#allocation2 + $0xf8] sm:$0xff] %v1867
      %1872 = vrot.lane.b32.xlu0 %v1520, 111
      %v1873 = vpop.permute.xlu0 %1872
      %1874 = vrot.lane.b32.xlu0 %v1522, 111
      %v1875 = vpop.permute.xlu0 %1874
      %1876 = vrot.lane.b32.xlu0 %v1524, 111
      %v1877 = vpop.permute.xlu0 %1876
      %1878 = vrot.lane.b32.xlu0 %v1526, 111
      %v1879 = vpop.permute.xlu0 %1878
      %1880 = vrot.lane.b32.xlu0 %v1521, 111
      %v1881 = vpop.permute.xlu0 %1880
      %1882 = vrot.lane.b32.xlu0 %v1523, 111
      %v1883 = vpop.permute.xlu0 %1882
      %1884 = vrot.lane.b32.xlu0 %v1525, 111
      %v1885 = vpop.permute.xlu0 %1884
      %1886 = vrot.lane.b32.xlu0 %v1527, 111
      %v1887 = vpop.permute.xlu0 %1886
      %v1888 = vsel %vm921, %v1873, %v1881
      %v1889 = vsel %vm921, %v1875, %v1883
      %v1890 = vsel %vm921, %v1877, %v1885
      %v1891 = vsel %vm921, %v1879, %v1887
      %v1892 = vsel %vm921, %v1881, %v1873
      %v1893 = vsel %vm921, %v1883, %v1875
      %v1894 = vsel %vm921, %v1885, %v1877
      %v1895 = vsel %vm921, %v1887, %v1879
      %v1896 = vld [vmem:[%s930] sm:$0xff]
      %v1897 = vld [vmem:[%s930 + $0x8] sm:$0xff]
      %v1898 = vld [vmem:[%s930 + $0x10] sm:$0xff]
      %v1899 = vld [vmem:[%s930 + $0x18] sm:$0xff]
      %v1900 = vld [vmem:[%s930 + $0x20] sm:$0xff]
      %v1901 = vld [vmem:[%s930 + $0x28] sm:$0xff]
      %v1902 = vld [vmem:[%s930 + $0x30] sm:$0xff]
      %v1903 = vld [vmem:[%s930 + $0x38] sm:$0xff]
      %v1904 = vmul.f32 %v1888, %v1896
      %v1905 = vmul.f32 %v1892, %v1897
      %v1906 = vmul.f32 %v1889, %v1898
      %v1907 = vmul.f32 %v1893, %v1899
      %v1908 = vmul.f32 %v1890, %v1900
      %v1909 = vmul.f32 %v1894, %v1901
      %v1910 = vmul.f32 %v1891, %v1902
      %v1911 = vmul.f32 %v1895, %v1903
      %v1912 = vpack.c.bf16 %v1906, %v1904
      %v1913 = vpack.c.bf16 %v1907, %v1905
      %v1914 = vpack.c.bf16 %v1910, %v1908
      %v1915 = vpack.c.bf16 %v1911, %v1909
      %1916 = vst [vmem:[#allocation2 + $0x100] sm:$0xff] %v1912
      %1917 = vst [vmem:[#allocation2 + $0x108] sm:$0xff] %v1913
      %1918 = vst [vmem:[#allocation2 + $0x110] sm:$0xff] %v1914
      %1919 = vst [vmem:[#allocation2 + $0x118] sm:$0xff] %v1915
      %s1920 = scalar_lea.vmem %s4, 48
      %v1921 = vld [vmem:[%s1920] sm:$0xff]
      %v1922 = vld [vmem:[%s1920 + $0x8] sm:$0xf]
      %v1923 = vld [vmem:[%s1920 + $0xc] sm:$0xff]
      %v1924 = vld [vmem:[%s1920 + $0x14] sm:$0xf]
      %v1925 = vld [vmem:[%s1920 + $0x18] sm:$0xff]
      %v1926 = vld [vmem:[%s1920 + $0x20] sm:$0xf]
      %v1927 = vld [vmem:[%s1920 + $0x24] sm:$0xff]
      %v1928 = vld [vmem:[%s1920 + $0x2c] sm:$0xf]
      %v1929 = vld [vmem:[#allocation2] sm:$0xff]
      %v1930 = vld [vmem:[#allocation2 + $0x8] sm:$0xff]
      %v1931 = vld [vmem:[#allocation2 + $0x10] sm:$0xff]
      %v1932 = vld [vmem:[#allocation2 + $0x18] sm:$0xff]
      %v1933 = vld [vmem:[#allocation2 + $0x20] sm:$0xff]
      %v1934 = vld [vmem:[#allocation2 + $0x28] sm:$0xff]
      %v1935 = vld [vmem:[#allocation2 + $0x30] sm:$0xff]
      %v1936 = vld [vmem:[#allocation2 + $0x38] sm:$0xff]
      %v1937 = vld [vmem:[#allocation2 + $0x40] sm:$0xff]
      %v1938 = vld [vmem:[#allocation2 + $0x48] sm:$0xff]
      %v1939 = vld [vmem:[#allocation2 + $0x50] sm:$0xff]
      %v1940 = vld [vmem:[#allocation2 + $0x58] sm:$0xff]
      %v1941 = vld [vmem:[#allocation2 + $0x60] sm:$0xff]
      %v1942 = vld [vmem:[#allocation2 + $0x68] sm:$0xff]
      %v1943 = vld [vmem:[#allocation2 + $0x70] sm:$0xff]
      %v1944 = vld [vmem:[#allocation2 + $0x78] sm:$0xff]
      %v1945 = vld [vmem:[#allocation2 + $0x80] sm:$0xff]
      %v1946 = vld [vmem:[#allocation2 + $0x88] sm:$0xff]
      %v1947 = vld [vmem:[#allocation2 + $0x90] sm:$0xff]
      %v1948 = vld [vmem:[#allocation2 + $0x98] sm:$0xff]
      %v1949 = vld [vmem:[#allocation2 + $0xa0] sm:$0xff]
      %v1950 = vld [vmem:[#allocation2 + $0xa8] sm:$0xff]
      %v1951 = vld [vmem:[#allocation2 + $0xb0] sm:$0xff]
      %v1952 = vld [vmem:[#allocation2 + $0xb8] sm:$0xff]
      %v1953 = vld [vmem:[#allocation2 + $0xc0] sm:$0xff]
      %v1954 = vld [vmem:[#allocation2 + $0xc8] sm:$0xff]
      %v1955 = vld [vmem:[#allocation2 + $0xd0] sm:$0xff]
      %v1956 = vld [vmem:[#allocation2 + $0xd8] sm:$0xff]
      %v1957 = vld [vmem:[#allocation2 + $0xe0] sm:$0xff]
      %v1958 = vld [vmem:[#allocation2 + $0xe8] sm:$0xff]
      %v1959 = vld [vmem:[#allocation2 + $0xf0] sm:$0xff]
      %v1960 = vld [vmem:[#allocation2 + $0xf8] sm:$0xff]
      %v1961 = vld [vmem:[#allocation2 + $0x100] sm:$0xff]
      %v1962 = vld [vmem:[#allocation2 + $0x108] sm:$0xff]
      %v1963 = vld [vmem:[#allocation2 + $0x110] sm:$0xff]
      %v1964 = vld [vmem:[#allocation2 + $0x118] sm:$0xff]
      %s1965 = scalar_lea.vmem %s5, 32
      %v1966 = vld [vmem:[%s1965] sm:$0xff]
      %v1967 = vld [vmem:[%s1965 + $0x8] sm:$0xff]
      %v1968 = vld [vmem:[%s1965 + $0x10] sm:$0xff]
      %v1969 = vld [vmem:[%s1965 + $0x18] sm:$0xff]
      %1971 = vset.pattern.permute.xlu0 0
      %1972 = vperm.xlu0 %1971, %v1966
      %v1973 = vpop.permute.xlu0 %1972
      %1976 = vset.pattern.permute.xlu0 0
      %1977 = vperm.xlu0 %1976, %v1967
      %v1978 = vpop.permute.xlu0 %1977
      %1981 = vset.pattern.permute.xlu0 0
      %1982 = vperm.xlu0 %1981, %v1968
      %v1983 = vpop.permute.xlu0 %1982
      %1986 = vset.pattern.permute.xlu0 0
      %1987 = vperm.xlu0 %1986, %v1969
      %v1988 = vpop.permute.xlu0 %1987
      %v1998 = vunpack.c.l.b16 %v1921
      %v1999 = vunpack.c.h.b16 %v1921
      %v2000 = vunpack.c.l.b16 %v1922
      %v2001 = vunpack.c.l.b16 %v1923
      %v2002 = vunpack.c.h.b16 %v1923
      %v2003 = vunpack.c.l.b16 %v1924
      %v2004 = vunpack.c.l.b16 %v1925
      %v2005 = vunpack.c.h.b16 %v1925
      %v2006 = vunpack.c.l.b16 %v1926
      %v2007 = vunpack.c.l.b16 %v1927
      %v2008 = vunpack.c.h.b16 %v1927
      %v2009 = vunpack.c.l.b16 %v1928
      %v2010 = vpack.c.b16 %v2001, %v1998
      %v2011 = vpack.c.b16 %v2002, %v1999
      %v2012 = vpack.c.b16 %v2003, %v2000
      %v2013 = vpack.c.b16 %v2007, %v2004
      %v2014 = vpack.c.b16 %v2008, %v2005
      %v2015 = vpack.c.b16 %v2009, %v2006
      %v2021 = vsel %vm1053, %v2012, 0
      %v2024 = vsel %vm1053, %v2015, 0
      %2026 = vmatprep.subr.bf16.mxu0 %v1930
      %2027 = vmatpush1.bf16.msra.mxu0 %v1929
      %2028 = vmatprep.subr.bf16.mxu0 %v1932
      %2029 = vmatpush1.bf16.msra.mxu0 %v1931
      %2030 = vmatprep.subr.bf16.mxu0 %v1934
      %2031 = vmatpush1.bf16.msra.mxu0 %v1933
      %2032 = vmatprep.subr.bf16.mxu0 %v1936
      %2033 = vmatpush1.bf16.msra.mxu0 %v1935
      %2034 = vmatprep.subr.bf16.mxu0 %v1938
      %2035 = vmatpush1.bf16.msra.mxu0 %v1937
      %2036 = vmatprep.subr.bf16.mxu0 %v1940
      %2037 = vmatpush1.bf16.msra.mxu0 %v1939
      %2038 = vmatprep.subr.bf16.mxu0 %v1942
      %2039 = vmatpush1.bf16.msra.mxu0 %v1941
      %2040 = vmatprep.subr.bf16.mxu0 %v1944
      %2041 = vmatpush1.bf16.msra.mxu0 %v1943
      %2042 = vmatprep.subr.bf16.mxu0 %v1946
      %2043 = vmatpush1.bf16.msra.mxu0 %v1945
      %2044 = vmatprep.subr.bf16.mxu0 %v1948
      %2045 = vmatpush1.bf16.msra.mxu0 %v1947
      %2046 = vmatprep.subr.bf16.mxu0 %v1950
      %2047 = vmatpush1.bf16.msra.mxu0 %v1949
      %2048 = vmatprep.subr.bf16.mxu0 %v1952
      %2049 = vmatpush1.bf16.msra.mxu0 %v1951
      %2050 = vmatprep.subr.bf16.mxu0 %v1954
      %2051 = vmatpush1.bf16.msra.mxu0 %v1953
      %2052 = vmatprep.subr.bf16.mxu0 %v1956
      %2053 = vmatpush1.bf16.msra.mxu0 %v1955
      %2054 = vmatprep.subr.bf16.mxu0 %v1958
      %2055 = vmatpush1.bf16.msra.mxu0 %v1957
      %2056 = vmatprep.subr.bf16.mxu0 %v1960
      %2057 = vmatpush1.bf16.msra.mxu0 %v1959
      %2058 = vmatprep.mubr.bf16.mxu0 %v2011
      %2059 = vmatmul.mubr.bf16.gmra.mrb[0].mxu0 %v2010
      %v2060 = vpop.f32.mrb[0].mxu0
      %v2061 = vadd.f32 %v1973, %v2060
      %v2062 = vpop.f32.mrb[0].mxu0
      %v2063 = vadd.f32 %v1973, %v2062
      %v2064 = vpop.f32.mrb[0].mxu0
      %v2065 = vadd.f32 %v1978, %v2064
      %v2066 = vpop.f32.mrb[0].mxu0
      %v2067 = vadd.f32 %v1978, %v2066
      %2068 = vmatprep.mubr.bf16.mxu0 %v2014
      %2069 = vmatmul.mubr.bf16.gmra.mrb[0].mxu0 %v2013
      %v2070 = vpop.f32.mrb[0].mxu0
      %v2071 = vadd.f32 %v1983, %v2070
      %v2072 = vpop.f32.mrb[0].mxu0
      %v2073 = vadd.f32 %v1983, %v2072
      %v2074 = vpop.f32.mrb[0].mxu0
      %v2075 = vadd.f32 %v1988, %v2074
      %v2076 = vpop.f32.mrb[0].mxu0
      %v2077 = vadd.f32 %v1988, %v2076
      %2078 = vdwg.mxu0
      %2079 = vmatprep.subr.bf16.mxu0 %v1962
      %2080 = vmatpush1.bf16.msra.mxu0 %v1961
      %2081 = vmatprep.subr.bf16.mxu0 %v1964
      %2082 = vmatpush1.bf16.msra.mxu0 %v1963
      %2083 = vmatprep.subr.bf16.mxu0 0
      %2084 = vmatpush1.bf16.msra.mxu0 0
      %2085 = vmatprep.subr.bf16.mxu0 0
      %2086 = vmatpush1.bf16.msra.mxu0 0
      %2087 = vmatprep.subr.bf16.mxu0 0
      %2088 = vmatpush1.bf16.msra.mxu0 0
      %2089 = vmatprep.subr.bf16.mxu0 0
      %2090 = vmatpush1.bf16.msra.mxu0 0
      %2091 = vmatprep.subr.bf16.mxu0 0
      %2092 = vmatpush1.bf16.msra.mxu0 0
      %2093 = vmatprep.subr.bf16.mxu0 0
      %2094 = vmatpush1.bf16.msra.mxu0 0
      %2095 = vmatprep.subr.bf16.mxu0 0
      %2096 = vmatpush1.bf16.msra.mxu0 0
      %2097 = vmatprep.subr.bf16.mxu0 0
      %2098 = vmatpush1.bf16.msra.mxu0 0
      %2099 = vmatprep.subr.bf16.mxu0 0
      %2100 = vmatpush1.bf16.msra.mxu0 0
      %2101 = vmatprep.subr.bf16.mxu0 0
      %2102 = vmatpush1.bf16.msra.mxu0 0
      %2103 = vmatprep.subr.bf16.mxu0 0
      %2104 = vmatpush1.bf16.msra.mxu0 0
      %2105 = vmatprep.subr.bf16.mxu0 0
      %2106 = vmatpush1.bf16.msra.mxu0 0
      %2107 = vmatprep.subr.bf16.mxu0 0
      %2108 = vmatpush1.bf16.msra.mxu0 0
      %2109 = vmatprep.subr.bf16.mxu0 0
      %2110 = vmatpush1.bf16.msra.mxu0 0
      %2111 = vmatprep.mubr.bf16.mxu0 0
      %2112 = vmatmul.mubr.bf16.gmra.mrb[0].mxu0 %v2021
      %v2113 = vpop.f32.mrb[0].mxu0
      %v2114 = vadd.f32 %v2061, %v2113
      %v2115 = vpop.f32.mrb[0].mxu0
      %v2116 = vadd.f32 %v2063, %v2115
      %v2117 = vpop.f32.mrb[0].mxu0
      %v2118 = vadd.f32 %v2065, %v2117
      %v2119 = vpop.f32.mrb[0].mxu0
      %v2120 = vadd.f32 %v2067, %v2119
      %2121 = vmatprep.mubr.bf16.mxu0 0
      %2122 = vmatmul.mubr.bf16.gmra.mrb[0].mxu0 %v2024
      %v2123 = vpop.f32.mrb[0].mxu0
      %v2124 = vadd.f32 %v2071, %v2123
      %v2125 = vpop.f32.mrb[0].mxu0
      %v2126 = vadd.f32 %v2073, %v2125
      %v2127 = vpop.f32.mrb[0].mxu0
      %v2128 = vadd.f32 %v2075, %v2127
      %v2129 = vpop.f32.mrb[0].mxu0
      %v2130 = vadd.f32 %v2077, %v2129
      %2131 = vdwg.mxu0
      %2133 = vset.pattern.permute.xlu0 0
      %2134 = vperm.xlu0 %2133, %v534
      %v2135 = vpop.permute.xlu0 %2134
      %2138 = vset.pattern.permute.xlu0 0
      %2139 = vperm.xlu0 %2138, %v535
      %v2140 = vpop.permute.xlu0 %2139
      %2143 = vset.pattern.permute.xlu0 0
      %2144 = vperm.xlu0 %2143, %v536
      %v2145 = vpop.permute.xlu0 %2144
      %2148 = vset.pattern.permute.xlu0 0
      %2149 = vperm.xlu0 %2148, %v537
      %v2150 = vpop.permute.xlu0 %2149
      %v2152 = vadd.f32 %v2114, %v2135
      %v2153 = vadd.f32 %v2116, %v2135
      %v2154 = vadd.f32 %v2118, %v2140
      %v2155 = vadd.f32 %v2120, %v2140
      %v2156 = vadd.f32 %v2124, %v2145
      %v2157 = vadd.f32 %v2126, %v2145
      %v2158 = vadd.f32 %v2128, %v2150
      %v2159 = vadd.f32 %v2130, %v2150
      %v2160 = vadd.f32 %v2152, %v2153
      %2161 = vadd.xlane.f32.xlu0 %v2160
      %v2162 = vpop.xlane.xlu0 %2161
      %v2163 = vadd.f32 %v2154, %v2155
      %2164 = vadd.xlane.f32.xlu0 %v2163
      %v2165 = vpop.xlane.xlu0 %2164
      %v2166 = vadd.f32 %v2156, %v2157
      %2167 = vadd.xlane.f32.xlu0 %v2166
      %v2168 = vpop.xlane.xlu0 %2167
      %v2169 = vadd.f32 %v2158, %v2159
      %2170 = vadd.xlane.f32.xlu0 %v2169
      %v2171 = vpop.xlane.xlu0 %2170
      %v2172 = vmul.f32 %v2152, %v2152
      %v2173 = vmul.f32 %v2153, %v2153
      %v2174 = vmul.f32 %v2154, %v2154
      %v2175 = vmul.f32 %v2155, %v2155
      %v2176 = vmul.f32 %v2156, %v2156
      %v2177 = vmul.f32 %v2157, %v2157
      %v2178 = vmul.f32 %v2158, %v2158
      %v2179 = vmul.f32 %v2159, %v2159
      %v2180 = vadd.f32 %v2172, %v2173
      %2181 = vadd.xlane.f32.xlu0 %v2180
      %v2182 = vpop.xlane.xlu0 %2181
      %v2183 = vadd.f32 %v2174, %v2175
      %2184 = vadd.xlane.f32.xlu0 %v2183
      %v2185 = vpop.xlane.xlu0 %2184
      %v2186 = vadd.f32 %v2176, %v2177
      %2187 = vadd.xlane.f32.xlu0 %v2186
      %v2188 = vpop.xlane.xlu0 %2187
      %v2189 = vadd.f32 %v2178, %v2179
      %2190 = vadd.xlane.f32.xlu0 %v2189
      %v2191 = vpop.xlane.xlu0 %2190
      %v2192 = vld [vmem:[%s7] sm:$0xff]
      %v2193 = vld [vmem:[%s7 + $0x8] sm:$0xff]
      %v2194 = vld [vmem:[%s7 + $0x10] sm:$0xff]
      %v2195 = vld [vmem:[%s7 + $0x18] sm:$0xff]
      %v2196 = vld [vmem:[%s7 + $0x20] sm:$0xff]
      %v2197 = vld [vmem:[%s7 + $0x28] sm:$0xff]
      %v2198 = vld [vmem:[%s7 + $0x30] sm:$0xff]
      %v2199 = vld [vmem:[%s7 + $0x38] sm:$0xff]
      %v2201 = vsel %vm1206, %v2192, 0
      %v2204 = vsel %vm1206, %v2193, 0
      %v2207 = vsel %vm1206, %v2194, 0
      %v2210 = vsel %vm1206, %v2195, 0
      %v2213 = vsel %vm1206, %v2196, 0
      %v2216 = vsel %vm1206, %v2197, 0
      %v2219 = vsel %vm1206, %v2198, 0
      %v2222 = vsel %vm1206, %v2199, 0
      %2224 = vmatprep.subr.mxu0 0.0
      %2225 = vmatpush1.msra.mxu0 %v2162
      %2226 = vmatprep.subr.mxu0 0.0
      %2227 = vmatpush1.msra.mxu0 %v2165
      %2228 = vmatprep.subr.mxu0 0.0
      %2229 = vmatpush1.msra.mxu0 %v2168
      %2230 = vmatprep.subr.mxu0 0.0
      %2231 = vmatpush1.msra.mxu0 %v2171
      %2232 = vmatprep.subr.mxu0 0.0
      %2233 = vmatpush1.msra.mxu0 %v2182
      %2234 = vmatprep.subr.mxu0 0.0
      %2235 = vmatpush1.msra.mxu0 %v2185
      %2236 = vmatprep.subr.mxu0 0.0
      %2237 = vmatpush1.msra.mxu0 %v2188
      %2238 = vmatprep.subr.mxu0 0.0
      %2239 = vmatpush1.msra.mxu0 %v2191
      %2240 = vmatprep.subr.mxu0 0.0
      %2241 = vmatpush1.msra.mxu0 0.0
      %2242 = vmatprep.subr.mxu0 0.0
      %2243 = vmatpush1.msra.mxu0 0.0
      %2244 = vmatprep.subr.mxu0 0.0
      %2245 = vmatpush1.msra.mxu0 0.0
      %2246 = vmatprep.subr.mxu0 0.0
      %2247 = vmatpush1.msra.mxu0 0.0
      %2248 = vmatprep.subr.mxu0 0.0
      %2249 = vmatpush1.msra.mxu0 0.0
      %2250 = vmatprep.subr.mxu0 0.0
      %2251 = vmatpush1.msra.mxu0 0.0
      %2252 = vmatprep.subr.mxu0 0.0
      %2253 = vmatpush1.msra.mxu0 0.0
      %2254 = vmatprep.subr.mxu0 0.0
      %2255 = vmatpush1.msra.mxu0 0.0
      %2256 = vmatprep.subr.mxu0 0.0
      %2257 = vmatpush1.msra.mxu0 0.0
      %2258 = vmatprep.subr.mxu0 0.0
      %2259 = vmatpush1.msra.mxu0 0.0
      %2260 = vmatprep.subr.mxu0 0.0
      %2261 = vmatpush1.msra.mxu0 0.0
      %2262 = vmatprep.subr.mxu0 0.0
      %2263 = vmatpush1.msra.mxu0 0.0
      %2264 = vmatprep.subr.mxu0 0.0
      %2265 = vmatpush1.msra.mxu0 0.0
      %2266 = vmatprep.subr.mxu0 0.0
      %2267 = vmatpush1.msra.mxu0 0.0
      %2268 = vmatprep.subr.mxu0 0.0
      %2269 = vmatpush1.msra.mxu0 0.0
      %2270 = vmatprep.subr.mxu0 0.0
      %2271 = vmatpush1.msra.mxu0 0.0
      %2272 = vmatprep.subr.mxu0 0.0
      %2273 = vmatpush1.msra.mxu0 0.0
      %2274 = vmatprep.subr.mxu0 0.0
      %2275 = vmatpush1.msra.mxu0 0.0
      %2276 = vmatprep.subr.mxu0 0.0
      %2277 = vmatpush1.msra.mxu0 0.0
      %2278 = vmatprep.subr.mxu0 0.0
      %2279 = vmatpush1.msra.mxu0 0.0
      %2280 = vmatprep.subr.mxu0 0.0
      %2281 = vmatpush1.msra.mxu0 0.0
      %2282 = vmatprep.subr.mxu0 0.0
      %2283 = vmatpush1.msra.mxu0 0.0
      %2284 = vmatprep.subr.mxu0 0.0
      %2285 = vmatpush1.msra.mxu0 0.0
      %2286 = vmatprep.subr.mxu0 0.0
      %2287 = vmatpush1.msra.mxu0 0.0
      %2288 = vmatprep.mubr.f32.mxu0 0.0
      %2289 = vmatmul.mubr.f32.gmra.mrb[0].mxu0 %v2201
      %v2290 = vpop.f32.mrb[0].mxu0
      %v2291 = vadd.f32 0.0, %v2290
      %v2292 = vpop.f32.mrb[0].mxu0
      %2293 = vmatprep.mubr.f32.mxu0 0.0
      %2294 = vmatmul.mubr.f32.gmra.mrb[0].mxu0 %v2204
      %v2295 = vpop.f32.mrb[0].mxu0
      %v2296 = vadd.f32 0.0, %v2295
      %v2297 = vpop.f32.mrb[0].mxu0
      %2298 = vmatprep.mubr.f32.mxu0 0.0
      %2299 = vmatmul.mubr.f32.gmra.mrb[0].mxu0 %v2207
      %v2300 = vpop.f32.mrb[0].mxu0
      %v2301 = vadd.f32 0.0, %v2300
      %v2302 = vpop.f32.mrb[0].mxu0
      %2303 = vmatprep.mubr.f32.mxu0 0.0
      %2304 = vmatmul.mubr.f32.gmra.mrb[0].mxu0 %v2210
      %v2305 = vpop.f32.mrb[0].mxu0
      %v2306 = vadd.f32 0.0, %v2305
      %v2307 = vpop.f32.mrb[0].mxu0
      %2308 = vmatprep.mubr.f32.mxu0 0.0
      %2309 = vmatmul.mubr.f32.gmra.mrb[0].mxu0 %v2213
      %v2310 = vpop.f32.mrb[0].mxu0
      %v2311 = vadd.f32 0.0, %v2310
      %v2312 = vpop.f32.mrb[0].mxu0
      %2313 = vmatprep.mubr.f32.mxu0 0.0
      %2314 = vmatmul.mubr.f32.gmra.mrb[0].mxu0 %v2216
      %v2315 = vpop.f32.mrb[0].mxu0
      %v2316 = vadd.f32 0.0, %v2315
      %v2317 = vpop.f32.mrb[0].mxu0
      %2318 = vmatprep.mubr.f32.mxu0 0.0
      %2319 = vmatmul.mubr.f32.gmra.mrb[0].mxu0 %v2219
      %v2320 = vpop.f32.mrb[0].mxu0
      %v2321 = vadd.f32 0.0, %v2320
      %v2322 = vpop.f32.mrb[0].mxu0
      %2323 = vmatprep.mubr.f32.mxu0 0.0
      %2324 = vmatmul.mubr.f32.gmra.mrb[0].mxu0 %v2222
      %v2325 = vpop.f32.mrb[0].mxu0
      %v2326 = vadd.f32 0.0, %v2325
      %v2327 = vpop.f32.mrb[0].mxu0
      %2328 = vdwg.mxu0
      %v2329 = vmul.f32 %v2291, %v2291
      %v2330 = vmul.f32 %v2296, %v2296
      %v2331 = vmul.f32 %v2301, %v2301
      %v2332 = vmul.f32 %v2306, %v2306
      %v2333 = vsub.f32 %v2311, %v2329
      %v2334 = vsub.f32 %v2316, %v2330
      %v2335 = vsub.f32 %v2321, %v2331
      %v2336 = vsub.f32 %v2326, %v2332
      %2338 = vset.pattern.permute.xlu0 0
      %2339 = vperm.xlu0 %2338, %v2291
      %v2340 = vpop.permute.xlu0 %2339
      %2343 = vset.pattern.permute.xlu0 0
      %2344 = vperm.xlu0 %2343, %v2296
      %v2345 = vpop.permute.xlu0 %2344
      %2348 = vset.pattern.permute.xlu0 0
      %2349 = vperm.xlu0 %2348, %v2301
      %v2350 = vpop.permute.xlu0 %2349
      %2353 = vset.pattern.permute.xlu0 0
      %2354 = vperm.xlu0 %2353, %v2306
      %v2355 = vpop.permute.xlu0 %2354
      %v2357 = vsub.f32 %v2152, %v2340
      %v2358 = vsub.f32 %v2153, %v2340
      %v2359 = vsub.f32 %v2154, %v2345
      %v2360 = vsub.f32 %v2155, %v2345
      %v2361 = vsub.f32 %v2156, %v2350
      %v2362 = vsub.f32 %v2157, %v2350
      %v2363 = vsub.f32 %v2158, %v2355
      %v2364 = vsub.f32 %v2159, %v2355
      %v2365 = vadd.f32 %v2333, 1e-05
      %v2366 = vadd.f32 %v2334, 1e-05
      %v2367 = vadd.f32 %v2335, 1e-05
      %v2368 = vadd.f32 %v2336, 1e-05
      %v2369 = vrsqrt.pop %v2365
      %v2370 = vrsqrt.pop %v2366
      %v2371 = vrsqrt.pop %v2367
      %v2372 = vrsqrt.pop %v2368
      %2374 = vset.pattern.permute.xlu0 0
      %2375 = vperm.xlu0 %2374, %v2369
      %v2376 = vpop.permute.xlu0 %2375
      %2379 = vset.pattern.permute.xlu0 0
      %2380 = vperm.xlu0 %2379, %v2370
      %v2381 = vpop.permute.xlu0 %2380
      %2384 = vset.pattern.permute.xlu0 0
      %2385 = vperm.xlu0 %2384, %v2371
      %v2386 = vpop.permute.xlu0 %2385
      %2389 = vset.pattern.permute.xlu0 0
      %2390 = vperm.xlu0 %2389, %v2372
      %v2391 = vpop.permute.xlu0 %2390
      %v2393 = vmul.f32 %v2357, %v2376
      %v2394 = vmul.f32 %v2358, %v2376
      %v2395 = vmul.f32 %v2359, %v2381
      %v2396 = vmul.f32 %v2360, %v2381
      %v2397 = vmul.f32 %v2361, %v2386
      %v2398 = vmul.f32 %v2362, %v2386
      %v2399 = vmul.f32 %v2363, %v2391
      %v2400 = vmul.f32 %v2364, %v2391
      %s2401 = scalar_lea.vmem %s8, 32
      %v2402 = vld [vmem:[%s2401] sm:$0xff]
      %v2403 = vld [vmem:[%s2401 + $0x8] sm:$0xff]
      %v2404 = vld [vmem:[%s2401 + $0x10] sm:$0xff]
      %v2405 = vld [vmem:[%s2401 + $0x18] sm:$0xff]
      %2407 = vset.pattern.permute.xlu0 0
      %2408 = vperm.xlu0 %2407, %v2402
      %v2409 = vpop.permute.xlu0 %2408
      %2412 = vset.pattern.permute.xlu0 0
      %2413 = vperm.xlu0 %2412, %v2403
      %v2414 = vpop.permute.xlu0 %2413
      %2417 = vset.pattern.permute.xlu0 0
      %2418 = vperm.xlu0 %2417, %v2404
      %v2419 = vpop.permute.xlu0 %2418
      %2422 = vset.pattern.permute.xlu0 0
      %2423 = vperm.xlu0 %2422, %v2405
      %v2424 = vpop.permute.xlu0 %2423
      %v2426 = vmul.f32 %v2393, %v2409
      %v2427 = vmul.f32 %v2394, %v2409
      %v2428 = vmul.f32 %v2395, %v2414
      %v2429 = vmul.f32 %v2396, %v2414
      %v2430 = vmul.f32 %v2397, %v2419
      %v2431 = vmul.f32 %v2398, %v2419
      %v2432 = vmul.f32 %v2399, %v2424
      %v2433 = vmul.f32 %v2400, %v2424
      %s2434 = scalar_lea.vmem %s9, 32
      %v2435 = vld [vmem:[%s2434] sm:$0xff]
      %v2436 = vld [vmem:[%s2434 + $0x8] sm:$0xff]
      %v2437 = vld [vmem:[%s2434 + $0x10] sm:$0xff]
      %v2438 = vld [vmem:[%s2434 + $0x18] sm:$0xff]
      %2440 = vset.pattern.permute.xlu0 0
      %2441 = vperm.xlu0 %2440, %v2435
      %v2442 = vpop.permute.xlu0 %2441
      %2445 = vset.pattern.permute.xlu0 0
      %2446 = vperm.xlu0 %2445, %v2436
      %v2447 = vpop.permute.xlu0 %2446
      %2450 = vset.pattern.permute.xlu0 0
      %2451 = vperm.xlu0 %2450, %v2437
      %v2452 = vpop.permute.xlu0 %2451
      %2455 = vset.pattern.permute.xlu0 0
      %2456 = vperm.xlu0 %2455, %v2438
      %v2457 = vpop.permute.xlu0 %2456
      %v2459 = vadd.f32 %v2426, %v2442
      %v2460 = vadd.f32 %v2427, %v2442
      %v2461 = vadd.f32 %v2428, %v2447
      %v2462 = vadd.f32 %v2429, %v2447
      %v2463 = vadd.f32 %v2430, %v2452
      %v2464 = vadd.f32 %v2431, %v2452
      %v2465 = vadd.f32 %v2432, %v2457
      %v2466 = vadd.f32 %v2433, %v2457
      %v2467 = vxor.u32 %v2459, 2147483648
      %v2468 = vxor.u32 %v2460, 2147483648
      %v2469 = vxor.u32 %v2461, 2147483648
      %v2470 = vxor.u32 %v2462, 2147483648
      %v2471 = vxor.u32 %v2463, 2147483648
      %v2472 = vxor.u32 %v2464, 2147483648
      %v2473 = vxor.u32 %v2465, 2147483648
      %v2474 = vxor.u32 %v2466, 2147483648
      %v2475 = vmul.f32 %v2467, 1.442695
      %v2476 = vpow.pop %v2475
      %v2477 = vmul.f32 %v2468, 1.442695
      %v2478 = vpow.pop %v2477
      %v2479 = vmul.f32 %v2469, 1.442695
      %v2480 = vpow.pop %v2479
      %v2481 = vmul.f32 %v2470, 1.442695
      %v2482 = vpow.pop %v2481
      %v2483 = vmul.f32 %v2471, 1.442695
      %v2484 = vpow.pop %v2483
      %v2485 = vmul.f32 %v2472, 1.442695
      %v2486 = vpow.pop %v2485
      %v2487 = vmul.f32 %v2473, 1.442695
      %v2488 = vpow.pop %v2487
      %v2489 = vmul.f32 %v2474, 1.442695
      %v2490 = vpow.pop %v2489
      %v2491 = vadd.f32 %v2476, 1.0
      %v2492 = vadd.f32 %v2478, 1.0
      %v2493 = vadd.f32 %v2480, 1.0
      %v2494 = vadd.f32 %v2482, 1.0
      %v2495 = vadd.f32 %v2484, 1.0
      %v2496 = vadd.f32 %v2486, 1.0
      %v2497 = vadd.f32 %v2488, 1.0
      %v2498 = vadd.f32 %v2490, 1.0
      %v2499 = vrcp.pop %v2491
      %v2500 = vmul.f32 1.0, %v2499
      %v2501 = vrcp.pop %v2492
      %v2502 = vmul.f32 1.0, %v2501
      %v2503 = vrcp.pop %v2493
      %v2504 = vmul.f32 1.0, %v2503
      %v2505 = vrcp.pop %v2494
      %v2506 = vmul.f32 1.0, %v2505
      %v2507 = vrcp.pop %v2495
      %v2508 = vmul.f32 1.0, %v2507
      %v2509 = vrcp.pop %v2496
      %v2510 = vmul.f32 1.0, %v2509
      %v2511 = vrcp.pop %v2497
      %v2512 = vmul.f32 1.0, %v2511
      %v2513 = vrcp.pop %v2498
      %v2514 = vmul.f32 1.0, %v2513
      %v2515 = vmul.f32 %v2459, %v2500
      %v2516 = vmul.f32 %v2460, %v2502
      %v2517 = vmul.f32 %v2461, %v2504
      %v2518 = vmul.f32 %v2462, %v2506
      %v2519 = vmul.f32 %v2463, %v2508
      %v2520 = vmul.f32 %v2464, %v2510
      %v2521 = vmul.f32 %v2465, %v2512
      %v2522 = vmul.f32 %v2466, %v2514
      %2523 = vrot.lane.b32.xlu0 %v2515, 17
      %v2524 = vpop.permute.xlu0 %2523
      %2525 = vrot.lane.b32.xlu0 %v2517, 17
      %v2526 = vpop.permute.xlu0 %2525
      %2527 = vrot.lane.b32.xlu0 %v2519, 17
      %v2528 = vpop.permute.xlu0 %2527
      %2529 = vrot.lane.b32.xlu0 %v2521, 17
      %v2530 = vpop.permute.xlu0 %2529
      %2531 = vrot.lane.b32.xlu0 %v2516, 17
      %v2532 = vpop.permute.xlu0 %2531
      %2533 = vrot.lane.b32.xlu0 %v2518, 17
      %v2534 = vpop.permute.xlu0 %2533
      %2535 = vrot.lane.b32.xlu0 %v2520, 17
      %v2536 = vpop.permute.xlu0 %2535
      %2537 = vrot.lane.b32.xlu0 %v2522, 17
      %v2538 = vpop.permute.xlu0 %2537
      %v2539 = vsel %vm564, %v2524, %v2532
      %v2540 = vsel %vm564, %v2526, %v2534
      %v2541 = vsel %vm564, %v2528, %v2536
      %v2542 = vsel %vm564, %v2530, %v2538
      %v2543 = vsel %vm564, %v2532, %v2524
      %v2544 = vsel %vm564, %v2534, %v2526
      %v2545 = vsel %vm564, %v2536, %v2528
      %v2546 = vsel %vm564, %v2538, %v2530
      %v2547 = vld [vmem:[%s6] sm:$0xff]
      %v2548 = vld [vmem:[%s6 + $0x8] sm:$0xff]
      %v2549 = vld [vmem:[%s6 + $0x10] sm:$0xff]
      %v2550 = vld [vmem:[%s6 + $0x18] sm:$0xff]
      %v2551 = vld [vmem:[%s6 + $0x20] sm:$0xff]
      %v2552 = vld [vmem:[%s6 + $0x28] sm:$0xff]
      %v2553 = vld [vmem:[%s6 + $0x30] sm:$0xff]
      %v2554 = vld [vmem:[%s6 + $0x38] sm:$0xff]
      %v2555 = vmul.f32 %v2543, %v2547
      %v2556 = vmul.f32 %v2539, %v2548
      %v2557 = vmul.f32 %v2544, %v2549
      %v2558 = vmul.f32 %v2540, %v2550
      %v2559 = vmul.f32 %v2545, %v2551
      %v2560 = vmul.f32 %v2541, %v2552
      %v2561 = vmul.f32 %v2546, %v2553
      %v2562 = vmul.f32 %v2542, %v2554
      %v2563 = vpack.c.bf16 %v2557, %v2555
      %v2564 = vpack.c.bf16 %v2558, %v2556
      %v2565 = vpack.c.bf16 %v2561, %v2559
      %v2566 = vpack.c.bf16 %v2562, %v2560
      %2567 = vst [vmem:[#allocation2] sm:$0xff] %v2563
      %2568 = vst [vmem:[#allocation2 + $0x8] sm:$0xff] %v2564
      %2569 = vst [vmem:[#allocation2 + $0x10] sm:$0xff] %v2565
      %2570 = vst [vmem:[#allocation2 + $0x18] sm:$0xff] %v2566
      %2571 = vrot.lane.b32.xlu0 %v2515, 16
      %v2572 = vpop.permute.xlu0 %2571
      %2573 = vrot.lane.b32.xlu0 %v2517, 16
      %v2574 = vpop.permute.xlu0 %2573
      %2575 = vrot.lane.b32.xlu0 %v2519, 16
      %v2576 = vpop.permute.xlu0 %2575
      %2577 = vrot.lane.b32.xlu0 %v2521, 16
      %v2578 = vpop.permute.xlu0 %2577
      %2579 = vrot.lane.b32.xlu0 %v2516, 16
      %v2580 = vpop.permute.xlu0 %2579
      %2581 = vrot.lane.b32.xlu0 %v2518, 16
      %v2582 = vpop.permute.xlu0 %2581
      %2583 = vrot.lane.b32.xlu0 %v2520, 16
      %v2584 = vpop.permute.xlu0 %2583
      %2585 = vrot.lane.b32.xlu0 %v2522, 16
      %v2586 = vpop.permute.xlu0 %2585
      %v2587 = vsel %vm613, %v2572, %v2580
      %v2588 = vsel %vm613, %v2574, %v2582
      %v2589 = vsel %vm613, %v2576, %v2584
      %v2590 = vsel %vm613, %v2578, %v2586
      %v2591 = vsel %vm613, %v2580, %v2572
      %v2592 = vsel %vm613, %v2582, %v2574
      %v2593 = vsel %vm613, %v2584, %v2576
      %v2594 = vsel %vm613, %v2586, %v2578
      %v2595 = vld [vmem:[%s622] sm:$0xff]
      %v2596 = vld [vmem:[%s622 + $0x8] sm:$0xff]
      %v2597 = vld [vmem:[%s622 + $0x10] sm:$0xff]
      %v2598 = vld [vmem:[%s622 + $0x18] sm:$0xff]
      %v2599 = vld [vmem:[%s622 + $0x20] sm:$0xff]
      %v2600 = vld [vmem:[%s622 + $0x28] sm:$0xff]
      %v2601 = vld [vmem:[%s622 + $0x30] sm:$0xff]
      %v2602 = vld [vmem:[%s622 + $0x38] sm:$0xff]
      %v2603 = vmul.f32 %v2591, %v2595
      %v2604 = vmul.f32 %v2587, %v2596
      %v2605 = vmul.f32 %v2592, %v2597
      %v2606 = vmul.f32 %v2588, %v2598
      %v2607 = vmul.f32 %v2593, %v2599
      %v2608 = vmul.f32 %v2589, %v2600
      %v2609 = vmul.f32 %v2594, %v2601
      %v2610 = vmul.f32 %v2590, %v2602
      %v2611 = vpack.c.bf16 %v2605, %v2603
      %v2612 = vpack.c.bf16 %v2606, %v2604
      %v2613 = vpack.c.bf16 %v2609, %v2607
      %v2614 = vpack.c.bf16 %v2610, %v2608
      %2615 = vst [vmem:[#allocation2 + $0x20] sm:$0xff] %v2611
      %2616 = vst [vmem:[#allocation2 + $0x28] sm:$0xff] %v2612
      %2617 = vst [vmem:[#allocation2 + $0x30] sm:$0xff] %v2613
      %2618 = vst [vmem:[#allocation2 + $0x38] sm:$0xff] %v2614
      %2619 = vrot.lane.b32.xlu0 %v2515, 15
      %v2620 = vpop.permute.xlu0 %2619
      %2621 = vrot.lane.b32.xlu0 %v2517, 15
      %v2622 = vpop.permute.xlu0 %2621
      %2623 = vrot.lane.b32.xlu0 %v2519, 15
      %v2624 = vpop.permute.xlu0 %2623
      %2625 = vrot.lane.b32.xlu0 %v2521, 15
      %v2626 = vpop.permute.xlu0 %2625
      %2627 = vrot.lane.b32.xlu0 %v2516, 15
      %v2628 = vpop.permute.xlu0 %2627
      %2629 = vrot.lane.b32.xlu0 %v2518, 15
      %v2630 = vpop.permute.xlu0 %2629
      %2631 = vrot.lane.b32.xlu0 %v2520, 15
      %v2632 = vpop.permute.xlu0 %2631
      %2633 = vrot.lane.b32.xlu0 %v2522, 15
      %v2634 = vpop.permute.xlu0 %2633
      %v2635 = vsel %vm663, %v2620, %v2628
      %v2636 = vsel %vm663, %v2622, %v2630
      %v2637 = vsel %vm663, %v2624, %v2632
      %v2638 = vsel %vm663, %v2626, %v2634
      %v2639 = vsel %vm663, %v2628, %v2620
      %v2640 = vsel %vm663, %v2630, %v2622
      %v2641 = vsel %vm663, %v2632, %v2624
      %v2642 = vsel %vm663, %v2634, %v2626
      %v2643 = vld [vmem:[%s672] sm:$0xff]
      %v2644 = vld [vmem:[%s672 + $0x8] sm:$0xff]
      %v2645 = vld [vmem:[%s672 + $0x10] sm:$0xff]
      %v2646 = vld [vmem:[%s672 + $0x18] sm:$0xff]
      %v2647 = vld [vmem:[%s672 + $0x20] sm:$0xff]
      %v2648 = vld [vmem:[%s672 + $0x28] sm:$0xff]
      %v2649 = vld [vmem:[%s672 + $0x30] sm:$0xff]
      %v2650 = vld [vmem:[%s672 + $0x38] sm:$0xff]
      %v2651 = vmul.f32 %v2639, %v2643
      %v2652 = vmul.f32 %v2635, %v2644
      %v2653 = vmul.f32 %v2640, %v2645
      %v2654 = vmul.f32 %v2636, %v2646
      %v2655 = vmul.f32 %v2641, %v2647
      %v2656 = vmul.f32 %v2637, %v2648
      %v2657 = vmul.f32 %v2642, %v2649
      %v2658 = vmul.f32 %v2638, %v2650
      %v2659 = vpack.c.bf16 %v2653, %v2651
      %v2660 = vpack.c.bf16 %v2654, %v2652
      %v2661 = vpack.c.bf16 %v2657, %v2655
      %v2662 = vpack.c.bf16 %v2658, %v2656
      %2663 = vst [vmem:[#allocation2 + $0x40] sm:$0xff] %v2659
      %2664 = vst [vmem:[#allocation2 + $0x48] sm:$0xff] %v2660
      %2665 = vst [vmem:[#allocation2 + $0x50] sm:$0xff] %v2661
      %2666 = vst [vmem:[#allocation2 + $0x58] sm:$0xff] %v2662
      %2667 = vrot.lane.b32.xlu0 %v2515, 1
      %v2668 = vpop.permute.xlu0 %2667
      %2669 = vrot.lane.b32.xlu0 %v2517, 1
      %v2670 = vpop.permute.xlu0 %2669
      %2671 = vrot.lane.b32.xlu0 %v2519, 1
      %v2672 = vpop.permute.xlu0 %2671
      %2673 = vrot.lane.b32.xlu0 %v2521, 1
      %v2674 = vpop.permute.xlu0 %2673
      %2675 = vrot.lane.b32.xlu0 %v2516, 1
      %v2676 = vpop.permute.xlu0 %2675
      %2677 = vrot.lane.b32.xlu0 %v2518, 1
      %v2678 = vpop.permute.xlu0 %2677
      %2679 = vrot.lane.b32.xlu0 %v2520, 1
      %v2680 = vpop.permute.xlu0 %2679
      %2681 = vrot.lane.b32.xlu0 %v2522, 1
      %v2682 = vpop.permute.xlu0 %2681
      %v2683 = vsel %vm713, %v2668, %v2676
      %v2684 = vsel %vm713, %v2670, %v2678
      %v2685 = vsel %vm713, %v2672, %v2680
      %v2686 = vsel %vm713, %v2674, %v2682
      %v2687 = vsel %vm713, %v2676, %v2668
      %v2688 = vsel %vm713, %v2678, %v2670
      %v2689 = vsel %vm713, %v2680, %v2672
      %v2690 = vsel %vm713, %v2682, %v2674
      %v2691 = vld [vmem:[%s722] sm:$0xff]
      %v2692 = vld [vmem:[%s722 + $0x8] sm:$0xff]
      %v2693 = vld [vmem:[%s722 + $0x10] sm:$0xff]
      %v2694 = vld [vmem:[%s722 + $0x18] sm:$0xff]
      %v2695 = vld [vmem:[%s722 + $0x20] sm:$0xff]
      %v2696 = vld [vmem:[%s722 + $0x28] sm:$0xff]
      %v2697 = vld [vmem:[%s722 + $0x30] sm:$0xff]
      %v2698 = vld [vmem:[%s722 + $0x38] sm:$0xff]
      %v2699 = vmul.f32 %v2687, %v2691
      %v2700 = vmul.f32 %v2683, %v2692
      %v2701 = vmul.f32 %v2688, %v2693
      %v2702 = vmul.f32 %v2684, %v2694
      %v2703 = vmul.f32 %v2689, %v2695
      %v2704 = vmul.f32 %v2685, %v2696
      %v2705 = vmul.f32 %v2690, %v2697
      %v2706 = vmul.f32 %v2686, %v2698
      %v2707 = vpack.c.bf16 %v2701, %v2699
      %v2708 = vpack.c.bf16 %v2702, %v2700
      %v2709 = vpack.c.bf16 %v2705, %v2703
      %v2710 = vpack.c.bf16 %v2706, %v2704
      %2711 = vst [vmem:[#allocation2 + $0x60] sm:$0xff] %v2707
      %2712 = vst [vmem:[#allocation2 + $0x68] sm:$0xff] %v2708
      %2713 = vst [vmem:[#allocation2 + $0x70] sm:$0xff] %v2709
      %2714 = vst [vmem:[#allocation2 + $0x78] sm:$0xff] %v2710
      %v2715 = vpack.c.bf16 %v2517, %v2515
      %v2716 = vpack.c.bf16 %v2518, %v2516
      %v2717 = vpack.c.bf16 %v2521, %v2519
      %v2718 = vpack.c.bf16 %v2522, %v2520
      %2719 = vst [vmem:[#allocation2 + $0x80] sm:$0xff] %v2715
      %2720 = vst [vmem:[#allocation2 + $0x88] sm:$0xff] %v2716
      %2721 = vst [vmem:[#allocation2 + $0x90] sm:$0xff] %v2717
      %2722 = vst [vmem:[#allocation2 + $0x98] sm:$0xff] %v2718
      %2723 = vrot.lane.b32.xlu0 %v2515, 127
      %v2724 = vpop.permute.xlu0 %2723
      %2725 = vrot.lane.b32.xlu0 %v2517, 127
      %v2726 = vpop.permute.xlu0 %2725
      %2727 = vrot.lane.b32.xlu0 %v2519, 127
      %v2728 = vpop.permute.xlu0 %2727
      %2729 = vrot.lane.b32.xlu0 %v2521, 127
      %v2730 = vpop.permute.xlu0 %2729
      %2731 = vrot.lane.b32.xlu0 %v2516, 127
      %v2732 = vpop.permute.xlu0 %2731
      %2733 = vrot.lane.b32.xlu0 %v2518, 127
      %v2734 = vpop.permute.xlu0 %2733
      %2735 = vrot.lane.b32.xlu0 %v2520, 127
      %v2736 = vpop.permute.xlu0 %2735
      %2737 = vrot.lane.b32.xlu0 %v2522, 127
      %v2738 = vpop.permute.xlu0 %2737
      %v2739 = vsel %vm771, %v2724, %v2732
      %v2740 = vsel %vm771, %v2726, %v2734
      %v2741 = vsel %vm771, %v2728, %v2736
      %v2742 = vsel %vm771, %v2730, %v2738
      %v2743 = vsel %vm771, %v2732, %v2724
      %v2744 = vsel %vm771, %v2734, %v2726
      %v2745 = vsel %vm771, %v2736, %v2728
      %v2746 = vsel %vm771, %v2738, %v2730
      %v2747 = vld [vmem:[%s780] sm:$0xff]
      %v2748 = vld [vmem:[%s780 + $0x8] sm:$0xff]
      %v2749 = vld [vmem:[%s780 + $0x10] sm:$0xff]
      %v2750 = vld [vmem:[%s780 + $0x18] sm:$0xff]
      %v2751 = vld [vmem:[%s780 + $0x20] sm:$0xff]
      %v2752 = vld [vmem:[%s780 + $0x28] sm:$0xff]
      %v2753 = vld [vmem:[%s780 + $0x30] sm:$0xff]
      %v2754 = vld [vmem:[%s780 + $0x38] sm:$0xff]
      %v2755 = vmul.f32 %v2739, %v2747
      %v2756 = vmul.f32 %v2743, %v2748
      %v2757 = vmul.f32 %v2740, %v2749
      %v2758 = vmul.f32 %v2744, %v2750
      %v2759 = vmul.f32 %v2741, %v2751
      %v2760 = vmul.f32 %v2745, %v2752
      %v2761 = vmul.f32 %v2742, %v2753
      %v2762 = vmul.f32 %v2746, %v2754
      %v2763 = vpack.c.bf16 %v2757, %v2755
      %v2764 = vpack.c.bf16 %v2758, %v2756
      %v2765 = vpack.c.bf16 %v2761, %v2759
      %v2766 = vpack.c.bf16 %v2762, %v2760
      %2767 = vst [vmem:[#allocation2 + $0xa0] sm:$0xff] %v2763
      %2768 = vst [vmem:[#allocation2 + $0xa8] sm:$0xff] %v2764
      %2769 = vst [vmem:[#allocation2 + $0xb0] sm:$0xff] %v2765
      %2770 = vst [vmem:[#allocation2 + $0xb8] sm:$0xff] %v2766
      %2771 = vrot.lane.b32.xlu0 %v2515, 113
      %v2772 = vpop.permute.xlu0 %2771
      %2773 = vrot.lane.b32.xlu0 %v2517, 113
      %v2774 = vpop.permute.xlu0 %2773
      %2775 = vrot.lane.b32.xlu0 %v2519, 113
      %v2776 = vpop.permute.xlu0 %2775
      %2777 = vrot.lane.b32.xlu0 %v2521, 113
      %v2778 = vpop.permute.xlu0 %2777
      %2779 = vrot.lane.b32.xlu0 %v2516, 113
      %v2780 = vpop.permute.xlu0 %2779
      %2781 = vrot.lane.b32.xlu0 %v2518, 113
      %v2782 = vpop.permute.xlu0 %2781
      %2783 = vrot.lane.b32.xlu0 %v2520, 113
      %v2784 = vpop.permute.xlu0 %2783
      %2785 = vrot.lane.b32.xlu0 %v2522, 113
      %v2786 = vpop.permute.xlu0 %2785
      %v2787 = vsel %vm821, %v2772, %v2780
      %v2788 = vsel %vm821, %v2774, %v2782
      %v2789 = vsel %vm821, %v2776, %v2784
      %v2790 = vsel %vm821, %v2778, %v2786
      %v2791 = vsel %vm821, %v2780, %v2772
      %v2792 = vsel %vm821, %v2782, %v2774
      %v2793 = vsel %vm821, %v2784, %v2776
      %v2794 = vsel %vm821, %v2786, %v2778
      %v2795 = vld [vmem:[%s830] sm:$0xff]
      %v2796 = vld [vmem:[%s830 + $0x8] sm:$0xff]
      %v2797 = vld [vmem:[%s830 + $0x10] sm:$0xff]
      %v2798 = vld [vmem:[%s830 + $0x18] sm:$0xff]
      %v2799 = vld [vmem:[%s830 + $0x20] sm:$0xff]
      %v2800 = vld [vmem:[%s830 + $0x28] sm:$0xff]
      %v2801 = vld [vmem:[%s830 + $0x30] sm:$0xff]
      %v2802 = vld [vmem:[%s830 + $0x38] sm:$0xff]
      %v2803 = vmul.f32 %v2787, %v2795
      %v2804 = vmul.f32 %v2791, %v2796
      %v2805 = vmul.f32 %v2788, %v2797
      %v2806 = vmul.f32 %v2792, %v2798
      %v2807 = vmul.f32 %v2789, %v2799
      %v2808 = vmul.f32 %v2793, %v2800
      %v2809 = vmul.f32 %v2790, %v2801
      %v2810 = vmul.f32 %v2794, %v2802
      %v2811 = vpack.c.bf16 %v2805, %v2803
      %v2812 = vpack.c.bf16 %v2806, %v2804
      %v2813 = vpack.c.bf16 %v2809, %v2807
      %v2814 = vpack.c.bf16 %v2810, %v2808
      %2815 = vst [vmem:[#allocation2 + $0xc0] sm:$0xff] %v2811
      %2816 = vst [vmem:[#allocation2 + $0xc8] sm:$0xff] %v2812
      %2817 = vst [vmem:[#allocation2 + $0xd0] sm:$0xff] %v2813
      %2818 = vst [vmem:[#allocation2 + $0xd8] sm:$0xff] %v2814
      %2819 = vrot.lane.b32.xlu0 %v2515, 112
      %v2820 = vpop.permute.xlu0 %2819
      %2821 = vrot.lane.b32.xlu0 %v2517, 112
      %v2822 = vpop.permute.xlu0 %2821
      %2823 = vrot.lane.b32.xlu0 %v2519, 112
      %v2824 = vpop.permute.xlu0 %2823
      %2825 = vrot.lane.b32.xlu0 %v2521, 112
      %v2826 = vpop.permute.xlu0 %2825
      %2827 = vrot.lane.b32.xlu0 %v2516, 112
      %v2828 = vpop.permute.xlu0 %2827
      %2829 = vrot.lane.b32.xlu0 %v2518, 112
      %v2830 = vpop.permute.xlu0 %2829
      %2831 = vrot.lane.b32.xlu0 %v2520, 112
      %v2832 = vpop.permute.xlu0 %2831
      %2833 = vrot.lane.b32.xlu0 %v2522, 112
      %v2834 = vpop.permute.xlu0 %2833
      %v2835 = vsel %vm871, %v2820, %v2828
      %v2836 = vsel %vm871, %v2822, %v2830
      %v2837 = vsel %vm871, %v2824, %v2832
      %v2838 = vsel %vm871, %v2826, %v2834
      %v2839 = vsel %vm871, %v2828, %v2820
      %v2840 = vsel %vm871, %v2830, %v2822
      %v2841 = vsel %vm871, %v2832, %v2824
      %v2842 = vsel %vm871, %v2834, %v2826
      %v2843 = vld [vmem:[%s880] sm:$0xff]
      %v2844 = vld [vmem:[%s880 + $0x8] sm:$0xff]
      %v2845 = vld [vmem:[%s880 + $0x10] sm:$0xff]
      %v2846 = vld [vmem:[%s880 + $0x18] sm:$0xff]
      %v2847 = vld [vmem:[%s880 + $0x20] sm:$0xff]
      %v2848 = vld [vmem:[%s880 + $0x28] sm:$0xff]
      %v2849 = vld [vmem:[%s880 + $0x30] sm:$0xff]
      %v2850 = vld [vmem:[%s880 + $0x38] sm:$0xff]
      %v2851 = vmul.f32 %v2835, %v2843
      %v2852 = vmul.f32 %v2839, %v2844
      %v2853 = vmul.f32 %v2836, %v2845
      %v2854 = vmul.f32 %v2840, %v2846
      %v2855 = vmul.f32 %v2837, %v2847
      %v2856 = vmul.f32 %v2841, %v2848
      %v2857 = vmul.f32 %v2838, %v2849
      %v2858 = vmul.f32 %v2842, %v2850
      %v2859 = vpack.c.bf16 %v2853, %v2851
      %v2860 = vpack.c.bf16 %v2854, %v2852
      %v2861 = vpack.c.bf16 %v2857, %v2855
      %v2862 = vpack.c.bf16 %v2858, %v2856
      %2863 = vst [vmem:[#allocation2 + $0xe0] sm:$0xff] %v2859
      %2864 = vst [vmem:[#allocation2 + $0xe8] sm:$0xff] %v2860
      %2865 = vst [vmem:[#allocation2 + $0xf0] sm:$0xff] %v2861
      %2866 = vst [vmem:[#allocation2 + $0xf8] sm:$0xff] %v2862
      %2867 = vrot.lane.b32.xlu0 %v2515, 111
      %v2868 = vpop.permute.xlu0 %2867
      %2869 = vrot.lane.b32.xlu0 %v2517, 111
      %v2870 = vpop.permute.xlu0 %2869
      %2871 = vrot.lane.b32.xlu0 %v2519, 111
      %v2872 = vpop.permute.xlu0 %2871
      %2873 = vrot.lane.b32.xlu0 %v2521, 111
      %v2874 = vpop.permute.xlu0 %2873
      %2875 = vrot.lane.b32.xlu0 %v2516, 111
      %v2876 = vpop.permute.xlu0 %2875
      %2877 = vrot.lane.b32.xlu0 %v2518, 111
      %v2878 = vpop.permute.xlu0 %2877
      %2879 = vrot.lane.b32.xlu0 %v2520, 111
      %v2880 = vpop.permute.xlu0 %2879
      %2881 = vrot.lane.b32.xlu0 %v2522, 111
      %v2882 = vpop.permute.xlu0 %2881
      %v2883 = vsel %vm921, %v2868, %v2876
      %v2884 = vsel %vm921, %v2870, %v2878
      %v2885 = vsel %vm921, %v2872, %v2880
      %v2886 = vsel %vm921, %v2874, %v2882
      %v2887 = vsel %vm921, %v2876, %v2868
      %v2888 = vsel %vm921, %v2878, %v2870
      %v2889 = vsel %vm921, %v2880, %v2872
      %v2890 = vsel %vm921, %v2882, %v2874
      %v2891 = vld [vmem:[%s930] sm:$0xff]
      %v2892 = vld [vmem:[%s930 + $0x8] sm:$0xff]
      %v2893 = vld [vmem:[%s930 + $0x10] sm:$0xff]
      %v2894 = vld [vmem:[%s930 + $0x18] sm:$0xff]
      %v2895 = vld [vmem:[%s930 + $0x20] sm:$0xff]
      %v2896 = vld [vmem:[%s930 + $0x28] sm:$0xff]
      %v2897 = vld [vmem:[%s930 + $0x30] sm:$0xff]
      %v2898 = vld [vmem:[%s930 + $0x38] sm:$0xff]
      %v2899 = vmul.f32 %v2883, %v2891
      %v2900 = vmul.f32 %v2887, %v2892
      %v2901 = vmul.f32 %v2884, %v2893
      %v2902 = vmul.f32 %v2888, %v2894
      %v2903 = vmul.f32 %v2885, %v2895
      %v2904 = vmul.f32 %v2889, %v2896
      %v2905 = vmul.f32 %v2886, %v2897
      %v2906 = vmul.f32 %v2890, %v2898
      %v2907 = vpack.c.bf16 %v2901, %v2899
      %v2908 = vpack.c.bf16 %v2902, %v2900
      %v2909 = vpack.c.bf16 %v2905, %v2903
      %v2910 = vpack.c.bf16 %v2906, %v2904
      %2911 = vst [vmem:[#allocation2 + $0x100] sm:$0xff] %v2907
      %2912 = vst [vmem:[#allocation2 + $0x108] sm:$0xff] %v2908
      %2913 = vst [vmem:[#allocation2 + $0x110] sm:$0xff] %v2909
      %2914 = vst [vmem:[#allocation2 + $0x118] sm:$0xff] %v2910
      %s2915 = scalar_lea.vmem %s4, 96
      %v2916 = vld [vmem:[%s2915] sm:$0xff]
      %v2917 = vld [vmem:[%s2915 + $0x8] sm:$0xf]
      %v2918 = vld [vmem:[%s2915 + $0xc] sm:$0xff]
      %v2919 = vld [vmem:[%s2915 + $0x14] sm:$0xf]
      %v2920 = vld [vmem:[%s2915 + $0x18] sm:$0xff]
      %v2921 = vld [vmem:[%s2915 + $0x20] sm:$0xf]
      %v2922 = vld [vmem:[%s2915 + $0x24] sm:$0xff]
      %v2923 = vld [vmem:[%s2915 + $0x2c] sm:$0xf]
      %v2924 = vld [vmem:[#allocation2] sm:$0xff]
      %v2925 = vld [vmem:[#allocation2 + $0x8] sm:$0xff]
      %v2926 = vld [vmem:[#allocation2 + $0x10] sm:$0xff]
      %v2927 = vld [vmem:[#allocation2 + $0x18] sm:$0xff]
      %v2928 = vld [vmem:[#allocation2 + $0x20] sm:$0xff]
      %v2929 = vld [vmem:[#allocation2 + $0x28] sm:$0xff]
      %v2930 = vld [vmem:[#allocation2 + $0x30] sm:$0xff]
      %v2931 = vld [vmem:[#allocation2 + $0x38] sm:$0xff]
      %v2932 = vld [vmem:[#allocation2 + $0x40] sm:$0xff]
      %v2933 = vld [vmem:[#allocation2 + $0x48] sm:$0xff]
      %v2934 = vld [vmem:[#allocation2 + $0x50] sm:$0xff]
      %v2935 = vld [vmem:[#allocation2 + $0x58] sm:$0xff]
      %v2936 = vld [vmem:[#allocation2 + $0x60] sm:$0xff]
      %v2937 = vld [vmem:[#allocation2 + $0x68] sm:$0xff]
      %v2938 = vld [vmem:[#allocation2 + $0x70] sm:$0xff]
      %v2939 = vld [vmem:[#allocation2 + $0x78] sm:$0xff]
      %v2940 = vld [vmem:[#allocation2 + $0x80] sm:$0xff]
      %v2941 = vld [vmem:[#allocation2 + $0x88] sm:$0xff]
      %v2942 = vld [vmem:[#allocation2 + $0x90] sm:$0xff]
      %v2943 = vld [vmem:[#allocation2 + $0x98] sm:$0xff]
      %v2944 = vld [vmem:[#allocation2 + $0xa0] sm:$0xff]
      %v2945 = vld [vmem:[#allocation2 + $0xa8] sm:$0xff]
      %v2946 = vld [vmem:[#allocation2 + $0xb0] sm:$0xff]
      %v2947 = vld [vmem:[#allocation2 + $0xb8] sm:$0xff]
      %v2948 = vld [vmem:[#allocation2 + $0xc0] sm:$0xff]
      %v2949 = vld [vmem:[#allocation2 + $0xc8] sm:$0xff]
      %v2950 = vld [vmem:[#allocation2 + $0xd0] sm:$0xff]
      %v2951 = vld [vmem:[#allocation2 + $0xd8] sm:$0xff]
      %v2952 = vld [vmem:[#allocation2 + $0xe0] sm:$0xff]
      %v2953 = vld [vmem:[#allocation2 + $0xe8] sm:$0xff]
      %v2954 = vld [vmem:[#allocation2 + $0xf0] sm:$0xff]
      %v2955 = vld [vmem:[#allocation2 + $0xf8] sm:$0xff]
      %v2956 = vld [vmem:[#allocation2 + $0x100] sm:$0xff]
      %v2957 = vld [vmem:[#allocation2 + $0x108] sm:$0xff]
      %v2958 = vld [vmem:[#allocation2 + $0x110] sm:$0xff]
      %v2959 = vld [vmem:[#allocation2 + $0x118] sm:$0xff]
      %s2960 = scalar_lea.vmem %s5, 64
      %v2961 = vld [vmem:[%s2960] sm:$0xff]
      %v2962 = vld [vmem:[%s2960 + $0x8] sm:$0xff]
      %v2963 = vld [vmem:[%s2960 + $0x10] sm:$0xff]
      %v2964 = vld [vmem:[%s2960 + $0x18] sm:$0xff]
      %2966 = vset.pattern.permute.xlu0 0
      %2967 = vperm.xlu0 %2966, %v2961
      %v2968 = vpop.permute.xlu0 %2967
      %2971 = vset.pattern.permute.xlu0 0
      %2972 = vperm.xlu0 %2971, %v2962
      %v2973 = vpop.permute.xlu0 %2972
      %2976 = vset.pattern.permute.xlu0 0
      %2977 = vperm.xlu0 %2976, %v2963
      %v2978 = vpop.permute.xlu0 %2977
      %2981 = vset.pattern.permute.xlu0 0
      %2982 = vperm.xlu0 %2981, %v2964
      %v2983 = vpop.permute.xlu0 %2982
      %v2993 = vunpack.c.l.b16 %v2916
      %v2994 = vunpack.c.h.b16 %v2916
      %v2995 = vunpack.c.l.b16 %v2917
      %v2996 = vunpack.c.l.b16 %v2918
      %v2997 = vunpack.c.h.b16 %v2918
      %v2998 = vunpack.c.l.b16 %v2919
      %v2999 = vunpack.c.l.b16 %v2920
      %v3000 = vunpack.c.h.b16 %v2920
      %v3001 = vunpack.c.l.b16 %v2921
      %v3002 = vunpack.c.l.b16 %v2922
      %v3003 = vunpack.c.h.b16 %v2922
      %v3004 = vunpack.c.l.b16 %v2923
      %v3005 = vpack.c.b16 %v2996, %v2993
      %v3006 = vpack.c.b16 %v2997, %v2994
      %v3007 = vpack.c.b16 %v2998, %v2995
      %v3008 = vpack.c.b16 %v3002, %v2999
      %v3009 = vpack.c.b16 %v3003, %v3000
      %v3010 = vpack.c.b16 %v3004, %v3001
      %v3016 = vsel %vm1053, %v3007, 0
      %v3019 = vsel %vm1053, %v3010, 0
      %3021 = vmatprep.subr.bf16.mxu0 %v2925
      %3022 = vmatpush1.bf16.msra.mxu0 %v2924
      %3023 = vmatprep.subr.bf16.mxu0 %v2927
      %3024 = vmatpush1.bf16.msra.mxu0 %v2926
      %3025 = vmatprep.subr.bf16.mxu0 %v2929
      %3026 = vmatpush1.bf16.msra.mxu0 %v2928
      %3027 = vmatprep.subr.bf16.mxu0 %v2931
      %3028 = vmatpush1.bf16.msra.mxu0 %v2930
      %3029 = vmatprep.subr.bf16.mxu0 %v2933
      %3030 = vmatpush1.bf16.msra.mxu0 %v2932
      %3031 = vmatprep.subr.bf16.mxu0 %v2935
      %3032 = vmatpush1.bf16.msra.mxu0 %v2934
      %3033 = vmatprep.subr.bf16.mxu0 %v2937
      %3034 = vmatpush1.bf16.msra.mxu0 %v2936
      %3035 = vmatprep.subr.bf16.mxu0 %v2939
      %3036 = vmatpush1.bf16.msra.mxu0 %v2938
      %3037 = vmatprep.subr.bf16.mxu0 %v2941
      %3038 = vmatpush1.bf16.msra.mxu0 %v2940
      %3039 = vmatprep.subr.bf16.mxu0 %v2943
      %3040 = vmatpush1.bf16.msra.mxu0 %v2942
      %3041 = vmatprep.subr.bf16.mxu0 %v2945
      %3042 = vmatpush1.bf16.msra.mxu0 %v2944
      %3043 = vmatprep.subr.bf16.mxu0 %v2947
      %3044 = vmatpush1.bf16.msra.mxu0 %v2946
      %3045 = vmatprep.subr.bf16.mxu0 %v2949
      %3046 = vmatpush1.bf16.msra.mxu0 %v2948
      %3047 = vmatprep.subr.bf16.mxu0 %v2951
      %3048 = vmatpush1.bf16.msra.mxu0 %v2950
      %3049 = vmatprep.subr.bf16.mxu0 %v2953
      %3050 = vmatpush1.bf16.msra.mxu0 %v2952
      %3051 = vmatprep.subr.bf16.mxu0 %v2955
      %3052 = vmatpush1.bf16.msra.mxu0 %v2954
      %3053 = vmatprep.mubr.bf16.mxu0 %v3006
      %3054 = vmatmul.mubr.bf16.gmra.mrb[0].mxu0 %v3005
      %v3055 = vpop.f32.mrb[0].mxu0
      %v3056 = vadd.f32 %v2968, %v3055
      %v3057 = vpop.f32.mrb[0].mxu0
      %v3058 = vadd.f32 %v2968, %v3057
      %v3059 = vpop.f32.mrb[0].mxu0
      %v3060 = vadd.f32 %v2973, %v3059
      %v3061 = vpop.f32.mrb[0].mxu0
      %v3062 = vadd.f32 %v2973, %v3061
      %3063 = vmatprep.mubr.bf16.mxu0 %v3009
      %3064 = vmatmul.mubr.bf16.gmra.mrb[0].mxu0 %v3008
      %v3065 = vpop.f32.mrb[0].mxu0
      %v3066 = vadd.f32 %v2978, %v3065
      %v3067 = vpop.f32.mrb[0].mxu0
      %v3068 = vadd.f32 %v2978, %v3067
      %v3069 = vpop.f32.mrb[0].mxu0
      %v3070 = vadd.f32 %v2983, %v3069
      %v3071 = vpop.f32.mrb[0].mxu0
      %v3072 = vadd.f32 %v2983, %v3071
      %3073 = vdwg.mxu0
      %3074 = vmatprep.subr.bf16.mxu0 %v2957
      %3075 = vmatpush1.bf16.msra.mxu0 %v2956
      %3076 = vmatprep.subr.bf16.mxu0 %v2959
      %3077 = vmatpush1.bf16.msra.mxu0 %v2958
      %3078 = vmatprep.subr.bf16.mxu0 0
      %3079 = vmatpush1.bf16.msra.mxu0 0
      %3080 = vmatprep.subr.bf16.mxu0 0
      %3081 = vmatpush1.bf16.msra.mxu0 0
      %3082 = vmatprep.subr.bf16.mxu0 0
      %3083 = vmatpush1.bf16.msra.mxu0 0
      %3084 = vmatprep.subr.bf16.mxu0 0
      %3085 = vmatpush1.bf16.msra.mxu0 0
      %3086 = vmatprep.subr.bf16.mxu0 0
      %3087 = vmatpush1.bf16.msra.mxu0 0
      %3088 = vmatprep.subr.bf16.mxu0 0
      %3089 = vmatpush1.bf16.msra.mxu0 0
      %3090 = vmatprep.subr.bf16.mxu0 0
      %3091 = vmatpush1.bf16.msra.mxu0 0
      %3092 = vmatprep.subr.bf16.mxu0 0
      %3093 = vmatpush1.bf16.msra.mxu0 0
      %3094 = vmatprep.subr.bf16.mxu0 0
      %3095 = vmatpush1.bf16.msra.mxu0 0
      %3096 = vmatprep.subr.bf16.mxu0 0
      %3097 = vmatpush1.bf16.msra.mxu0 0
      %3098 = vmatprep.subr.bf16.mxu0 0
      %3099 = vmatpush1.bf16.msra.mxu0 0
      %3100 = vmatprep.subr.bf16.mxu0 0
      %3101 = vmatpush1.bf16.msra.mxu0 0
      %3102 = vmatprep.subr.bf16.mxu0 0
      %3103 = vmatpush1.bf16.msra.mxu0 0
      %3104 = vmatprep.subr.bf16.mxu0 0
      %3105 = vmatpush1.bf16.msra.mxu0 0
      %3106 = vmatprep.mubr.bf16.mxu0 0
      %3107 = vmatmul.mubr.bf16.gmra.mrb[0].mxu0 %v3016
      %v3108 = vpop.f32.mrb[0].mxu0
      %v3109 = vadd.f32 %v3056, %v3108
      %v3110 = vpop.f32.mrb[0].mxu0
      %v3111 = vadd.f32 %v3058, %v3110
      %v3112 = vpop.f32.mrb[0].mxu0
      %v3113 = vadd.f32 %v3060, %v3112
      %v3114 = vpop.f32.mrb[0].mxu0
      %v3115 = vadd.f32 %v3062, %v3114
      %3116 = vmatprep.mubr.bf16.mxu0 0
      %3117 = vmatmul.mubr.bf16.gmra.mrb[0].mxu0 %v3019
      %v3118 = vpop.f32.mrb[0].mxu0
      %v3119 = vadd.f32 %v3066, %v3118
      %v3120 = vpop.f32.mrb[0].mxu0
      %v3121 = vadd.f32 %v3068, %v3120
      %v3122 = vpop.f32.mrb[0].mxu0
      %v3123 = vadd.f32 %v3070, %v3122
      %v3124 = vpop.f32.mrb[0].mxu0
      %v3125 = vadd.f32 %v3072, %v3124
      %3126 = vdwg.mxu0
      %v3127 = vadd.f32 %v1148, %v3109
      %v3128 = vadd.f32 %v1150, %v3111
      %v3129 = vadd.f32 %v1152, %v3113
      %v3130 = vadd.f32 %v1154, %v3115
      %v3131 = vadd.f32 %v1158, %v3119
      %v3132 = vadd.f32 %v1160, %v3121
      %v3133 = vadd.f32 %v1162, %v3123
      %v3134 = vadd.f32 %v1164, %v3125
      %v3135 = vadd.f32 %v3127, %v3129
      %v3136 = vadd.f32 %v3135, %v3131
      %v3137 = vadd.f32 %v3136, %v3133
      %v3138 = vrot.slane %v3137, 4
      %v3139 = vadd.f32 %v3137, %v3138
      %v3140 = vrot.slane %v3139, 2
      %v3141 = vadd.f32 %v3139, %v3140
      %v3142 = vrot.slane %v3141, 1
      %v3143 = vadd.f32 %v3141, %v3142
      %v3144 = vadd.f32 %v3128, %v3130
      %v3145 = vadd.f32 %v3144, %v3132
      %v3146 = vadd.f32 %v3145, %v3134
      %v3147 = vrot.slane %v3146, 4
      %v3148 = vadd.f32 %v3146, %v3147
      %v3149 = vrot.slane %v3148, 2
      %v3150 = vadd.f32 %v3148, %v3149
      %v3151 = vrot.slane %v3150, 1
      %v3152 = vadd.f32 %v3150, %v3151
      %v3153 = vrcp.pop 32.0
      %v3154 = vmul.f32 %v3143, %v3153
      %v3155 = vmul.f32 %v3152, %v3153
      %v3156 = vsub.f32 %v3127, %v3154
      %v3157 = vsub.f32 %v3128, %v3155
      %v3158 = vsub.f32 %v3129, %v3154
      %v3159 = vsub.f32 %v3130, %v3155
      %v3160 = vsub.f32 %v3131, %v3154
      %v3161 = vsub.f32 %v3132, %v3155
      %v3162 = vsub.f32 %v3133, %v3154
      %v3163 = vsub.f32 %v3134, %v3155
      %v3164 = vmul.f32 %v3156, %v3156
      %v3165 = vmul.f32 %v3157, %v3157
      %v3166 = vmul.f32 %v3158, %v3158
      %v3167 = vmul.f32 %v3159, %v3159
      %v3168 = vmul.f32 %v3160, %v3160
      %v3169 = vmul.f32 %v3161, %v3161
      %v3170 = vmul.f32 %v3162, %v3162
      %v3171 = vmul.f32 %v3163, %v3163
      %v3172 = vadd.f32 %v3164, %v3166
      %v3173 = vadd.f32 %v3172, %v3168
      %v3174 = vadd.f32 %v3173, %v3170
      %v3175 = vrot.slane %v3174, 4
      %v3176 = vadd.f32 %v3174, %v3175
      %v3177 = vrot.slane %v3176, 2
      %v3178 = vadd.f32 %v3176, %v3177
      %v3179 = vrot.slane %v3178, 1
      %v3180 = vadd.f32 %v3178, %v3179
      %v3181 = vadd.f32 %v3165, %v3167
      %v3182 = vadd.f32 %v3181, %v3169
      %v3183 = vadd.f32 %v3182, %v3171
      %v3184 = vrot.slane %v3183, 4
      %v3185 = vadd.f32 %v3183, %v3184
      %v3186 = vrot.slane %v3185, 2
      %v3187 = vadd.f32 %v3185, %v3186
      %v3188 = vrot.slane %v3187, 1
      %v3189 = vadd.f32 %v3187, %v3188
      %v3190 = vmul.f32 %v3180, %v3153
      %v3191 = vmul.f32 %v3189, %v3153
      %v3192 = vadd.f32 %v3190, 1e-05
      %v3193 = vadd.f32 %v3191, 1e-05
      %v3194 = vrsqrt.pop %v3192
      %v3195 = vrsqrt.pop %v3193
      %v3196 = vmul.f32 %v3156, %v3194
      %v3197 = vmul.f32 %v3157, %v3195
      %v3198 = vmul.f32 %v3158, %v3194
      %v3199 = vmul.f32 %v3159, %v3195
      %v3200 = vmul.f32 %v3160, %v3194
      %v3201 = vmul.f32 %v3161, %v3195
      %v3202 = vmul.f32 %v3162, %v3194
      %v3203 = vmul.f32 %v3163, %v3195
      %s3204 = scalar_lea.vmem %s8, 96
      %v3205 = vld [vmem:[%s3204] sm:$0xff]
      %v3206 = vld [vmem:[%s3204 + $0x8] sm:$0xff]
      %v3207 = vld [vmem:[%s3204 + $0x10] sm:$0xff]
      %v3208 = vld [vmem:[%s3204 + $0x18] sm:$0xff]
      %3210 = vset.pattern.permute.xlu0 0
      %3211 = vperm.xlu0 %3210, %v3205
      %v3212 = vpop.permute.xlu0 %3211
      %3215 = vset.pattern.permute.xlu0 0
      %3216 = vperm.xlu0 %3215, %v3206
      %v3217 = vpop.permute.xlu0 %3216
      %3220 = vset.pattern.permute.xlu0 0
      %3221 = vperm.xlu0 %3220, %v3207
      %v3222 = vpop.permute.xlu0 %3221
      %3225 = vset.pattern.permute.xlu0 0
      %3226 = vperm.xlu0 %3225, %v3208
      %v3227 = vpop.permute.xlu0 %3226
      %v3229 = vmul.f32 %v3196, %v3212
      %v3230 = vmul.f32 %v3197, %v3212
      %v3231 = vmul.f32 %v3198, %v3217
      %v3232 = vmul.f32 %v3199, %v3217
      %v3233 = vmul.f32 %v3200, %v3222
      %v3234 = vmul.f32 %v3201, %v3222
      %v3235 = vmul.f32 %v3202, %v3227
      %v3236 = vmul.f32 %v3203, %v3227
      %s3237 = scalar_lea.vmem %s9, 96
      %v3238 = vld [vmem:[%s3237] sm:$0xff]
      %v3239 = vld [vmem:[%s3237 + $0x8] sm:$0xff]
      %v3240 = vld [vmem:[%s3237 + $0x10] sm:$0xff]
      %v3241 = vld [vmem:[%s3237 + $0x18] sm:$0xff]
      %3243 = vset.pattern.permute.xlu0 0
      %3244 = vperm.xlu0 %3243, %v3238
      %v3245 = vpop.permute.xlu0 %3244
      %3248 = vset.pattern.permute.xlu0 0
      %3249 = vperm.xlu0 %3248, %v3239
      %v3250 = vpop.permute.xlu0 %3249
      %3253 = vset.pattern.permute.xlu0 0
      %3254 = vperm.xlu0 %3253, %v3240
      %v3255 = vpop.permute.xlu0 %3254
      %3258 = vset.pattern.permute.xlu0 0
      %3259 = vperm.xlu0 %3258, %v3241
      %v3260 = vpop.permute.xlu0 %3259
      %v3262 = vadd.f32 %v3229, %v3245
      %v3263 = vadd.f32 %v3230, %v3245
      %v3264 = vadd.f32 %v3231, %v3250
      %v3265 = vadd.f32 %v3232, %v3250
      %v3266 = vadd.f32 %v3233, %v3255
      %v3267 = vadd.f32 %v3234, %v3255
      %v3268 = vadd.f32 %v3235, %v3260
      %v3269 = vadd.f32 %v3236, %v3260
      %v3270 = vld [vmem:[%s10] sm:$0xf]
      %v3271 = vld [vmem:[%s10 + $0x4] sm:$0xf]
      %v3272 = vld [vmem:[%s10 + $0x8] sm:$0xf]
      %v3273 = vld [vmem:[%s10 + $0xc] sm:$0xf]
      %v3274 = vpack.c.bf16 %v3264, %v3262
      %v3275 = vpack.c.bf16 %v3265, %v3263
      %v3276 = vpack.c.bf16 %v3268, %v3266
      %v3277 = vpack.c.bf16 %v3269, %v3267
      %v3278 = vld [vmem:[%s11] sm:$0xff]
      %v3279 = vld [vmem:[%s11 + $0x8] sm:$0xff]
      %v3280 = vld [vmem:[%s11 + $0x10] sm:$0xff]
      %v3281 = vld [vmem:[%s11 + $0x18] sm:$0xff]
      %3283 = vset.pattern.permute.xlu0 0
      %3284 = vperm.xlu0 %3283, %v3278
      %v3285 = vpop.permute.xlu0 %3284
      %3288 = vset.pattern.permute.xlu0 0
      %3289 = vperm.xlu0 %3288, %v3279
      %v3290 = vpop.permute.xlu0 %3289
      %3293 = vset.pattern.permute.xlu0 0
      %3294 = vperm.xlu0 %3293, %v3280
      %v3295 = vpop.permute.xlu0 %3294
      %3298 = vset.pattern.permute.xlu0 0
      %3299 = vperm.xlu0 %3298, %v3281
      %v3300 = vpop.permute.xlu0 %3299
      %v3306 = vunpack.c.l.b16 %v3270
      %v3307 = vunpack.c.l.b16 %v3271
      %v3308 = vunpack.c.l.b16 %v3272
      %v3309 = vunpack.c.l.b16 %v3273
      %v3310 = vpack.c.b16 %v3307, %v3306
      %v3311 = vpack.c.b16 %v3309, %v3308
      %v3313 = vsel %vm1053, %v3310, 0
      %v3316 = vsel %vm1053, %v3311, 0
      %3318 = vmatprep.subr.bf16.mxu0 %v3275
      %3319 = vmatpush1.bf16.msra.mxu0 %v3274
      %3320 = vmatprep.subr.bf16.mxu0 %v3277
      %3321 = vmatpush1.bf16.msra.mxu0 %v3276
      %3322 = vmatprep.subr.bf16.mxu0 0
      %3323 = vmatpush1.bf16.msra.mxu0 0
      %3324 = vmatprep.subr.bf16.mxu0 0
      %3325 = vmatpush1.bf16.msra.mxu0 0
      %3326 = vmatprep.subr.bf16.mxu0 0
      %3327 = vmatpush1.bf16.msra.mxu0 0
      %3328 = vmatprep.subr.bf16.mxu0 0
      %3329 = vmatpush1.bf16.msra.mxu0 0
      %3330 = vmatprep.subr.bf16.mxu0 0
      %3331 = vmatpush1.bf16.msra.mxu0 0
      %3332 = vmatprep.subr.bf16.mxu0 0
      %3333 = vmatpush1.bf16.msra.mxu0 0
      %3334 = vmatprep.subr.bf16.mxu0 0
      %3335 = vmatpush1.bf16.msra.mxu0 0
      %3336 = vmatprep.subr.bf16.mxu0 0
      %3337 = vmatpush1.bf16.msra.mxu0 0
      %3338 = vmatprep.subr.bf16.mxu0 0
      %3339 = vmatpush1.bf16.msra.mxu0 0
      %3340 = vmatprep.subr.bf16.mxu0 0
      %3341 = vmatpush1.bf16.msra.mxu0 0
      %3342 = vmatprep.subr.bf16.mxu0 0
      %3343 = vmatpush1.bf16.msra.mxu0 0
      %3344 = vmatprep.subr.bf16.mxu0 0
      %3345 = vmatpush1.bf16.msra.mxu0 0
      %3346 = vmatprep.subr.bf16.mxu0 0
      %3347 = vmatpush1.bf16.msra.mxu0 0
      %3348 = vmatprep.subr.bf16.mxu0 0
      %3349 = vmatpush1.bf16.msra.mxu0 0
      %3350 = vmatprep.mubr.bf16.mxu0 0
      %3351 = vmatmul.mubr.bf16.gmra.mrb[0].mxu0 %v3313
      %v3352 = vpop.f32.mrb[0].mxu0
      %v3353 = vadd.f32 %v3285, %v3352
      %v3354 = vpop.f32.mrb[0].mxu0
      %v3355 = vadd.f32 %v3285, %v3354
      %v3356 = vpop.f32.mrb[0].mxu0
      %v3357 = vadd.f32 %v3290, %v3356
      %v3358 = vpop.f32.mrb[0].mxu0
      %v3359 = vadd.f32 %v3290, %v3358
      %3360 = vmatprep.mubr.bf16.mxu0 0
      %3361 = vmatmul.mubr.bf16.gmra.mrb[0].mxu0 %v3316
      %v3362 = vpop.f32.mrb[0].mxu0
      %v3363 = vadd.f32 %v3295, %v3362
      %v3364 = vpop.f32.mrb[0].mxu0
      %v3365 = vadd.f32 %v3295, %v3364
      %v3366 = vpop.f32.mrb[0].mxu0
      %v3367 = vadd.f32 %v3300, %v3366
      %v3368 = vpop.f32.mrb[0].mxu0
      %v3369 = vadd.f32 %v3300, %v3368
      %3370 = vdwg.mxu0
      %v3371 = vpack.c.bf16 %v3357, %v3353
      %v3372 = vpack.c.bf16 %v3359, %v3355
      %v3373 = vpack.c.bf16 %v3367, %v3363
      %v3374 = vpack.c.bf16 %v3369, %v3365
      %v3376 = vsel %vm1053, %v539, 0
      %3378 = vmatprep.subr.bf16.mxu0 %v3372
      %3379 = vmatpush1.bf16.msra.mxu0 %v3371
      %3380 = vmatprep.subr.bf16.mxu0 %v3374
      %3381 = vmatpush1.bf16.msra.mxu0 %v3373
      %3382 = vmatprep.subr.bf16.mxu0 0
      %3383 = vmatpush1.bf16.msra.mxu0 0
      %3384 = vmatprep.subr.bf16.mxu0 0
      %3385 = vmatpush1.bf16.msra.mxu0 0
      %3386 = vmatprep.subr.bf16.mxu0 0
      %3387 = vmatpush1.bf16.msra.mxu0 0
      %3388 = vmatprep.subr.bf16.mxu0 0
      %3389 = vmatpush1.bf16.msra.mxu0 0
      %3390 = vmatprep.subr.bf16.mxu0 0
      %3391 = vmatpush1.bf16.msra.mxu0 0
      %3392 = vmatprep.subr.bf16.mxu0 0
      %3393 = vmatpush1.bf16.msra.mxu0 0
      %3394 = vmatprep.subr.bf16.mxu0 0
      %3395 = vmatpush1.bf16.msra.mxu0 0
      %3396 = vmatprep.subr.bf16.mxu0 0
      %3397 = vmatpush1.bf16.msra.mxu0 0
      %3398 = vmatprep.subr.bf16.mxu0 0
      %3399 = vmatpush1.bf16.msra.mxu0 0
      %3400 = vmatprep.subr.bf16.mxu0 0
      %3401 = vmatpush1.bf16.msra.mxu0 0
      %3402 = vmatprep.subr.bf16.mxu0 0
      %3403 = vmatpush1.bf16.msra.mxu0 0
      %3404 = vmatprep.subr.bf16.mxu0 0
      %3405 = vmatpush1.bf16.msra.mxu0 0
      %3406 = vmatprep.subr.bf16.mxu0 0
      %3407 = vmatpush1.bf16.msra.mxu0 0
      %3408 = vmatprep.subr.bf16.mxu0 0
      %3409 = vmatpush1.bf16.msra.mxu0 0
      %3410 = vmatprep.mubr.bf16.mxu0 0
      %3411 = vmatmul.mubr.bf16.gmra.mrb[0].mxu0 %v3376
      %v3412 = vpop.f32.mrb[0].mxu0
      %v3413 = vadd.f32 0.0, %v3412
      %v3414 = vpop.f32.mrb[0].mxu0
      %v3415 = vadd.f32 0.0, %v3414
      %v3416 = vpop.f32.mrb[0].mxu0
      %v3417 = vpop.f32.mrb[0].mxu0
      %3418 = vdwg.mxu0
      %v3419 = vrot.slane %v3413, 4
      %v3420 = vmax.f32 %v3413, %v3419
      %v3421 = vrot.slane %v3420, 2
      %v3422 = vmax.f32 %v3420, %v3421
      %v3423 = vrot.slane %v3422, 1
      %v3424 = vmax.f32 %v3422, %v3423
      %v3425 = vrot.slane %v3415, 4
      %v3426 = vmax.f32 %v3415, %v3425
      %v3427 = vrot.slane %v3426, 2
      %v3428 = vmax.f32 %v3426, %v3427
      %v3429 = vrot.slane %v3428, 1
      %v3430 = vmax.f32 %v3428, %v3429
      %v3431 = vsub.f32 %v3413, %v3424
      %v3432 = vsub.f32 %v3415, %v3430
      %v3433 = vmul.f32 %v3431, 1.442695
      %v3434 = vpow.pop %v3433
      %v3435 = vmul.f32 %v3432, 1.442695
      %v3436 = vpow.pop %v3435
      %v3437 = vrot.slane %v3434, 4
      %v3438 = vadd.f32 %v3434, %v3437
      %v3439 = vrot.slane %v3438, 2
      %v3440 = vadd.f32 %v3438, %v3439
      %v3441 = vrot.slane %v3440, 1
      %v3442 = vadd.f32 %v3440, %v3441
      %v3443 = vrot.slane %v3436, 4
      %v3444 = vadd.f32 %v3436, %v3443
      %v3445 = vrot.slane %v3444, 2
      %v3446 = vadd.f32 %v3444, %v3445
      %v3447 = vrot.slane %v3446, 1
      %v3448 = vadd.f32 %v3446, %v3447
      %v3449 = vpack.c.bf16 %v3434, %v3434
      %v3450 = vpack.c.bf16 %v3436, %v3436
      %vm3451 = vcmask 64512
      %v3453 = vsel %vm3451, %v544, 0
      %v3456 = vsel %vm3451, %v545, 0
      %vm3458 = vcmask 1043456
      %v3460 = vsel %vm3458, %v3449, 0
      %v3463 = vsel %vm3458, %v3450, 0
      %3465 = vmatprep.subr.bf16.mxu0 %v3463
      %3466 = vmatpush1.bf16.msra.mxu0 %v3460
      %3467 = vmatprep.subr.bf16.mxu0 0
      %3468 = vmatpush1.bf16.msra.mxu0 0
      %3469 = vmatprep.subr.bf16.mxu0 0
      %3470 = vmatpush1.bf16.msra.mxu0 0
      %3471 = vmatprep.subr.bf16.mxu0 0
      %3472 = vmatpush1.bf16.msra.mxu0 0
      %3473 = vmatprep.subr.bf16.mxu0 0
      %3474 = vmatpush1.bf16.msra.mxu0 0
      %3475 = vmatprep.subr.bf16.mxu0 0
      %3476 = vmatpush1.bf16.msra.mxu0 0
      %3477 = vmatprep.subr.bf16.mxu0 0
      %3478 = vmatpush1.bf16.msra.mxu0 0
      %3479 = vmatprep.subr.bf16.mxu0 0
      %3480 = vmatpush1.bf16.msra.mxu0 0
      %3481 = vmatprep.subr.bf16.mxu0 0
      %3482 = vmatpush1.bf16.msra.mxu0 0
      %3483 = vmatprep.subr.bf16.mxu0 0
      %3484 = vmatpush1.bf16.msra.mxu0 0
      %3485 = vmatprep.subr.bf16.mxu0 0
      %3486 = vmatpush1.bf16.msra.mxu0 0
      %3487 = vmatprep.subr.bf16.mxu0 0
      %3488 = vmatpush1.bf16.msra.mxu0 0
      %3489 = vmatprep.subr.bf16.mxu0 0
      %3490 = vmatpush1.bf16.msra.mxu0 0
      %3491 = vmatprep.subr.bf16.mxu0 0
      %3492 = vmatpush1.bf16.msra.mxu0 0
      %3493 = vmatprep.subr.bf16.mxu0 0
      %3494 = vmatpush1.bf16.msra.mxu0 0
      %3495 = vmatprep.subr.bf16.mxu0 0
      %3496 = vmatpush1.bf16.msra.mxu0 0
      %3497 = vmatprep.mubr.bf16.mxu0 0
      %3498 = vmatmul.mubr.bf16.gmra.mrb[0].mxu0 %v3453
      %v3499 = vpop.f32.mrb[0].mxu0
      %v3500 = vadd.f32 0.0, %v3499
      %v3501 = vpop.f32.mrb[0].mxu0
      %v3502 = vadd.f32 0.0, %v3501
      %v3503 = vpop.f32.mrb[0].mxu0
      %v3504 = vadd.f32 0.0, %v3503
      %v3505 = vpop.f32.mrb[0].mxu0
      %v3506 = vadd.f32 0.0, %v3505
      %3507 = vmatprep.mubr.bf16.mxu0 0
      %3508 = vmatmul.mubr.bf16.gmra.mrb[0].mxu0 %v3456
      %v3509 = vpop.f32.mrb[0].mxu0
      %v3510 = vadd.f32 0.0, %v3509
      %v3511 = vpop.f32.mrb[0].mxu0
      %v3512 = vadd.f32 0.0, %v3511
      %v3513 = vpop.f32.mrb[0].mxu0
      %v3514 = vadd.f32 0.0, %v3513
      %v3515 = vpop.f32.mrb[0].mxu0
      %v3516 = vadd.f32 0.0, %v3515
      %3517 = vdwg.mxu0
      %v3518 = vrcp.pop %v3442
      %v3519 = vrcp.pop %v3448
      %v3520 = vmul.f32 %v3500, %v3518
      %v3521 = vmul.f32 %v3502, %v3519
      %v3522 = vmul.f32 %v3504, %v3518
      %v3523 = vmul.f32 %v3506, %v3519
      %v3524 = vmul.f32 %v3510, %v3518
      %v3525 = vmul.f32 %v3512, %v3519
      %v3526 = vmul.f32 %v3514, %v3518
      %v3527 = vmul.f32 %v3516, %v3519
      %v3528 = vld [vmem:[%s12] sm:$0xf]
      %v3529 = vld [vmem:[%s12 + $0x4] sm:$0xf]
      %v3530 = vld [vmem:[%s12 + $0x8] sm:$0xf]
      %v3531 = vld [vmem:[%s12 + $0xc] sm:$0xf]
      %v3532 = vpack.c.bf16 %v3522, %v3520
      %v3533 = vpack.c.bf16 %v3523, %v3521
      %v3534 = vpack.c.bf16 %v3526, %v3524
      %v3535 = vpack.c.bf16 %v3527, %v3525
      %v3540 = vunpack.c.l.b16 %v3528
      %v3541 = vunpack.c.l.b16 %v3529
      %v3542 = vunpack.c.l.b16 %v3530
      %v3543 = vunpack.c.l.b16 %v3531
      %v3544 = vpack.c.b16 %v3541, %v3540
      %v3545 = vpack.c.b16 %v3543, %v3542
      %v3547 = vsel %vm1053, %v3544, 0
      %v3550 = vsel %vm1053, %v3545, 0
      %3552 = vmatprep.subr.bf16.mxu0 %v3533
      %3553 = vmatpush1.bf16.msra.mxu0 %v3532
      %3554 = vmatprep.subr.bf16.mxu0 %v3535
      %3555 = vmatpush1.bf16.msra.mxu0 %v3534
      %3556 = vmatprep.subr.bf16.mxu0 0
      %3557 = vmatpush1.bf16.msra.mxu0 0
      %3558 = vmatprep.subr.bf16.mxu0 0
      %3559 = vmatpush1.bf16.msra.mxu0 0
      %3560 = vmatprep.subr.bf16.mxu0 0
      %3561 = vmatpush1.bf16.msra.mxu0 0
      %3562 = vmatprep.subr.bf16.mxu0 0
      %3563 = vmatpush1.bf16.msra.mxu0 0
      %3564 = vmatprep.subr.bf16.mxu0 0
      %3565 = vmatpush1.bf16.msra.mxu0 0
      %3566 = vmatprep.subr.bf16.mxu0 0
      %3567 = vmatpush1.bf16.msra.mxu0 0
      %3568 = vmatprep.subr.bf16.mxu0 0
      %3569 = vmatpush1.bf16.msra.mxu0 0
      %3570 = vmatprep.subr.bf16.mxu0 0
      %3571 = vmatpush1.bf16.msra.mxu0 0
      %3572 = vmatprep.subr.bf16.mxu0 0
      %3573 = vmatpush1.bf16.msra.mxu0 0
      %3574 = vmatprep.subr.bf16.mxu0 0
      %3575 = vmatpush1.bf16.msra.mxu0 0
      %3576 = vmatprep.subr.bf16.mxu0 0
      %3577 = vmatpush1.bf16.msra.mxu0 0
      %3578 = vmatprep.subr.bf16.mxu0 0
      %3579 = vmatpush1.bf16.msra.mxu0 0
      %3580 = vmatprep.subr.bf16.mxu0 0
      %3581 = vmatpush1.bf16.msra.mxu0 0
      %3582 = vmatprep.subr.bf16.mxu0 0
      %3583 = vmatpush1.bf16.msra.mxu0 0
      %3584 = vmatprep.mubr.bf16.mxu0 0
      %3585 = vmatmul.mubr.bf16.gmra.mrb[0].mxu0 %v3547
      %v3586 = vpop.f32.mrb[0].mxu0
      %v3587 = vadd.f32 0.0, %v3586
      %v3588 = vpop.f32.mrb[0].mxu0
      %v3589 = vadd.f32 0.0, %v3588
      %v3590 = vpop.f32.mrb[0].mxu0
      %v3591 = vadd.f32 0.0, %v3590
      %v3592 = vpop.f32.mrb[0].mxu0
      %v3593 = vadd.f32 0.0, %v3592
      %3594 = vmatprep.mubr.bf16.mxu0 0
      %3595 = vmatmul.mubr.bf16.gmra.mrb[0].mxu0 %v3550
      %v3596 = vpop.f32.mrb[0].mxu0
      %v3597 = vadd.f32 0.0, %v3596
      %v3598 = vpop.f32.mrb[0].mxu0
      %v3599 = vadd.f32 0.0, %v3598
      %v3600 = vpop.f32.mrb[0].mxu0
      %v3601 = vadd.f32 0.0, %v3600
      %v3602 = vpop.f32.mrb[0].mxu0
      %v3603 = vadd.f32 0.0, %v3602
      %3604 = vdwg.mxu0
      %v3605 = vadd.f32 %v3127, %v3587
      %v3606 = vadd.f32 %v3128, %v3589
      %v3607 = vadd.f32 %v3129, %v3591
      %v3608 = vadd.f32 %v3130, %v3593
      %v3609 = vadd.f32 %v3131, %v3597
      %v3610 = vadd.f32 %v3132, %v3599
      %v3611 = vadd.f32 %v3133, %v3601
      %v3612 = vadd.f32 %v3134, %v3603
      %v3613 = vld [vmem:[%s13] sm:$0xff]
      %v3614 = vld [vmem:[%s13 + $0x8] sm:$0xff]
      %v3615 = vld [vmem:[%s13 + $0x10] sm:$0xff]
      %v3616 = vld [vmem:[%s13 + $0x18] sm:$0xff]
      %3618 = vset.pattern.permute.xlu0 0
      %3619 = vperm.xlu0 %3618, %v3613
      %v3620 = vpop.permute.xlu0 %3619
      %3623 = vset.pattern.permute.xlu0 0
      %3624 = vperm.xlu0 %3623, %v3614
      %v3625 = vpop.permute.xlu0 %3624
      %3628 = vset.pattern.permute.xlu0 0
      %3629 = vperm.xlu0 %3628, %v3615
      %v3630 = vpop.permute.xlu0 %3629
      %3633 = vset.pattern.permute.xlu0 0
      %3634 = vperm.xlu0 %3633, %v3616
      %v3635 = vpop.permute.xlu0 %3634
      %v3637 = vadd.f32 %v3605, %v3620
      %v3638 = vadd.f32 %v3606, %v3620
      %v3639 = vadd.f32 %v3607, %v3625
      %v3640 = vadd.f32 %v3608, %v3625
      %v3641 = vadd.f32 %v3609, %v3630
      %v3642 = vadd.f32 %v3610, %v3630
      %v3643 = vadd.f32 %v3611, %v3635
      %v3644 = vadd.f32 %v3612, %v3635
      %v3645 = vadd.f32 %v3637, %v3638
      %3646 = vadd.xlane.f32.xlu0 %v3645
      %v3647 = vpop.xlane.xlu0 %3646
      %v3648 = vadd.f32 %v3639, %v3640
      %3649 = vadd.xlane.f32.xlu0 %v3648
      %v3650 = vpop.xlane.xlu0 %3649
      %v3651 = vadd.f32 %v3641, %v3642
      %3652 = vadd.xlane.f32.xlu0 %v3651
      %v3653 = vpop.xlane.xlu0 %3652
      %v3654 = vadd.f32 %v3643, %v3644
      %3655 = vadd.xlane.f32.xlu0 %v3654
      %v3656 = vpop.xlane.xlu0 %3655
      %v3657 = vmul.f32 %v3637, %v3637
      %v3658 = vmul.f32 %v3638, %v3638
      %v3659 = vmul.f32 %v3639, %v3639
      %v3660 = vmul.f32 %v3640, %v3640
      %v3661 = vmul.f32 %v3641, %v3641
      %v3662 = vmul.f32 %v3642, %v3642
      %v3663 = vmul.f32 %v3643, %v3643
      %v3664 = vmul.f32 %v3644, %v3644
      %v3665 = vadd.f32 %v3657, %v3658
      %3666 = vadd.xlane.f32.xlu0 %v3665
      %v3667 = vpop.xlane.xlu0 %3666
      %v3668 = vadd.f32 %v3659, %v3660
      %3669 = vadd.xlane.f32.xlu0 %v3668
      %v3670 = vpop.xlane.xlu0 %3669
      %v3671 = vadd.f32 %v3661, %v3662
      %3672 = vadd.xlane.f32.xlu0 %v3671
      %v3673 = vpop.xlane.xlu0 %3672
      %v3674 = vadd.f32 %v3663, %v3664
      %3675 = vadd.xlane.f32.xlu0 %v3674
      %v3676 = vpop.xlane.xlu0 %3675
      %v3677 = vld [vmem:[%s7] sm:$0xff]
      %v3678 = vld [vmem:[%s7 + $0x8] sm:$0xff]
      %v3679 = vld [vmem:[%s7 + $0x10] sm:$0xff]
      %v3680 = vld [vmem:[%s7 + $0x18] sm:$0xff]
      %v3681 = vld [vmem:[%s7 + $0x20] sm:$0xff]
      %v3682 = vld [vmem:[%s7 + $0x28] sm:$0xff]
      %v3683 = vld [vmem:[%s7 + $0x30] sm:$0xff]
      %v3684 = vld [vmem:[%s7 + $0x38] sm:$0xff]
      %v3686 = vsel %vm1206, %v3677, 0
      %v3689 = vsel %vm1206, %v3678, 0
      %v3692 = vsel %vm1206, %v3679, 0
      %v3695 = vsel %vm1206, %v3680, 0
      %v3698 = vsel %vm1206, %v3681, 0
      %v3701 = vsel %vm1206, %v3682, 0
      %v3704 = vsel %vm1206, %v3683, 0
      %v3707 = vsel %vm1206, %v3684, 0
      %3709 = vmatprep.subr.mxu0 0.0
      %3710 = vmatpush1.msra.mxu0 %v3647
      %3711 = vmatprep.subr.mxu0 0.0
      %3712 = vmatpush1.msra.mxu0 %v3650
      %3713 = vmatprep.subr.mxu0 0.0
      %3714 = vmatpush1.msra.mxu0 %v3653
      %3715 = vmatprep.subr.mxu0 0.0
      %3716 = vmatpush1.msra.mxu0 %v3656
      %3717 = vmatprep.subr.mxu0 0.0
      %3718 = vmatpush1.msra.mxu0 %v3667
      %3719 = vmatprep.subr.mxu0 0.0
      %3720 = vmatpush1.msra.mxu0 %v3670
      %3721 = vmatprep.subr.mxu0 0.0
      %3722 = vmatpush1.msra.mxu0 %v3673
      %3723 = vmatprep.subr.mxu0 0.0
      %3724 = vmatpush1.msra.mxu0 %v3676
      %3725 = vmatprep.subr.mxu0 0.0
      %3726 = vmatpush1.msra.mxu0 0.0
      %3727 = vmatprep.subr.mxu0 0.0
      %3728 = vmatpush1.msra.mxu0 0.0
      %3729 = vmatprep.subr.mxu0 0.0
      %3730 = vmatpush1.msra.mxu0 0.0
      %3731 = vmatprep.subr.mxu0 0.0
      %3732 = vmatpush1.msra.mxu0 0.0
      %3733 = vmatprep.subr.mxu0 0.0
      %3734 = vmatpush1.msra.mxu0 0.0
      %3735 = vmatprep.subr.mxu0 0.0
      %3736 = vmatpush1.msra.mxu0 0.0
      %3737 = vmatprep.subr.mxu0 0.0
      %3738 = vmatpush1.msra.mxu0 0.0
      %3739 = vmatprep.subr.mxu0 0.0
      %3740 = vmatpush1.msra.mxu0 0.0
      %3741 = vmatprep.subr.mxu0 0.0
      %3742 = vmatpush1.msra.mxu0 0.0
      %3743 = vmatprep.subr.mxu0 0.0
      %3744 = vmatpush1.msra.mxu0 0.0
      %3745 = vmatprep.subr.mxu0 0.0
      %3746 = vmatpush1.msra.mxu0 0.0
      %3747 = vmatprep.subr.mxu0 0.0
      %3748 = vmatpush1.msra.mxu0 0.0
      %3749 = vmatprep.subr.mxu0 0.0
      %3750 = vmatpush1.msra.mxu0 0.0
      %3751 = vmatprep.subr.mxu0 0.0
      %3752 = vmatpush1.msra.mxu0 0.0
      %3753 = vmatprep.subr.mxu0 0.0
      %3754 = vmatpush1.msra.mxu0 0.0
      %3755 = vmatprep.subr.mxu0 0.0
      %3756 = vmatpush1.msra.mxu0 0.0
      %3757 = vmatprep.subr.mxu0 0.0
      %3758 = vmatpush1.msra.mxu0 0.0
      %3759 = vmatprep.subr.mxu0 0.0
      %3760 = vmatpush1.msra.mxu0 0.0
      %3761 = vmatprep.subr.mxu0 0.0
      %3762 = vmatpush1.msra.mxu0 0.0
      %3763 = vmatprep.subr.mxu0 0.0
      %3764 = vmatpush1.msra.mxu0 0.0
      %3765 = vmatprep.subr.mxu0 0.0
      %3766 = vmatpush1.msra.mxu0 0.0
      %3767 = vmatprep.subr.mxu0 0.0
      %3768 = vmatpush1.msra.mxu0 0.0
      %3769 = vmatprep.subr.mxu0 0.0
      %3770 = vmatpush1.msra.mxu0 0.0
      %3771 = vmatprep.subr.mxu0 0.0
      %3772 = vmatpush1.msra.mxu0 0.0
      %3773 = vmatprep.mubr.f32.mxu0 0.0
      %3774 = vmatmul.mubr.f32.gmra.mrb[0].mxu0 %v3686
      %v3775 = vpop.f32.mrb[0].mxu0
      %v3776 = vadd.f32 0.0, %v3775
      %v3777 = vpop.f32.mrb[0].mxu0
      %3778 = vmatprep.mubr.f32.mxu0 0.0
      %3779 = vmatmul.mubr.f32.gmra.mrb[0].mxu0 %v3689
      %v3780 = vpop.f32.mrb[0].mxu0
      %v3781 = vadd.f32 0.0, %v3780
      %v3782 = vpop.f32.mrb[0].mxu0
      %3783 = vmatprep.mubr.f32.mxu0 0.0
      %3784 = vmatmul.mubr.f32.gmra.mrb[0].mxu0 %v3692
      %v3785 = vpop.f32.mrb[0].mxu0
      %v3786 = vadd.f32 0.0, %v3785
      %v3787 = vpop.f32.mrb[0].mxu0
      %3788 = vmatprep.mubr.f32.mxu0 0.0
      %3789 = vmatmul.mubr.f32.gmra.mrb[0].mxu0 %v3695
      %v3790 = vpop.f32.mrb[0].mxu0
      %v3791 = vadd.f32 0.0, %v3790
      %v3792 = vpop.f32.mrb[0].mxu0
      %3793 = vmatprep.mubr.f32.mxu0 0.0
      %3794 = vmatmul.mubr.f32.gmra.mrb[0].mxu0 %v3698
      %v3795 = vpop.f32.mrb[0].mxu0
      %v3796 = vadd.f32 0.0, %v3795
      %v3797 = vpop.f32.mrb[0].mxu0
      %3798 = vmatprep.mubr.f32.mxu0 0.0
      %3799 = vmatmul.mubr.f32.gmra.mrb[0].mxu0 %v3701
      %v3800 = vpop.f32.mrb[0].mxu0
      %v3801 = vadd.f32 0.0, %v3800
      %v3802 = vpop.f32.mrb[0].mxu0
      %3803 = vmatprep.mubr.f32.mxu0 0.0
      %3804 = vmatmul.mubr.f32.gmra.mrb[0].mxu0 %v3704
      %v3805 = vpop.f32.mrb[0].mxu0
      %v3806 = vadd.f32 0.0, %v3805
      %v3807 = vpop.f32.mrb[0].mxu0
      %3808 = vmatprep.mubr.f32.mxu0 0.0
      %3809 = vmatmul.mubr.f32.gmra.mrb[0].mxu0 %v3707
      %v3810 = vpop.f32.mrb[0].mxu0
      %v3811 = vadd.f32 0.0, %v3810
      %v3812 = vpop.f32.mrb[0].mxu0
      %3813 = vdwg.mxu0
      %v3814 = vmul.f32 %v3776, %v3776
      %v3815 = vmul.f32 %v3781, %v3781
      %v3816 = vmul.f32 %v3786, %v3786
      %v3817 = vmul.f32 %v3791, %v3791
      %v3818 = vsub.f32 %v3796, %v3814
      %v3819 = vsub.f32 %v3801, %v3815
      %v3820 = vsub.f32 %v3806, %v3816
      %v3821 = vsub.f32 %v3811, %v3817
      %3823 = vset.pattern.permute.xlu0 0
      %3824 = vperm.xlu0 %3823, %v3776
      %v3825 = vpop.permute.xlu0 %3824
      %3828 = vset.pattern.permute.xlu0 0
      %3829 = vperm.xlu0 %3828, %v3781
      %v3830 = vpop.permute.xlu0 %3829
      %3833 = vset.pattern.permute.xlu0 0
      %3834 = vperm.xlu0 %3833, %v3786
      %v3835 = vpop.permute.xlu0 %3834
      %3838 = vset.pattern.permute.xlu0 0
      %3839 = vperm.xlu0 %3838, %v3791
      %v3840 = vpop.permute.xlu0 %3839
      %v3842 = vsub.f32 %v3637, %v3825
      %v3843 = vsub.f32 %v3638, %v3825
      %v3844 = vsub.f32 %v3639, %v3830
      %v3845 = vsub.f32 %v3640, %v3830
      %v3846 = vsub.f32 %v3641, %v3835
      %v3847 = vsub.f32 %v3642, %v3835
      %v3848 = vsub.f32 %v3643, %v3840
      %v3849 = vsub.f32 %v3644, %v3840
      %v3850 = vadd.f32 %v3818, 1e-05
      %v3851 = vadd.f32 %v3819, 1e-05
      %v3852 = vadd.f32 %v3820, 1e-05
      %v3853 = vadd.f32 %v3821, 1e-05
      %v3854 = vrsqrt.pop %v3850
      %v3855 = vrsqrt.pop %v3851
      %v3856 = vrsqrt.pop %v3852
      %v3857 = vrsqrt.pop %v3853
      %3859 = vset.pattern.permute.xlu0 0
      %3860 = vperm.xlu0 %3859, %v3854
      %v3861 = vpop.permute.xlu0 %3860
      %3864 = vset.pattern.permute.xlu0 0
      %3865 = vperm.xlu0 %3864, %v3855
      %v3866 = vpop.permute.xlu0 %3865
      %3869 = vset.pattern.permute.xlu0 0
      %3870 = vperm.xlu0 %3869, %v3856
      %v3871 = vpop.permute.xlu0 %3870
      %3874 = vset.pattern.permute.xlu0 0
      %3875 = vperm.xlu0 %3874, %v3857
      %v3876 = vpop.permute.xlu0 %3875
      %v3878 = vmul.f32 %v3842, %v3861
      %v3879 = vmul.f32 %v3843, %v3861
      %v3880 = vmul.f32 %v3844, %v3866
      %v3881 = vmul.f32 %v3845, %v3866
      %v3882 = vmul.f32 %v3846, %v3871
      %v3883 = vmul.f32 %v3847, %v3871
      %v3884 = vmul.f32 %v3848, %v3876
      %v3885 = vmul.f32 %v3849, %v3876
      %s3886 = scalar_lea.vmem %s8, 64
      %v3887 = vld [vmem:[%s3886] sm:$0xff]
      %v3888 = vld [vmem:[%s3886 + $0x8] sm:$0xff]
      %v3889 = vld [vmem:[%s3886 + $0x10] sm:$0xff]
      %v3890 = vld [vmem:[%s3886 + $0x18] sm:$0xff]
      %3892 = vset.pattern.permute.xlu0 0
      %3893 = vperm.xlu0 %3892, %v3887
      %v3894 = vpop.permute.xlu0 %3893
      %3897 = vset.pattern.permute.xlu0 0
      %3898 = vperm.xlu0 %3897, %v3888
      %v3899 = vpop.permute.xlu0 %3898
      %3902 = vset.pattern.permute.xlu0 0
      %3903 = vperm.xlu0 %3902, %v3889
      %v3904 = vpop.permute.xlu0 %3903
      %3907 = vset.pattern.permute.xlu0 0
      %3908 = vperm.xlu0 %3907, %v3890
      %v3909 = vpop.permute.xlu0 %3908
      %v3911 = vmul.f32 %v3878, %v3894
      %v3912 = vmul.f32 %v3879, %v3894
      %v3913 = vmul.f32 %v3880, %v3899
      %v3914 = vmul.f32 %v3881, %v3899
      %v3915 = vmul.f32 %v3882, %v3904
      %v3916 = vmul.f32 %v3883, %v3904
      %v3917 = vmul.f32 %v3884, %v3909
      %v3918 = vmul.f32 %v3885, %v3909
      %s3919 = scalar_lea.vmem %s9, 64
      %v3920 = vld [vmem:[%s3919] sm:$0xff]
      %v3921 = vld [vmem:[%s3919 + $0x8] sm:$0xff]
      %v3922 = vld [vmem:[%s3919 + $0x10] sm:$0xff]
      %v3923 = vld [vmem:[%s3919 + $0x18] sm:$0xff]
      %3925 = vset.pattern.permute.xlu0 0
      %3926 = vperm.xlu0 %3925, %v3920
      %v3927 = vpop.permute.xlu0 %3926
      %3930 = vset.pattern.permute.xlu0 0
      %3931 = vperm.xlu0 %3930, %v3921
      %v3932 = vpop.permute.xlu0 %3931
      %3935 = vset.pattern.permute.xlu0 0
      %3936 = vperm.xlu0 %3935, %v3922
      %v3937 = vpop.permute.xlu0 %3936
      %3940 = vset.pattern.permute.xlu0 0
      %3941 = vperm.xlu0 %3940, %v3923
      %v3942 = vpop.permute.xlu0 %3941
      %v3944 = vadd.f32 %v3911, %v3927
      %v3945 = vadd.f32 %v3912, %v3927
      %v3946 = vadd.f32 %v3913, %v3932
      %v3947 = vadd.f32 %v3914, %v3932
      %v3948 = vadd.f32 %v3915, %v3937
      %v3949 = vadd.f32 %v3916, %v3937
      %v3950 = vadd.f32 %v3917, %v3942
      %v3951 = vadd.f32 %v3918, %v3942
      %v3952 = vxor.u32 %v3944, 2147483648
      %v3953 = vxor.u32 %v3945, 2147483648
      %v3954 = vxor.u32 %v3946, 2147483648
      %v3955 = vxor.u32 %v3947, 2147483648
      %v3956 = vxor.u32 %v3948, 2147483648
      %v3957 = vxor.u32 %v3949, 2147483648
      %v3958 = vxor.u32 %v3950, 2147483648
      %v3959 = vxor.u32 %v3951, 2147483648
      %v3960 = vmul.f32 %v3952, 1.442695
      %v3961 = vpow.pop %v3960
      %v3962 = vmul.f32 %v3953, 1.442695
      %v3963 = vpow.pop %v3962
      %v3964 = vmul.f32 %v3954, 1.442695
      %v3965 = vpow.pop %v3964
      %v3966 = vmul.f32 %v3955, 1.442695
      %v3967 = vpow.pop %v3966
      %v3968 = vmul.f32 %v3956, 1.442695
      %v3969 = vpow.pop %v3968
      %v3970 = vmul.f32 %v3957, 1.442695
      %v3971 = vpow.pop %v3970
      %v3972 = vmul.f32 %v3958, 1.442695
      %v3973 = vpow.pop %v3972
      %v3974 = vmul.f32 %v3959, 1.442695
      %v3975 = vpow.pop %v3974
      %v3976 = vadd.f32 %v3961, 1.0
      %v3977 = vadd.f32 %v3963, 1.0
      %v3978 = vadd.f32 %v3965, 1.0
      %v3979 = vadd.f32 %v3967, 1.0
      %v3980 = vadd.f32 %v3969, 1.0
      %v3981 = vadd.f32 %v3971, 1.0
      %v3982 = vadd.f32 %v3973, 1.0
      %v3983 = vadd.f32 %v3975, 1.0
      %v3984 = vrcp.pop %v3976
      %v3985 = vmul.f32 1.0, %v3984
      %v3986 = vrcp.pop %v3977
      %v3987 = vmul.f32 1.0, %v3986
      %v3988 = vrcp.pop %v3978
      %v3989 = vmul.f32 1.0, %v3988
      %v3990 = vrcp.pop %v3979
      %v3991 = vmul.f32 1.0, %v3990
      %v3992 = vrcp.pop %v3980
      %v3993 = vmul.f32 1.0, %v3992
      %v3994 = vrcp.pop %v3981
      %v3995 = vmul.f32 1.0, %v3994
      %v3996 = vrcp.pop %v3982
      %v3997 = vmul.f32 1.0, %v3996
      %v3998 = vrcp.pop %v3983
      %v3999 = vmul.f32 1.0, %v3998
      %v4000 = vmul.f32 %v3944, %v3985
      %v4001 = vmul.f32 %v3945, %v3987
      %v4002 = vmul.f32 %v3946, %v3989
      %v4003 = vmul.f32 %v3947, %v3991
      %v4004 = vmul.f32 %v3948, %v3993
      %v4005 = vmul.f32 %v3949, %v3995
      %v4006 = vmul.f32 %v3950, %v3997
      %v4007 = vmul.f32 %v3951, %v3999
      %4008 = vrot.lane.b32.xlu0 %v4000, 17
      %v4009 = vpop.permute.xlu0 %4008
      %4010 = vrot.lane.b32.xlu0 %v4002, 17
      %v4011 = vpop.permute.xlu0 %4010
      %4012 = vrot.lane.b32.xlu0 %v4004, 17
      %v4013 = vpop.permute.xlu0 %4012
      %4014 = vrot.lane.b32.xlu0 %v4006, 17
      %v4015 = vpop.permute.xlu0 %4014
      %4016 = vrot.lane.b32.xlu0 %v4001, 17
      %v4017 = vpop.permute.xlu0 %4016
      %4018 = vrot.lane.b32.xlu0 %v4003, 17
      %v4019 = vpop.permute.xlu0 %4018
      %4020 = vrot.lane.b32.xlu0 %v4005, 17
      %v4021 = vpop.permute.xlu0 %4020
      %4022 = vrot.lane.b32.xlu0 %v4007, 17
      %v4023 = vpop.permute.xlu0 %4022
      %v4024 = vsel %vm564, %v4009, %v4017
      %v4025 = vsel %vm564, %v4011, %v4019
      %v4026 = vsel %vm564, %v4013, %v4021
      %v4027 = vsel %vm564, %v4015, %v4023
      %v4028 = vsel %vm564, %v4017, %v4009
      %v4029 = vsel %vm564, %v4019, %v4011
      %v4030 = vsel %vm564, %v4021, %v4013
      %v4031 = vsel %vm564, %v4023, %v4015
      %v4032 = vld [vmem:[%s6] sm:$0xff]
      %v4033 = vld [vmem:[%s6 + $0x8] sm:$0xff]
      %v4034 = vld [vmem:[%s6 + $0x10] sm:$0xff]
      %v4035 = vld [vmem:[%s6 + $0x18] sm:$0xff]
      %v4036 = vld [vmem:[%s6 + $0x20] sm:$0xff]
      %v4037 = vld [vmem:[%s6 + $0x28] sm:$0xff]
      %v4038 = vld [vmem:[%s6 + $0x30] sm:$0xff]
      %v4039 = vld [vmem:[%s6 + $0x38] sm:$0xff]
      %v4040 = vmul.f32 %v4028, %v4032
      %v4041 = vmul.f32 %v4024, %v4033
      %v4042 = vmul.f32 %v4029, %v4034
      %v4043 = vmul.f32 %v4025, %v4035
      %v4044 = vmul.f32 %v4030, %v4036
      %v4045 = vmul.f32 %v4026, %v4037
      %v4046 = vmul.f32 %v4031, %v4038
      %v4047 = vmul.f32 %v4027, %v4039
      %v4048 = vpack.c.bf16 %v4042, %v4040
      %v4049 = vpack.c.bf16 %v4043, %v4041
      %v4050 = vpack.c.bf16 %v4046, %v4044
      %v4051 = vpack.c.bf16 %v4047, %v4045
      %4052 = vst [vmem:[#allocation2] sm:$0xff] %v4048
      %4053 = vst [vmem:[#allocation2 + $0x8] sm:$0xff] %v4049
      %4054 = vst [vmem:[#allocation2 + $0x10] sm:$0xff] %v4050
      %4055 = vst [vmem:[#allocation2 + $0x18] sm:$0xff] %v4051
      %4056 = vrot.lane.b32.xlu0 %v4000, 16
      %v4057 = vpop.permute.xlu0 %4056
      %4058 = vrot.lane.b32.xlu0 %v4002, 16
      %v4059 = vpop.permute.xlu0 %4058
      %4060 = vrot.lane.b32.xlu0 %v4004, 16
      %v4061 = vpop.permute.xlu0 %4060
      %4062 = vrot.lane.b32.xlu0 %v4006, 16
      %v4063 = vpop.permute.xlu0 %4062
      %4064 = vrot.lane.b32.xlu0 %v4001, 16
      %v4065 = vpop.permute.xlu0 %4064
      %4066 = vrot.lane.b32.xlu0 %v4003, 16
      %v4067 = vpop.permute.xlu0 %4066
      %4068 = vrot.lane.b32.xlu0 %v4005, 16
      %v4069 = vpop.permute.xlu0 %4068
      %4070 = vrot.lane.b32.xlu0 %v4007, 16
      %v4071 = vpop.permute.xlu0 %4070
      %v4072 = vsel %vm613, %v4057, %v4065
      %v4073 = vsel %vm613, %v4059, %v4067
      %v4074 = vsel %vm613, %v4061, %v4069
      %v4075 = vsel %vm613, %v4063, %v4071
      %v4076 = vsel %vm613, %v4065, %v4057
      %v4077 = vsel %vm613, %v4067, %v4059
      %v4078 = vsel %vm613, %v4069, %v4061
      %v4079 = vsel %vm613, %v4071, %v4063
      %v4080 = vld [vmem:[%s622] sm:$0xff]
      %v4081 = vld [vmem:[%s622 + $0x8] sm:$0xff]
      %v4082 = vld [vmem:[%s622 + $0x10] sm:$0xff]
      %v4083 = vld [vmem:[%s622 + $0x18] sm:$0xff]
      %v4084 = vld [vmem:[%s622 + $0x20] sm:$0xff]
      %v4085 = vld [vmem:[%s622 + $0x28] sm:$0xff]
      %v4086 = vld [vmem:[%s622 + $0x30] sm:$0xff]
      %v4087 = vld [vmem:[%s622 + $0x38] sm:$0xff]
      %v4088 = vmul.f32 %v4076, %v4080
      %v4089 = vmul.f32 %v4072, %v4081
      %v4090 = vmul.f32 %v4077, %v4082
      %v4091 = vmul.f32 %v4073, %v4083
      %v4092 = vmul.f32 %v4078, %v4084
      %v4093 = vmul.f32 %v4074, %v4085
      %v4094 = vmul.f32 %v4079, %v4086
      %v4095 = vmul.f32 %v4075, %v4087
      %v4096 = vpack.c.bf16 %v4090, %v4088
      %v4097 = vpack.c.bf16 %v4091, %v4089
      %v4098 = vpack.c.bf16 %v4094, %v4092
      %v4099 = vpack.c.bf16 %v4095, %v4093
      %4100 = vst [vmem:[#allocation2 + $0x20] sm:$0xff] %v4096
      %4101 = vst [vmem:[#allocation2 + $0x28] sm:$0xff] %v4097
      %4102 = vst [vmem:[#allocation2 + $0x30] sm:$0xff] %v4098
      %4103 = vst [vmem:[#allocation2 + $0x38] sm:$0xff] %v4099
      %4104 = vrot.lane.b32.xlu0 %v4000, 15
      %v4105 = vpop.permute.xlu0 %4104
      %4106 = vrot.lane.b32.xlu0 %v4002, 15
      %v4107 = vpop.permute.xlu0 %4106
      %4108 = vrot.lane.b32.xlu0 %v4004, 15
      %v4109 = vpop.permute.xlu0 %4108
      %4110 = vrot.lane.b32.xlu0 %v4006, 15
      %v4111 = vpop.permute.xlu0 %4110
      %4112 = vrot.lane.b32.xlu0 %v4001, 15
      %v4113 = vpop.permute.xlu0 %4112
      %4114 = vrot.lane.b32.xlu0 %v4003, 15
      %v4115 = vpop.permute.xlu0 %4114
      %4116 = vrot.lane.b32.xlu0 %v4005, 15
      %v4117 = vpop.permute.xlu0 %4116
      %4118 = vrot.lane.b32.xlu0 %v4007, 15
      %v4119 = vpop.permute.xlu0 %4118
      %v4120 = vsel %vm663, %v4105, %v4113
      %v4121 = vsel %vm663, %v4107, %v4115
      %v4122 = vsel %vm663, %v4109, %v4117
      %v4123 = vsel %vm663, %v4111, %v4119
      %v4124 = vsel %vm663, %v4113, %v4105
      %v4125 = vsel %vm663, %v4115, %v4107
      %v4126 = vsel %vm663, %v4117, %v4109
      %v4127 = vsel %vm663, %v4119, %v4111
      %v4128 = vld [vmem:[%s672] sm:$0xff]
      %v4129 = vld [vmem:[%s672 + $0x8] sm:$0xff]
      %v4130 = vld [vmem:[%s672 + $0x10] sm:$0xff]
      %v4131 = vld [vmem:[%s672 + $0x18] sm:$0xff]
      %v4132 = vld [vmem:[%s672 + $0x20] sm:$0xff]
      %v4133 = vld [vmem:[%s672 + $0x28] sm:$0xff]
      %v4134 = vld [vmem:[%s672 + $0x30] sm:$0xff]
      %v4135 = vld [vmem:[%s672 + $0x38] sm:$0xff]
      %v4136 = vmul.f32 %v4124, %v4128
      %v4137 = vmul.f32 %v4120, %v4129
      %v4138 = vmul.f32 %v4125, %v4130
      %v4139 = vmul.f32 %v4121, %v4131
      %v4140 = vmul.f32 %v4126, %v4132
      %v4141 = vmul.f32 %v4122, %v4133
      %v4142 = vmul.f32 %v4127, %v4134
      %v4143 = vmul.f32 %v4123, %v4135
      %v4144 = vpack.c.bf16 %v4138, %v4136
      %v4145 = vpack.c.bf16 %v4139, %v4137
      %v4146 = vpack.c.bf16 %v4142, %v4140
      %v4147 = vpack.c.bf16 %v4143, %v4141
      %4148 = vst [vmem:[#allocation2 + $0x40] sm:$0xff] %v4144
      %4149 = vst [vmem:[#allocation2 + $0x48] sm:$0xff] %v4145
      %4150 = vst [vmem:[#allocation2 + $0x50] sm:$0xff] %v4146
      %4151 = vst [vmem:[#allocation2 + $0x58] sm:$0xff] %v4147
      %4152 = vrot.lane.b32.xlu0 %v4000, 1
      %v4153 = vpop.permute.xlu0 %4152
      %4154 = vrot.lane.b32.xlu0 %v4002, 1
      %v4155 = vpop.permute.xlu0 %4154
      %4156 = vrot.lane.b32.xlu0 %v4004, 1
      %v4157 = vpop.permute.xlu0 %4156
      %4158 = vrot.lane.b32.xlu0 %v4006, 1
      %v4159 = vpop.permute.xlu0 %4158
      %4160 = vrot.lane.b32.xlu0 %v4001, 1
      %v4161 = vpop.permute.xlu0 %4160
      %4162 = vrot.lane.b32.xlu0 %v4003, 1
      %v4163 = vpop.permute.xlu0 %4162
      %4164 = vrot.lane.b32.xlu0 %v4005, 1
      %v4165 = vpop.permute.xlu0 %4164
      %4166 = vrot.lane.b32.xlu0 %v4007, 1
      %v4167 = vpop.permute.xlu0 %4166
      %v4168 = vsel %vm713, %v4153, %v4161
      %v4169 = vsel %vm713, %v4155, %v4163
      %v4170 = vsel %vm713, %v4157, %v4165
      %v4171 = vsel %vm713, %v4159, %v4167
      %v4172 = vsel %vm713, %v4161, %v4153
      %v4173 = vsel %vm713, %v4163, %v4155
      %v4174 = vsel %vm713, %v4165, %v4157
      %v4175 = vsel %vm713, %v4167, %v4159
      %v4176 = vld [vmem:[%s722] sm:$0xff]
      %v4177 = vld [vmem:[%s722 + $0x8] sm:$0xff]
      %v4178 = vld [vmem:[%s722 + $0x10] sm:$0xff]
      %v4179 = vld [vmem:[%s722 + $0x18] sm:$0xff]
      %v4180 = vld [vmem:[%s722 + $0x20] sm:$0xff]
      %v4181 = vld [vmem:[%s722 + $0x28] sm:$0xff]
      %v4182 = vld [vmem:[%s722 + $0x30] sm:$0xff]
      %v4183 = vld [vmem:[%s722 + $0x38] sm:$0xff]
      %v4184 = vmul.f32 %v4172, %v4176
      %v4185 = vmul.f32 %v4168, %v4177
      %v4186 = vmul.f32 %v4173, %v4178
      %v4187 = vmul.f32 %v4169, %v4179
      %v4188 = vmul.f32 %v4174, %v4180
      %v4189 = vmul.f32 %v4170, %v4181
      %v4190 = vmul.f32 %v4175, %v4182
      %v4191 = vmul.f32 %v4171, %v4183
      %v4192 = vpack.c.bf16 %v4186, %v4184
      %v4193 = vpack.c.bf16 %v4187, %v4185
      %v4194 = vpack.c.bf16 %v4190, %v4188
      %v4195 = vpack.c.bf16 %v4191, %v4189
      %4196 = vst [vmem:[#allocation2 + $0x60] sm:$0xff] %v4192
      %4197 = vst [vmem:[#allocation2 + $0x68] sm:$0xff] %v4193
      %4198 = vst [vmem:[#allocation2 + $0x70] sm:$0xff] %v4194
      %4199 = vst [vmem:[#allocation2 + $0x78] sm:$0xff] %v4195
      %v4200 = vpack.c.bf16 %v4002, %v4000
      %v4201 = vpack.c.bf16 %v4003, %v4001
      %v4202 = vpack.c.bf16 %v4006, %v4004
      %v4203 = vpack.c.bf16 %v4007, %v4005
      %4204 = vst [vmem:[#allocation2 + $0x80] sm:$0xff] %v4200
      %4205 = vst [vmem:[#allocation2 + $0x88] sm:$0xff] %v4201
      %4206 = vst [vmem:[#allocation2 + $0x90] sm:$0xff] %v4202
      %4207 = vst [vmem:[#allocation2 + $0x98] sm:$0xff] %v4203
      %4208 = vrot.lane.b32.xlu0 %v4000, 127
      %v4209 = vpop.permute.xlu0 %4208
      %4210 = vrot.lane.b32.xlu0 %v4002, 127
      %v4211 = vpop.permute.xlu0 %4210
      %4212 = vrot.lane.b32.xlu0 %v4004, 127
      %v4213 = vpop.permute.xlu0 %4212
      %4214 = vrot.lane.b32.xlu0 %v4006, 127
      %v4215 = vpop.permute.xlu0 %4214
      %4216 = vrot.lane.b32.xlu0 %v4001, 127
      %v4217 = vpop.permute.xlu0 %4216
      %4218 = vrot.lane.b32.xlu0 %v4003, 127
      %v4219 = vpop.permute.xlu0 %4218
      %4220 = vrot.lane.b32.xlu0 %v4005, 127
      %v4221 = vpop.permute.xlu0 %4220
      %4222 = vrot.lane.b32.xlu0 %v4007, 127
      %v4223 = vpop.permute.xlu0 %4222
      %v4224 = vsel %vm771, %v4209, %v4217
      %v4225 = vsel %vm771, %v4211, %v4219
      %v4226 = vsel %vm771, %v4213, %v4221
      %v4227 = vsel %vm771, %v4215, %v4223
      %v4228 = vsel %vm771, %v4217, %v4209
      %v4229 = vsel %vm771, %v4219, %v4211
      %v4230 = vsel %vm771, %v4221, %v4213
      %v4231 = vsel %vm771, %v4223, %v4215
      %v4232 = vld [vmem:[%s780] sm:$0xff]
      %v4233 = vld [vmem:[%s780 + $0x8] sm:$0xff]
      %v4234 = vld [vmem:[%s780 + $0x10] sm:$0xff]
      %v4235 = vld [vmem:[%s780 + $0x18] sm:$0xff]
      %v4236 = vld [vmem:[%s780 + $0x20] sm:$0xff]
      %v4237 = vld [vmem:[%s780 + $0x28] sm:$0xff]
      %v4238 = vld [vmem:[%s780 + $0x30] sm:$0xff]
      %v4239 = vld [vmem:[%s780 + $0x38] sm:$0xff]
      %v4240 = vmul.f32 %v4224, %v4232
      %v4241 = vmul.f32 %v4228, %v4233
      %v4242 = vmul.f32 %v4225, %v4234
      %v4243 = vmul.f32 %v4229, %v4235
      %v4244 = vmul.f32 %v4226, %v4236
      %v4245 = vmul.f32 %v4230, %v4237
      %v4246 = vmul.f32 %v4227, %v4238
      %v4247 = vmul.f32 %v4231, %v4239
      %v4248 = vpack.c.bf16 %v4242, %v4240
      %v4249 = vpack.c.bf16 %v4243, %v4241
      %v4250 = vpack.c.bf16 %v4246, %v4244
      %v4251 = vpack.c.bf16 %v4247, %v4245
      %4252 = vst [vmem:[#allocation2 + $0xa0] sm:$0xff] %v4248
      %4253 = vst [vmem:[#allocation2 + $0xa8] sm:$0xff] %v4249
      %4254 = vst [vmem:[#allocation2 + $0xb0] sm:$0xff] %v4250
      %4255 = vst [vmem:[#allocation2 + $0xb8] sm:$0xff] %v4251
      %4256 = vrot.lane.b32.xlu0 %v4000, 113
      %v4257 = vpop.permute.xlu0 %4256
      %4258 = vrot.lane.b32.xlu0 %v4002, 113
      %v4259 = vpop.permute.xlu0 %4258
      %4260 = vrot.lane.b32.xlu0 %v4004, 113
      %v4261 = vpop.permute.xlu0 %4260
      %4262 = vrot.lane.b32.xlu0 %v4006, 113
      %v4263 = vpop.permute.xlu0 %4262
      %4264 = vrot.lane.b32.xlu0 %v4001, 113
      %v4265 = vpop.permute.xlu0 %4264
      %4266 = vrot.lane.b32.xlu0 %v4003, 113
      %v4267 = vpop.permute.xlu0 %4266
      %4268 = vrot.lane.b32.xlu0 %v4005, 113
      %v4269 = vpop.permute.xlu0 %4268
      %4270 = vrot.lane.b32.xlu0 %v4007, 113
      %v4271 = vpop.permute.xlu0 %4270
      %v4272 = vsel %vm821, %v4257, %v4265
      %v4273 = vsel %vm821, %v4259, %v4267
      %v4274 = vsel %vm821, %v4261, %v4269
      %v4275 = vsel %vm821, %v4263, %v4271
      %v4276 = vsel %vm821, %v4265, %v4257
      %v4277 = vsel %vm821, %v4267, %v4259
      %v4278 = vsel %vm821, %v4269, %v4261
      %v4279 = vsel %vm821, %v4271, %v4263
      %v4280 = vld [vmem:[%s830] sm:$0xff]
      %v4281 = vld [vmem:[%s830 + $0x8] sm:$0xff]
      %v4282 = vld [vmem:[%s830 + $0x10] sm:$0xff]
      %v4283 = vld [vmem:[%s830 + $0x18] sm:$0xff]
      %v4284 = vld [vmem:[%s830 + $0x20] sm:$0xff]
      %v4285 = vld [vmem:[%s830 + $0x28] sm:$0xff]
      %v4286 = vld [vmem:[%s830 + $0x30] sm:$0xff]
      %v4287 = vld [vmem:[%s830 + $0x38] sm:$0xff]
      %v4288 = vmul.f32 %v4272, %v4280
      %v4289 = vmul.f32 %v4276, %v4281
      %v4290 = vmul.f32 %v4273, %v4282
      %v4291 = vmul.f32 %v4277, %v4283
      %v4292 = vmul.f32 %v4274, %v4284
      %v4293 = vmul.f32 %v4278, %v4285
      %v4294 = vmul.f32 %v4275, %v4286
      %v4295 = vmul.f32 %v4279, %v4287
      %v4296 = vpack.c.bf16 %v4290, %v4288
      %v4297 = vpack.c.bf16 %v4291, %v4289
      %v4298 = vpack.c.bf16 %v4294, %v4292
      %v4299 = vpack.c.bf16 %v4295, %v4293
      %4300 = vst [vmem:[#allocation2 + $0xc0] sm:$0xff] %v4296
      %4301 = vst [vmem:[#allocation2 + $0xc8] sm:$0xff] %v4297
      %4302 = vst [vmem:[#allocation2 + $0xd0] sm:$0xff] %v4298
      %4303 = vst [vmem:[#allocation2 + $0xd8] sm:$0xff] %v4299
      %4304 = vrot.lane.b32.xlu0 %v4000, 112
      %v4305 = vpop.permute.xlu0 %4304
      %4306 = vrot.lane.b32.xlu0 %v4002, 112
      %v4307 = vpop.permute.xlu0 %4306
      %4308 = vrot.lane.b32.xlu0 %v4004, 112
      %v4309 = vpop.permute.xlu0 %4308
      %4310 = vrot.lane.b32.xlu0 %v4006, 112
      %v4311 = vpop.permute.xlu0 %4310
      %4312 = vrot.lane.b32.xlu0 %v4001, 112
      %v4313 = vpop.permute.xlu0 %4312
      %4314 = vrot.lane.b32.xlu0 %v4003, 112
      %v4315 = vpop.permute.xlu0 %4314
      %4316 = vrot.lane.b32.xlu0 %v4005, 112
      %v4317 = vpop.permute.xlu0 %4316
      %4318 = vrot.lane.b32.xlu0 %v4007, 112
      %v4319 = vpop.permute.xlu0 %4318
      %v4320 = vsel %vm871, %v4305, %v4313
      %v4321 = vsel %vm871, %v4307, %v4315
      %v4322 = vsel %vm871, %v4309, %v4317
      %v4323 = vsel %vm871, %v4311, %v4319
      %v4324 = vsel %vm871, %v4313, %v4305
      %v4325 = vsel %vm871, %v4315, %v4307
      %v4326 = vsel %vm871, %v4317, %v4309
      %v4327 = vsel %vm871, %v4319, %v4311
      %v4328 = vld [vmem:[%s880] sm:$0xff]
      %v4329 = vld [vmem:[%s880 + $0x8] sm:$0xff]
      %v4330 = vld [vmem:[%s880 + $0x10] sm:$0xff]
      %v4331 = vld [vmem:[%s880 + $0x18] sm:$0xff]
      %v4332 = vld [vmem:[%s880 + $0x20] sm:$0xff]
      %v4333 = vld [vmem:[%s880 + $0x28] sm:$0xff]
      %v4334 = vld [vmem:[%s880 + $0x30] sm:$0xff]
      %v4335 = vld [vmem:[%s880 + $0x38] sm:$0xff]
      %v4336 = vmul.f32 %v4320, %v4328
      %v4337 = vmul.f32 %v4324, %v4329
      %v4338 = vmul.f32 %v4321, %v4330
      %v4339 = vmul.f32 %v4325, %v4331
      %v4340 = vmul.f32 %v4322, %v4332
      %v4341 = vmul.f32 %v4326, %v4333
      %v4342 = vmul.f32 %v4323, %v4334
      %v4343 = vmul.f32 %v4327, %v4335
      %v4344 = vpack.c.bf16 %v4338, %v4336
      %v4345 = vpack.c.bf16 %v4339, %v4337
      %v4346 = vpack.c.bf16 %v4342, %v4340
      %v4347 = vpack.c.bf16 %v4343, %v4341
      %4348 = vst [vmem:[#allocation2 + $0xe0] sm:$0xff] %v4344
      %4349 = vst [vmem:[#allocation2 + $0xe8] sm:$0xff] %v4345
      %4350 = vst [vmem:[#allocation2 + $0xf0] sm:$0xff] %v4346
      %4351 = vst [vmem:[#allocation2 + $0xf8] sm:$0xff] %v4347
      %4352 = vrot.lane.b32.xlu0 %v4000, 111
      %v4353 = vpop.permute.xlu0 %4352
      %4354 = vrot.lane.b32.xlu0 %v4002, 111
      %v4355 = vpop.permute.xlu0 %4354
      %4356 = vrot.lane.b32.xlu0 %v4004, 111
      %v4357 = vpop.permute.xlu0 %4356
      %4358 = vrot.lane.b32.xlu0 %v4006, 111
      %v4359 = vpop.permute.xlu0 %4358
      %4360 = vrot.lane.b32.xlu0 %v4001, 111
      %v4361 = vpop.permute.xlu0 %4360
      %4362 = vrot.lane.b32.xlu0 %v4003, 111
      %v4363 = vpop.permute.xlu0 %4362
      %4364 = vrot.lane.b32.xlu0 %v4005, 111
      %v4365 = vpop.permute.xlu0 %4364
      %4366 = vrot.lane.b32.xlu0 %v4007, 111
      %v4367 = vpop.permute.xlu0 %4366
      %v4368 = vsel %vm921, %v4353, %v4361
      %v4369 = vsel %vm921, %v4355, %v4363
      %v4370 = vsel %vm921, %v4357, %v4365
      %v4371 = vsel %vm921, %v4359, %v4367
      %v4372 = vsel %vm921, %v4361, %v4353
      %v4373 = vsel %vm921, %v4363, %v4355
      %v4374 = vsel %vm921, %v4365, %v4357
      %v4375 = vsel %vm921, %v4367, %v4359
      %v4376 = vld [vmem:[%s930] sm:$0xff]
      %v4377 = vld [vmem:[%s930 + $0x8] sm:$0xff]
      %v4378 = vld [vmem:[%s930 + $0x10] sm:$0xff]
      %v4379 = vld [vmem:[%s930 + $0x18] sm:$0xff]
      %v4380 = vld [vmem:[%s930 + $0x20] sm:$0xff]
      %v4381 = vld [vmem:[%s930 + $0x28] sm:$0xff]
      %v4382 = vld [vmem:[%s930 + $0x30] sm:$0xff]
      %v4383 = vld [vmem:[%s930 + $0x38] sm:$0xff]
      %v4384 = vmul.f32 %v4368, %v4376
      %v4385 = vmul.f32 %v4372, %v4377
      %v4386 = vmul.f32 %v4369, %v4378
      %v4387 = vmul.f32 %v4373, %v4379
      %v4388 = vmul.f32 %v4370, %v4380
      %v4389 = vmul.f32 %v4374, %v4381
      %v4390 = vmul.f32 %v4371, %v4382
      %v4391 = vmul.f32 %v4375, %v4383
      %v4392 = vpack.c.bf16 %v4386, %v4384
      %v4393 = vpack.c.bf16 %v4387, %v4385
      %v4394 = vpack.c.bf16 %v4390, %v4388
      %v4395 = vpack.c.bf16 %v4391, %v4389
      %4396 = vst [vmem:[#allocation2 + $0x100] sm:$0xff] %v4392
      %4397 = vst [vmem:[#allocation2 + $0x108] sm:$0xff] %v4393
      %4398 = vst [vmem:[#allocation2 + $0x110] sm:$0xff] %v4394
      %4399 = vst [vmem:[#allocation2 + $0x118] sm:$0xff] %v4395
      %s4400 = scalar_lea.vmem %s4, 144
      %v4401 = vld [vmem:[%s4400] sm:$0xff]
      %v4402 = vld [vmem:[%s4400 + $0x8] sm:$0xf]
      %v4403 = vld [vmem:[%s4400 + $0xc] sm:$0xff]
      %v4404 = vld [vmem:[%s4400 + $0x14] sm:$0xf]
      %v4405 = vld [vmem:[%s4400 + $0x18] sm:$0xff]
      %v4406 = vld [vmem:[%s4400 + $0x20] sm:$0xf]
      %v4407 = vld [vmem:[%s4400 + $0x24] sm:$0xff]
      %v4408 = vld [vmem:[%s4400 + $0x2c] sm:$0xf]
      %v4409 = vld [vmem:[#allocation2] sm:$0xff]
      %v4410 = vld [vmem:[#allocation2 + $0x8] sm:$0xff]
      %v4411 = vld [vmem:[#allocation2 + $0x10] sm:$0xff]
      %v4412 = vld [vmem:[#allocation2 + $0x18] sm:$0xff]
      %v4413 = vld [vmem:[#allocation2 + $0x20] sm:$0xff]
      %v4414 = vld [vmem:[#allocation2 + $0x28] sm:$0xff]
      %v4415 = vld [vmem:[#allocation2 + $0x30] sm:$0xff]
      %v4416 = vld [vmem:[#allocation2 + $0x38] sm:$0xff]
      %v4417 = vld [vmem:[#allocation2 + $0x40] sm:$0xff]
      %v4418 = vld [vmem:[#allocation2 + $0x48] sm:$0xff]
      %v4419 = vld [vmem:[#allocation2 + $0x50] sm:$0xff]
      %v4420 = vld [vmem:[#allocation2 + $0x58] sm:$0xff]
      %v4421 = vld [vmem:[#allocation2 + $0x60] sm:$0xff]
      %v4422 = vld [vmem:[#allocation2 + $0x68] sm:$0xff]
      %v4423 = vld [vmem:[#allocation2 + $0x70] sm:$0xff]
      %v4424 = vld [vmem:[#allocation2 + $0x78] sm:$0xff]
      %v4425 = vld [vmem:[#allocation2 + $0x80] sm:$0xff]
      %v4426 = vld [vmem:[#allocation2 + $0x88] sm:$0xff]
      %v4427 = vld [vmem:[#allocation2 + $0x90] sm:$0xff]
      %v4428 = vld [vmem:[#allocation2 + $0x98] sm:$0xff]
      %v4429 = vld [vmem:[#allocation2 + $0xa0] sm:$0xff]
      %v4430 = vld [vmem:[#allocation2 + $0xa8] sm:$0xff]
      %v4431 = vld [vmem:[#allocation2 + $0xb0] sm:$0xff]
      %v4432 = vld [vmem:[#allocation2 + $0xb8] sm:$0xff]
      %v4433 = vld [vmem:[#allocation2 + $0xc0] sm:$0xff]
      %v4434 = vld [vmem:[#allocation2 + $0xc8] sm:$0xff]
      %v4435 = vld [vmem:[#allocation2 + $0xd0] sm:$0xff]
      %v4436 = vld [vmem:[#allocation2 + $0xd8] sm:$0xff]
      %v4437 = vld [vmem:[#allocation2 + $0xe0] sm:$0xff]
      %v4438 = vld [vmem:[#allocation2 + $0xe8] sm:$0xff]
      %v4439 = vld [vmem:[#allocation2 + $0xf0] sm:$0xff]
      %v4440 = vld [vmem:[#allocation2 + $0xf8] sm:$0xff]
      %v4441 = vld [vmem:[#allocation2 + $0x100] sm:$0xff]
      %v4442 = vld [vmem:[#allocation2 + $0x108] sm:$0xff]
      %v4443 = vld [vmem:[#allocation2 + $0x110] sm:$0xff]
      %v4444 = vld [vmem:[#allocation2 + $0x118] sm:$0xff]
      %s4445 = scalar_lea.vmem %s5, 96
      %v4446 = vld [vmem:[%s4445] sm:$0xff]
      %v4447 = vld [vmem:[%s4445 + $0x8] sm:$0xff]
      %v4448 = vld [vmem:[%s4445 + $0x10] sm:$0xff]
      %v4449 = vld [vmem:[%s4445 + $0x18] sm:$0xff]
      %4451 = vset.pattern.permute.xlu0 0
      %4452 = vperm.xlu0 %4451, %v4446
      %v4453 = vpop.permute.xlu0 %4452
      %4456 = vset.pattern.permute.xlu0 0
      %4457 = vperm.xlu0 %4456, %v4447
      %v4458 = vpop.permute.xlu0 %4457
      %4461 = vset.pattern.permute.xlu0 0
      %4462 = vperm.xlu0 %4461, %v4448
      %v4463 = vpop.permute.xlu0 %4462
      %4466 = vset.pattern.permute.xlu0 0
      %4467 = vperm.xlu0 %4466, %v4449
      %v4468 = vpop.permute.xlu0 %4467
      %v4478 = vunpack.c.l.b16 %v4401
      %v4479 = vunpack.c.h.b16 %v4401
      %v4480 = vunpack.c.l.b16 %v4402
      %v4481 = vunpack.c.l.b16 %v4403
      %v4482 = vunpack.c.h.b16 %v4403
      %v4483 = vunpack.c.l.b16 %v4404
      %v4484 = vunpack.c.l.b16 %v4405
      %v4485 = vunpack.c.h.b16 %v4405
      %v4486 = vunpack.c.l.b16 %v4406
      %v4487 = vunpack.c.l.b16 %v4407
      %v4488 = vunpack.c.h.b16 %v4407
      %v4489 = vunpack.c.l.b16 %v4408
      %v4490 = vpack.c.b16 %v4481, %v4478
      %v4491 = vpack.c.b16 %v4482, %v4479
      %v4492 = vpack.c.b16 %v4483, %v4480
      %v4493 = vpack.c.b16 %v4487, %v4484
      %v4494 = vpack.c.b16 %v4488, %v4485
      %v4495 = vpack.c.b16 %v4489, %v4486
      %v4501 = vsel %vm1053, %v4492, 0
      %v4504 = vsel %vm1053, %v4495, 0
      %4506 = vmatprep.subr.bf16.mxu0 %v4410
      %4507 = vmatpush1.bf16.msra.mxu0 %v4409
      %4508 = vmatprep.subr.bf16.mxu0 %v4412
      %4509 = vmatpush1.bf16.msra.mxu0 %v4411
      %4510 = vmatprep.subr.bf16.mxu0 %v4414
      %4511 = vmatpush1.bf16.msra.mxu0 %v4413
      %4512 = vmatprep.subr.bf16.mxu0 %v4416
      %4513 = vmatpush1.bf16.msra.mxu0 %v4415
      %4514 = vmatprep.subr.bf16.mxu0 %v4418
      %4515 = vmatpush1.bf16.msra.mxu0 %v4417
      %4516 = vmatprep.subr.bf16.mxu0 %v4420
      %4517 = vmatpush1.bf16.msra.mxu0 %v4419
      %4518 = vmatprep.subr.bf16.mxu0 %v4422
      %4519 = vmatpush1.bf16.msra.mxu0 %v4421
      %4520 = vmatprep.subr.bf16.mxu0 %v4424
      %4521 = vmatpush1.bf16.msra.mxu0 %v4423
      %4522 = vmatprep.subr.bf16.mxu0 %v4426
      %4523 = vmatpush1.bf16.msra.mxu0 %v4425
      %4524 = vmatprep.subr.bf16.mxu0 %v4428
      %4525 = vmatpush1.bf16.msra.mxu0 %v4427
      %4526 = vmatprep.subr.bf16.mxu0 %v4430
      %4527 = vmatpush1.bf16.msra.mxu0 %v4429
      %4528 = vmatprep.subr.bf16.mxu0 %v4432
      %4529 = vmatpush1.bf16.msra.mxu0 %v4431
      %4530 = vmatprep.subr.bf16.mxu0 %v4434
      %4531 = vmatpush1.bf16.msra.mxu0 %v4433
      %4532 = vmatprep.subr.bf16.mxu0 %v4436
      %4533 = vmatpush1.bf16.msra.mxu0 %v4435
      %4534 = vmatprep.subr.bf16.mxu0 %v4438
      %4535 = vmatpush1.bf16.msra.mxu0 %v4437
      %4536 = vmatprep.subr.bf16.mxu0 %v4440
      %4537 = vmatpush1.bf16.msra.mxu0 %v4439
      %4538 = vmatprep.mubr.bf16.mxu0 %v4491
      %4539 = vmatmul.mubr.bf16.gmra.mrb[0].mxu0 %v4490
      %v4540 = vpop.f32.mrb[0].mxu0
      %v4541 = vadd.f32 %v4453, %v4540
      %v4542 = vpop.f32.mrb[0].mxu0
      %v4543 = vadd.f32 %v4453, %v4542
      %v4544 = vpop.f32.mrb[0].mxu0
      %v4545 = vadd.f32 %v4458, %v4544
      %v4546 = vpop.f32.mrb[0].mxu0
      %v4547 = vadd.f32 %v4458, %v4546
      %4548 = vmatprep.mubr.bf16.mxu0 %v4494
      %4549 = vmatmul.mubr.bf16.gmra.mrb[0].mxu0 %v4493
      %v4550 = vpop.f32.mrb[0].mxu0
      %v4551 = vadd.f32 %v4463, %v4550
      %v4552 = vpop.f32.mrb[0].mxu0
      %v4553 = vadd.f32 %v4463, %v4552
      %v4554 = vpop.f32.mrb[0].mxu0
      %v4555 = vadd.f32 %v4468, %v4554
      %v4556 = vpop.f32.mrb[0].mxu0
      %v4557 = vadd.f32 %v4468, %v4556
      %4558 = vdwg.mxu0
      %4559 = vmatprep.subr.bf16.mxu0 %v4442
      %4560 = vmatpush1.bf16.msra.mxu0 %v4441
      %4561 = vmatprep.subr.bf16.mxu0 %v4444
      %4562 = vmatpush1.bf16.msra.mxu0 %v4443
      %4563 = vmatprep.subr.bf16.mxu0 0
      %4564 = vmatpush1.bf16.msra.mxu0 0
      %4565 = vmatprep.subr.bf16.mxu0 0
      %4566 = vmatpush1.bf16.msra.mxu0 0
      %4567 = vmatprep.subr.bf16.mxu0 0
      %4568 = vmatpush1.bf16.msra.mxu0 0
      %4569 = vmatprep.subr.bf16.mxu0 0
      %4570 = vmatpush1.bf16.msra.mxu0 0
      %4571 = vmatprep.subr.bf16.mxu0 0
      %4572 = vmatpush1.bf16.msra.mxu0 0
      %4573 = vmatprep.subr.bf16.mxu0 0
      %4574 = vmatpush1.bf16.msra.mxu0 0
      %4575 = vmatprep.subr.bf16.mxu0 0
      %4576 = vmatpush1.bf16.msra.mxu0 0
      %4577 = vmatprep.subr.bf16.mxu0 0
      %4578 = vmatpush1.bf16.msra.mxu0 0
      %4579 = vmatprep.subr.bf16.mxu0 0
      %4580 = vmatpush1.bf16.msra.mxu0 0
      %4581 = vmatprep.subr.bf16.mxu0 0
      %4582 = vmatpush1.bf16.msra.mxu0 0
      %4583 = vmatprep.subr.bf16.mxu0 0
      %4584 = vmatpush1.bf16.msra.mxu0 0
      %4585 = vmatprep.subr.bf16.mxu0 0
      %4586 = vmatpush1.bf16.msra.mxu0 0
      %4587 = vmatprep.subr.bf16.mxu0 0
      %4588 = vmatpush1.bf16.msra.mxu0 0
      %4589 = vmatprep.subr.bf16.mxu0 0
      %4590 = vmatpush1.bf16.msra.mxu0 0
      %4591 = vmatprep.mubr.bf16.mxu0 0
      %4592 = vmatmul.mubr.bf16.gmra.mrb[0].mxu0 %v4501
      %v4593 = vpop.f32.mrb[0].mxu0
      %v4594 = vadd.f32 %v4541, %v4593
      %v4595 = vpop.f32.mrb[0].mxu0
      %v4596 = vadd.f32 %v4543, %v4595
      %v4597 = vpop.f32.mrb[0].mxu0
      %v4598 = vadd.f32 %v4545, %v4597
      %v4599 = vpop.f32.mrb[0].mxu0
      %v4600 = vadd.f32 %v4547, %v4599
      %4601 = vmatprep.mubr.bf16.mxu0 0
      %4602 = vmatmul.mubr.bf16.gmra.mrb[0].mxu0 %v4504
      %v4603 = vpop.f32.mrb[0].mxu0
      %v4604 = vadd.f32 %v4551, %v4603
      %v4605 = vpop.f32.mrb[0].mxu0
      %v4606 = vadd.f32 %v4553, %v4605
      %v4607 = vpop.f32.mrb[0].mxu0
      %v4608 = vadd.f32 %v4555, %v4607
      %v4609 = vpop.f32.mrb[0].mxu0
      %v4610 = vadd.f32 %v4557, %v4609
      %4611 = vdwg.mxu0
      %4612 = vst [vmem:[%s524] sm:$0xff] %v4594
      %4613 = vst [vmem:[%s524 + $0x8] sm:$0xff] %v4596
      %4614 = vst [vmem:[%s524 + $0x10] sm:$0xff] %v4598
      %4615 = vst [vmem:[%s524 + $0x18] sm:$0xff] %v4600
      %4616 = vst [vmem:[%s524 + $0x20] sm:$0xff] %v4604
      %4617 = vst [vmem:[%s524 + $0x28] sm:$0xff] %v4606
      %4618 = vst [vmem:[%s524 + $0x30] sm:$0xff] %v4608
      %4619 = vst [vmem:[%s524 + $0x38] sm:$0xff] %v4610
      %p4620 = scmp.lt.s32.totalorder %s25, 1
      %s4621 = scalar_select %p4620, %s25, 1
      %s4622 = smul.addr %s4621, 8
      %s4623 = smul.addr %s4622, 8
      %s4624 = scalar_lea.vmem %s14, %s4623
      // Predicated region
      $region77: #{neuron_unet_forward.1} parent=75 // pred_check
        %p4625 = pneg %p357
      $region78: #{neuron_unet_forward.1} parent=75 // pred_check_branch
        %4627 = sbr.rel (%p4625) target = $region80
      $region79: #{neuron_unet_forward.1} parent=75 // pred_region
        _
      $region80: #{neuron_unet_forward.1} parent=75 // pred_fallthru
        _
    $region76: #{neuron_unet_forward.1} parent=5 // pred_fallthru
      _
    %p4628 = scmp.le.s32.totalorder 2, %s20
    // Predicated region
    $region81: #{neuron_unet_forward.1} parent=5 // pred_check
      %p4629 = pneg %p4628
    $region82: #{neuron_unet_forward.1} parent=5 // pred_check_branch
      %4631 = sbr.rel (%p4629) target = $region84
    $region83: #{neuron_unet_forward.1} parent=5 // pred_region
      %s4632 = ssub.s32 %s20, 2
      // Predicated region
      $region85: #{neuron_unet_forward.1} parent=83 // pred_check
        %p4633 = pneg %p363
      $region86: #{neuron_unet_forward.1} parent=83 // pred_check_branch
        %4635 = sbr.rel (%p4633) target = $region88
      $region87: #{neuron_unet_forward.1} parent=83 // pred_region
        %p4636 = scmp.lt.s32.totalorder %s26, 1
        %s4637 = scalar_select %p4636, %s26, 1
        %s4638 = smul.addr %s4637, 8
        %s4639 = smul.addr %s4638, 8
        %s4640 = scalar_lea.vmem %s14, %s4639
      $region88: #{neuron_unet_forward.1} parent=83 // pred_fallthru
        _
    $region84: #{neuron_unet_forward.1} parent=5 // pred_fallthru
      _
  $region6: #{neuron_unet_forward.1} parent=0 // loop_footer
    %s24 = sadd.s32 1, %s20
  $region7: #{neuron_unet_forward.1} parent=0 // loop_footer_branch
    %19 = sbr.rel target = $region3
  $region8: #{neuron_unet_forward.1} parent=0 // loop_exit
    _

</llo_original>
